<compile_context>
chip_gen: v5e
topology: v5e:2x2
jax: 0.10.0
libtpu: 0.0.40
codegen_flags: <defaults>
</compile_context>

<pallas_src>
import functools

import numpy as np

import jax
import jax.numpy as jnp
from jax.experimental import pallas as pl
from jax.experimental.pallas import tpu as pltpu


# --------------------------------------------------------------------------- kernel
def _resnet10_kernel(x_ref, wa_ref, sba_ref, wb_ref, sbb_ref, wc_ref, sbc_ref,
                     sel_ref, pool_ref, o_ref, *, H, H2):
    """Whole ResNet10Block for one batch element.

    x_ref:    (1, H, W*Cin)      input activation, lane-dense (H, W*C) layout, c-minor
    wa_ref:   (16, 3, 64, 64)    bf16 banded weights, res_block1..4 convs (stride 1)
    sba_ref:  (16, 2, 64)        f32 folded BN scale/bias tiled along W
    wb_ref:   (2, 3, 64, 64)     bf16 banded weights: block5 conv1 (s=2), downsample (s=2)
    sbb_ref:  (2, 2, 64)
    wc_ref:   (3, 3, 64, 64)     bf16 banded weights: block5 rb1.conv2, rb2.conv1, rb2.conv2
    sbc_ref:  (3, 2, 64)
    sel_ref:  (3, H2, H+2)       f32 0/1 stride-2 row-selection matrices (one per dh)
    pool_ref: (W2*Cout, Cout)    f32 avg-pool matrix (includes the 1/(H2*W2) factor)
    o_ref:    (1, 1, Cout)       pooled output for this batch element
    """

    def conv_bn(act, w3, sb, *, hout, stride, residual=None, relu=True):
        # act: (hin, win*cin) f32; w3: (3, win*cin, wout*cout) bf16; sb: (2, wout*cout) f32
        # 3x3 conv (padding=1) + folded BN as three banded matmuls.  H-padding = two zero
        # rows; W-padding and stride are folded into the band structure of w3.
        hin, wcin = act.shape
        wcout = w3.shape[-1]
        zrow = jnp.zeros((1, wcin), jnp.float32)
        pad = jnp.concatenate([zrow, act, zrow], axis=0)          # (hin+2, wcin)
        acc = jnp.zeros((hout, wcout), jnp.float32)
        for dh in range(3):
            if stride == 1:
                rows = pad[dh:dh + hout, :]                        # (hout, wcin)
            else:
                # select padded rows {dh, dh+2, ...} with a tiny 0/1 matmul (MXU)
                rows = jnp.dot(sel_ref[dh], pad,
                               preferred_element_type=jnp.float32)  # (hout, wcin)
            acc = acc + jnp.dot(rows.astype(jnp.bfloat16), w3[dh],
                                preferred_element_type=jnp.float32)
        y = acc * sb[0:1, :] + sb[1:2, :]                          # folded BN (f32, VPU)
        if residual is not None:
            y = y + residual
        if relu:
            y = jnp.maximum(y, 0.0)
        return y

    act = x_ref[0]                                                 # (H, W*Cin) f32

    # res_block1..4: eight stride-1 ResNetBlocks at (H, W, in_ch)
    li = 0
    for _ in range(8):
        identity = act
        h = conv_bn(act, wa_ref[li], sba_ref[li], hout=H, stride=1)
        act = conv_bn(h, wa_ref[li + 1], sba_ref[li + 1], hout=H, stride=1,
                      residual=identity)
        li += 2

    # res_block5, first ResNetBlock: stride-2 conv1 + stride-2 downsampled identity
    idn = conv_bn(act, wb_ref[1], sbb_ref[1], hout=H2, stride=2, relu=False)
    h = conv_bn(act, wb_ref[0], sbb_ref[0], hout=H2, stride=2)
    act = conv_bn(h, wc_ref[0], sbc_ref[0], hout=H2, stride=1, residual=idn)

    # res_block5, second ResNetBlock
    identity = act
    h = conv_bn(act, wc_ref[1], sbc_ref[1], hout=H2, stride=1)
    act = conv_bn(h, wc_ref[2], sbc_ref[2], hout=H2, stride=1, residual=identity)

    # fused AdaptiveAvgPool2d((1,1)): matmul-reduce over (W, C) lanes, sublane-sum over H
    pooled_rows = jnp.dot(act, pool_ref[...],
                          preferred_element_type=jnp.float32)      # (H2, Cout)
    o_ref[0] = jnp.sum(pooled_rows, axis=0, keepdims=True)         # (1, Cout)


# --------------------------------------------------------------------------- wrapper
def resnet10_block_forward(x_nchw, packed):
    """x_nchw: (N, Cin, H, W) -> (N, Cout, 1, 1), matching the PyTorch module."""
    N, Cin, H, W = x_nchw.shape
    Cout = packed["pool"].shape[-1]
    # NCHW -> lane-dense (N, H, W*Cin), channel minor
    x = jnp.transpose(x_nchw, (0, 2, 3, 1)).reshape(N, H, W * Cin).astype(jnp.float32)

    kernel = functools.partial(_resnet10_kernel, H=H, H2=H // 2)
    out = pl.pallas_call(
        kernel,
        grid=(N,),
        in_specs=[
            pl.BlockSpec((1, H, W * Cin), lambda n: (n, 0, 0)),
            pl.BlockSpec(packed["wa"].shape, lambda n: (0, 0, 0, 0)),
            pl.BlockSpec(packed["sba"].shape, lambda n: (0, 0, 0)),
            pl.BlockSpec(packed["wb"].shape, lambda n: (0, 0, 0, 0)),
            pl.BlockSpec(packed["sbb"].shape, lambda n: (0, 0, 0)),
            pl.BlockSpec(packed["wc"].shape, lambda n: (0, 0, 0, 0)),
            pl.BlockSpec(packed["sbc"].shape, lambda n: (0, 0, 0)),
            pl.BlockSpec(packed["sel"].shape, lambda n: (0, 0, 0)),
            pl.BlockSpec(packed["pool"].shape, lambda n: (0, 0)),
        ],
        out_specs=pl.BlockSpec((1, 1, Cout), lambda n: (n, 0, 0)),
        out_shape=jax.ShapeDtypeStruct((N, 1, Cout), jnp.float32),
        compiler_params=pltpu.CompilerParams(
            dimension_semantics=("parallel",),     # batch -> both TCs on v7x
            vmem_limit_bytes=32 * 1024 * 1024,     # total residency here is ~2 MiB
        ),
    )(x, packed["wa"], packed["sba"], packed["wb"], packed["sbb"],
      packed["wc"], packed["sbc"], packed["sel"], packed["pool"])
    return out.reshape(N, Cout, 1, 1)


# --------------------------------------------------------------------------- weight prep
def _banded_weight(w, win, stride):
    """PyTorch conv weight (Cout, Cin, 3, 3) -> banded (3, Win*Cin, Wout*Cout).

    Row index = wi*Cin + ci of the UNPADDED input row; W-direction padding=1 and the
    stride are folded into the band structure (out-of-range taps are dropped).
    """
    cout, cin, _, _ = w.shape
    wout = (win + 2 - 3) // stride + 1
    bw = np.zeros((3, win * cin, wout * cout), np.float32)
    for dh in range(3):
        for dw in range(3):
            for wo in range(wout):
                wi = wo * stride + dw - 1
                if 0 <= wi < win:
                    bw[dh, wi * cin:(wi + 1) * cin, wo * cout:(wo + 1) * cout] = \
                        w[:, :, dh, dw].T
    return bw


def _sb_row(scale, bias, wout):
    # per-channel folded BN scale/bias tiled along W for the (H, W*C) layout
    return np.stack([np.tile(scale, wout), np.tile(bias, wout)]).astype(np.float32)


def pack_params(convs, H, W, in_ch, out_ch):
    H2, W2 = H // 2, W // 2
    wa = np.stack([_banded_weight(convs[i]["w"], W, 1) for i in range(16)])
    sba = np.stack([_sb_row(convs[i]["scale"], convs[i]["bias"], W) for i in range(16)])
    wb = np.stack([_banded_weight(convs[i]["w"], W, 2) for i in (16, 17)])
    sbb = np.stack([_sb_row(convs[i]["scale"], convs[i]["bias"], W2) for i in (16, 17)])
    wc = np.stack([_banded_weight(convs[i]["w"], W2, 1) for i in (18, 19, 20)])
    sbc = np.stack([_sb_row(convs[i]["scale"], convs[i]["bias"], W2) for i in (18, 19, 20)])

    # stride-2 row selection: sel[dh, h, r] = 1 iff r == 2*h + dh (rows of the padded input)
    sel = np.zeros((3, H2, H + 2), np.float32)
    for dh in range(3):
        for h in range(H2):
            sel[dh, h, 2 * h + dh] = 1.0

    # avg-pool matrix over the (W2, Cout) lane groups, includes the 1/(H2*W2) factor
    pool = np.zeros((W2 * out_ch, out_ch), np.float32)
    for wq in range(W2):
        for c in range(out_ch):
            pool[wq * out_ch + c, c] = 1.0 / (H2 * W2)

    return {
        "wa": jnp.asarray(wa, jnp.bfloat16), "sba": jnp.asarray(sba, jnp.float32),
        "wb": jnp.asarray(wb, jnp.bfloat16), "sbb": jnp.asarray(sbb, jnp.float32),
        "wc": jnp.asarray(wc, jnp.bfloat16), "sbc": jnp.asarray(sbc, jnp.float32),
        "sel": jnp.asarray(sel, jnp.float32), "pool": jnp.asarray(pool, jnp.float32),
    }


# --------------------------------------------------------------------------- params
def _make_conv_bn(key, cin, cout):
    kw, kb, kg, kbe, km, kv = jax.random.split(key, 6)
    w = jax.random.normal(kw, (cout, cin, 3, 3), jnp.float32) / (3.0 * (9.0 * cin) ** 0.5)
    b = 0.1 * jax.random.normal(kb, (cout,), jnp.float32)
    gamma = 1.0 + 0.1 * jax.random.normal(kg, (cout,), jnp.float32)
    beta = 0.1 * jax.random.normal(kbe, (cout,), jnp.float32)
    mean = 0.1 * jax.random.normal(km, (cout,), jnp.float32)
    var = jnp.abs(1.0 + 0.1 * jax.random.normal(kv, (cout,), jnp.float32))
    eps = 1e-5
    scale = gamma / jnp.sqrt(var + eps)
    bias = beta + (b - mean) * scale
    return {"w": np.asarray(w), "scale": np.asarray(scale), "bias": np.asarray(bias)}


def init_params(key, in_ch, out_ch):
    """Conv+BN params in kernel order: 16 stride-1 convs (res_block1..4), then
    block5 rb1.conv1 (s2), rb1.downsample (s2), rb1.conv2, rb2.conv1, rb2.conv2."""
    keys = iter(jax.random.split(key, 32))
    convs = []
    for _ in range(4):                 # res_block1..4
        for _ in range(2):             # two ResNetBlocks each
            convs.append(_make_conv_bn(next(keys), in_ch, in_ch))   # conv1
            convs.append(_make_conv_bn(next(keys), in_ch, in_ch))   # conv2
    convs.append(_make_conv_bn(next(keys), in_ch, out_ch))          # rb5a.conv1 (stride 2)
    convs.append(_make_conv_bn(next(keys), in_ch, out_ch))          # rb5a.downsample (s2)
    convs.append(_make_conv_bn(next(keys), out_ch, out_ch))         # rb5a.conv2
    convs.append(_make_conv_bn(next(keys), out_ch, out_ch))         # rb5b.conv1
    convs.append(_make_conv_bn(next(keys), out_ch, out_ch))         # rb5b.conv2
    return convs


# --------------------------------------------------------------------------- main
if __name__ == "__main__":
    key = jax.random.PRNGKey(0)
    kx, kp = jax.random.split(key)

    N, Cin, H, W = 2, 4, 16, 16
    Cout = 8

    x = jax.random.normal(kx, (N, Cin, H, W), jnp.float32)   # NCHW like PyTorch
    convs = init_params(kp, Cin, Cout)
    packed = pack_params(convs, H, W, Cin, Cout)

    fwd = jax.jit(resnet10_block_forward)
    y = fwd(x, packed)
    y = jax.block_until_ready(y)

    assert y.shape == (N, Cout, 1, 1), y.shape
    assert bool(jnp.all(jnp.isfinite(y)))
    print("KERNEL_OK")
</pallas_src>

<mosaic_0001>
module attributes {stable_mosaic.version = 11 : i64} {
  func.func @_resnet10_kernel(%arg0: i32, %arg1: memref<1x16x64xf32, #tpu.memory_space<vmem>>, %arg2: memref<16x3x64x64xbf16, #tpu.memory_space<vmem>>, %arg3: memref<16x2x64xf32, #tpu.memory_space<vmem>>, %arg4: memref<2x3x64x64xbf16, #tpu.memory_space<vmem>>, %arg5: memref<2x2x64xf32, #tpu.memory_space<vmem>>, %arg6: memref<3x3x64x64xbf16, #tpu.memory_space<vmem>>, %arg7: memref<3x2x64xf32, #tpu.memory_space<vmem>>, %arg8: memref<3x8x18xf32, #tpu.memory_space<vmem>>, %arg9: memref<64x8xf32, #tpu.memory_space<vmem>>, %arg10: memref<1x1x8xf32, #tpu.memory_space<vmem>>) attributes {dimension_semantics = [#tpu.dimension_semantics<parallel>], iteration_bounds = array<i64: 2>, scalar_prefetch = 0 : i64, scratch_operands = 0 : i64, tpu.core_type = #tpu.core_type<tc>, window_params = [{transform_indices = @transform_0, window_bounds = array<i64: 1, 16, 64>}, {pipeline_mode = #tpu.pipeline_mode<synchronous>, transform_indices = @transform_1, window_bounds = array<i64: 16, 3, 64, 64>}, {pipeline_mode = #tpu.pipeline_mode<synchronous>, transform_indices = @transform_2, window_bounds = array<i64: 16, 2, 64>}, {pipeline_mode = #tpu.pipeline_mode<synchronous>, transform_indices = @transform_3, window_bounds = array<i64: 2, 3, 64, 64>}, {pipeline_mode = #tpu.pipeline_mode<synchronous>, transform_indices = @transform_4, window_bounds = array<i64: 2, 2, 64>}, {pipeline_mode = #tpu.pipeline_mode<synchronous>, transform_indices = @transform_5, window_bounds = array<i64: 3, 3, 64, 64>}, {pipeline_mode = #tpu.pipeline_mode<synchronous>, transform_indices = @transform_6, window_bounds = array<i64: 3, 2, 64>}, {pipeline_mode = #tpu.pipeline_mode<synchronous>, transform_indices = @transform_7, window_bounds = array<i64: 3, 8, 18>}, {pipeline_mode = #tpu.pipeline_mode<synchronous>, transform_indices = @transform_8, window_bounds = array<i64: 64, 8>}, {transform_indices = @transform_9, window_bounds = array<i64: 1, 1, 8>}]} {
    %c0 = arith.constant 0 : index
    %c0_0 = arith.constant 0 : index
    %c0_1 = arith.constant 0 : index
    %0 = vector.load %arg1[%c0, %c0_0, %c0_1] : memref<1x16x64xf32, #tpu.memory_space<vmem>>, vector<1x16x64xf32>
    %1 = vector.shape_cast %0 : vector<1x16x64xf32> to vector<16x64xf32>
    %c0_2 = arith.constant 0 : index
    %c0_3 = arith.constant 0 : index
    %c0_4 = arith.constant 0 : index
    %c0_5 = arith.constant 0 : index
    %2 = vector.load %arg2[%c0_2, %c0_3, %c0_4, %c0_5] : memref<16x3x64x64xbf16, #tpu.memory_space<vmem>>, vector<1x3x64x64xbf16>
    %3 = vector.shape_cast %2 : vector<1x3x64x64xbf16> to vector<3x64x64xbf16>
    %c0_6 = arith.constant 0 : index
    %c0_7 = arith.constant 0 : index
    %c0_8 = arith.constant 0 : index
    %4 = vector.load %arg3[%c0_6, %c0_7, %c0_8] : memref<16x2x64xf32, #tpu.memory_space<vmem>>, vector<1x2x64xf32>
    %5 = vector.shape_cast %4 : vector<1x2x64xf32> to vector<2x64xf32>
    %cst = arith.constant 0.000000e+00 : f32
    %6 = vector.broadcast %cst : f32 to vector<1x64xf32>
    %7 = tpu.concatenate %6, %1, %6 in 0 : vector<1x64xf32>, vector<16x64xf32>, vector<1x64xf32> -> vector<18x64xf32>
    %cst_9 = arith.constant 0.000000e+00 : f32
    %8 = vector.broadcast %cst_9 : f32 to vector<16x64xf32>
    %9 = vector.extract_strided_slice %7 {offsets = [0, 0], sizes = [16, 64], strides = [1, 1]} : vector<18x64xf32> to vector<16x64xf32>
    %10 = arith.truncf %9 : vector<16x64xf32> to vector<16x64xbf16>
    %11 = vector.extract_strided_slice %3 {offsets = [0, 0, 0], sizes = [1, 64, 64], strides = [1, 1, 1]} : vector<3x64x64xbf16> to vector<1x64x64xbf16>
    %12 = vector.shape_cast %11 : vector<1x64x64xbf16> to vector<64x64xbf16>
    %cst_10 = arith.constant dense<0.000000e+00> : vector<16x64xf32>
    %13 = tpu.matmul %10, %12, %cst_10 {dimension_numbers = #tpu.dot_dimension_numbers<[1], [0], [0], [1], [0, 0, 1, 1], [], []>} : vector<16x64xbf16>, vector<64x64xbf16>, vector<16x64xf32> -> vector<16x64xf32>
    %14 = arith.addf %8, %13 : vector<16x64xf32>
    %15 = vector.extract_strided_slice %7 {offsets = [1, 0], sizes = [16, 64], strides = [1, 1]} : vector<18x64xf32> to vector<16x64xf32>
    %16 = arith.truncf %15 : vector<16x64xf32> to vector<16x64xbf16>
    %17 = vector.extract_strided_slice %3 {offsets = [1, 0, 0], sizes = [1, 64, 64], strides = [1, 1, 1]} : vector<3x64x64xbf16> to vector<1x64x64xbf16>
    %18 = vector.shape_cast %17 : vector<1x64x64xbf16> to vector<64x64xbf16>
    %cst_11 = arith.constant dense<0.000000e+00> : vector<16x64xf32>
    %19 = tpu.matmul %16, %18, %cst_11 {dimension_numbers = #tpu.dot_dimension_numbers<[1], [0], [0], [1], [0, 0, 1, 1], [], []>} : vector<16x64xbf16>, vector<64x64xbf16>, vector<16x64xf32> -> vector<16x64xf32>
    %20 = arith.addf %14, %19 : vector<16x64xf32>
    %21 = vector.extract_strided_slice %7 {offsets = [2, 0], sizes = [16, 64], strides = [1, 1]} : vector<18x64xf32> to vector<16x64xf32>
    %22 = arith.truncf %21 : vector<16x64xf32> to vector<16x64xbf16>
    %23 = vector.extract_strided_slice %3 {offsets = [2, 0, 0], sizes = [1, 64, 64], strides = [1, 1, 1]} : vector<3x64x64xbf16> to vector<1x64x64xbf16>
    %24 = vector.shape_cast %23 : vector<1x64x64xbf16> to vector<64x64xbf16>
    %cst_12 = arith.constant dense<0.000000e+00> : vector<16x64xf32>
    %25 = tpu.matmul %22, %24, %cst_12 {dimension_numbers = #tpu.dot_dimension_numbers<[1], [0], [0], [1], [0, 0, 1, 1], [], []>} : vector<16x64xbf16>, vector<64x64xbf16>, vector<16x64xf32> -> vector<16x64xf32>
    %26 = arith.addf %20, %25 : vector<16x64xf32>
    %27 = vector.extract_strided_slice %5 {offsets = [0, 0], sizes = [1, 64], strides = [1, 1]} : vector<2x64xf32> to vector<1x64xf32>
    %28 = vector.broadcast %27 : vector<1x64xf32> to vector<16x64xf32>
    %29 = arith.mulf %26, %28 : vector<16x64xf32>
    %30 = vector.extract_strided_slice %5 {offsets = [1, 0], sizes = [1, 64], strides = [1, 1]} : vector<2x64xf32> to vector<1x64xf32>
    %31 = vector.broadcast %30 : vector<1x64xf32> to vector<16x64xf32>
    %32 = arith.addf %29, %31 : vector<16x64xf32>
    %cst_13 = arith.constant 0.000000e+00 : f32
    %33 = vector.broadcast %cst_13 : f32 to vector<16x64xf32>
    %34 = arith.maximumf %32, %33 : vector<16x64xf32>
    %c1 = arith.constant 1 : index
    %c0_14 = arith.constant 0 : index
    %c0_15 = arith.constant 0 : index
    %c0_16 = arith.constant 0 : index
    %35 = vector.load %arg2[%c1, %c0_14, %c0_15, %c0_16] : memref<16x3x64x64xbf16, #tpu.memory_space<vmem>>, vector<1x3x64x64xbf16>
    %36 = vector.shape_cast %35 : vector<1x3x64x64xbf16> to vector<3x64x64xbf16>
    %c1_17 = arith.constant 1 : index
    %c0_18 = arith.constant 0 : index
    %c0_19 = arith.constant 0 : index
    %37 = vector.load %arg3[%c1_17, %c0_18, %c0_19] : memref<16x2x64xf32, #tpu.memory_space<vmem>>, vector<1x2x64xf32>
    %38 = vector.shape_cast %37 : vector<1x2x64xf32> to vector<2x64xf32>
    %cst_20 = arith.constant 0.000000e+00 : f32
    %39 = vector.broadcast %cst_20 : f32 to vector<1x64xf32>
    %40 = tpu.concatenate %39, %34, %39 in 0 : vector<1x64xf32>, vector<16x64xf32>, vector<1x64xf32> -> vector<18x64xf32>
    %cst_21 = arith.constant 0.000000e+00 : f32
    %41 = vector.broadcast %cst_21 : f32 to vector<16x64xf32>
    %42 = vector.extract_strided_slice %40 {offsets = [0, 0], sizes = [16, 64], strides = [1, 1]} : vector<18x64xf32> to vector<16x64xf32>
    %43 = arith.truncf %42 : vector<16x64xf32> to vector<16x64xbf16>
    %44 = vector.extract_strided_slice %36 {offsets = [0, 0, 0], sizes = [1, 64, 64], strides = [1, 1, 1]} : vector<3x64x64xbf16> to vector<1x64x64xbf16>
    %45 = vector.shape_cast %44 : vector<1x64x64xbf16> to vector<64x64xbf16>
    %cst_22 = arith.constant dense<0.000000e+00> : vector<16x64xf32>
    %46 = tpu.matmul %43, %45, %cst_22 {dimension_numbers = #tpu.dot_dimension_numbers<[1], [0], [0], [1], [0, 0, 1, 1], [], []>} : vector<16x64xbf16>, vector<64x64xbf16>, vector<16x64xf32> -> vector<16x64xf32>
    %47 = arith.addf %41, %46 : vector<16x64xf32>
    %48 = vector.extract_strided_slice %40 {offsets = [1, 0], sizes = [16, 64], strides = [1, 1]} : vector<18x64xf32> to vector<16x64xf32>
    %49 = arith.truncf %48 : vector<16x64xf32> to vector<16x64xbf16>
    %50 = vector.extract_strided_slice %36 {offsets = [1, 0, 0], sizes = [1, 64, 64], strides = [1, 1, 1]} : vector<3x64x64xbf16> to vector<1x64x64xbf16>
    %51 = vector.shape_cast %50 : vector<1x64x64xbf16> to vector<64x64xbf16>
    %cst_23 = arith.constant dense<0.000000e+00> : vector<16x64xf32>
    %52 = tpu.matmul %49, %51, %cst_23 {dimension_numbers = #tpu.dot_dimension_numbers<[1], [0], [0], [1], [0, 0, 1, 1], [], []>} : vector<16x64xbf16>, vector<64x64xbf16>, vector<16x64xf32> -> vector<16x64xf32>
    %53 = arith.addf %47, %52 : vector<16x64xf32>
    %54 = vector.extract_strided_slice %40 {offsets = [2, 0], sizes = [16, 64], strides = [1, 1]} : vector<18x64xf32> to vector<16x64xf32>
    %55 = arith.truncf %54 : vector<16x64xf32> to vector<16x64xbf16>
    %56 = vector.extract_strided_slice %36 {offsets = [2, 0, 0], sizes = [1, 64, 64], strides = [1, 1, 1]} : vector<3x64x64xbf16> to vector<1x64x64xbf16>
    %57 = vector.shape_cast %56 : vector<1x64x64xbf16> to vector<64x64xbf16>
    %cst_24 = arith.constant dense<0.000000e+00> : vector<16x64xf32>
    %58 = tpu.matmul %55, %57, %cst_24 {dimension_numbers = #tpu.dot_dimension_numbers<[1], [0], [0], [1], [0, 0, 1, 1], [], []>} : vector<16x64xbf16>, vector<64x64xbf16>, vector<16x64xf32> -> vector<16x64xf32>
    %59 = arith.addf %53, %58 : vector<16x64xf32>
    %60 = vector.extract_strided_slice %38 {offsets = [0, 0], sizes = [1, 64], strides = [1, 1]} : vector<2x64xf32> to vector<1x64xf32>
    %61 = vector.broadcast %60 : vector<1x64xf32> to vector<16x64xf32>
    %62 = arith.mulf %59, %61 : vector<16x64xf32>
    %63 = vector.extract_strided_slice %38 {offsets = [1, 0], sizes = [1, 64], strides = [1, 1]} : vector<2x64xf32> to vector<1x64xf32>
    %64 = vector.broadcast %63 : vector<1x64xf32> to vector<16x64xf32>
    %65 = arith.addf %62, %64 : vector<16x64xf32>
    %66 = arith.addf %65, %1 : vector<16x64xf32>
    %cst_25 = arith.constant 0.000000e+00 : f32
    %67 = vector.broadcast %cst_25 : f32 to vector<16x64xf32>
    %68 = arith.maximumf %66, %67 : vector<16x64xf32>
    %c2 = arith.constant 2 : index
    %c0_26 = arith.constant 0 : index
    %c0_27 = arith.constant 0 : index
    %c0_28 = arith.constant 0 : index
    %69 = vector.load %arg2[%c2, %c0_26, %c0_27, %c0_28] : memref<16x3x64x64xbf16, #tpu.memory_space<vmem>>, vector<1x3x64x64xbf16>
    %70 = vector.shape_cast %69 : vector<1x3x64x64xbf16> to vector<3x64x64xbf16>
    %c2_29 = arith.constant 2 : index
    %c0_30 = arith.constant 0 : index
    %c0_31 = arith.constant 0 : index
    %71 = vector.load %arg3[%c2_29, %c0_30, %c0_31] : memref<16x2x64xf32, #tpu.memory_space<vmem>>, vector<1x2x64xf32>
    %72 = vector.shape_cast %71 : vector<1x2x64xf32> to vector<2x64xf32>
    %cst_32 = arith.constant 0.000000e+00 : f32
    %73 = vector.broadcast %cst_32 : f32 to vector<1x64xf32>
    %74 = tpu.concatenate %73, %68, %73 in 0 : vector<1x64xf32>, vector<16x64xf32>, vector<1x64xf32> -> vector<18x64xf32>
    %cst_33 = arith.constant 0.000000e+00 : f32
    %75 = vector.broadcast %cst_33 : f32 to vector<16x64xf32>
    %76 = vector.extract_strided_slice %74 {offsets = [0, 0], sizes = [16, 64], strides = [1, 1]} : vector<18x64xf32> to vector<16x64xf32>
    %77 = arith.truncf %76 : vector<16x64xf32> to vector<16x64xbf16>
    %78 = vector.extract_strided_slice %70 {offsets = [0, 0, 0], sizes = [1, 64, 64], strides = [1, 1, 1]} : vector<3x64x64xbf16> to vector<1x64x64xbf16>
    %79 = vector.shape_cast %78 : vector<1x64x64xbf16> to vector<64x64xbf16>
    %cst_34 = arith.constant dense<0.000000e+00> : vector<16x64xf32>
    %80 = tpu.matmul %77, %79, %cst_34 {dimension_numbers = #tpu.dot_dimension_numbers<[1], [0], [0], [1], [0, 0, 1, 1], [], []>} : vector<16x64xbf16>, vector<64x64xbf16>, vector<16x64xf32> -> vector<16x64xf32>
    %81 = arith.addf %75, %80 : vector<16x64xf32>
    %82 = vector.extract_strided_slice %74 {offsets = [1, 0], sizes = [16, 64], strides = [1, 1]} : vector<18x64xf32> to vector<16x64xf32>
    %83 = arith.truncf %82 : vector<16x64xf32> to vector<16x64xbf16>
    %84 = vector.extract_strided_slice %70 {offsets = [1, 0, 0], sizes = [1, 64, 64], strides = [1, 1, 1]} : vector<3x64x64xbf16> to vector<1x64x64xbf16>
    %85 = vector.shape_cast %84 : vector<1x64x64xbf16> to vector<64x64xbf16>
    %cst_35 = arith.constant dense<0.000000e+00> : vector<16x64xf32>
    %86 = tpu.matmul %83, %85, %cst_35 {dimension_numbers = #tpu.dot_dimension_numbers<[1], [0], [0], [1], [0, 0, 1, 1], [], []>} : vector<16x64xbf16>, vector<64x64xbf16>, vector<16x64xf32> -> vector<16x64xf32>
    %87 = arith.addf %81, %86 : vector<16x64xf32>
    %88 = vector.extract_strided_slice %74 {offsets = [2, 0], sizes = [16, 64], strides = [1, 1]} : vector<18x64xf32> to vector<16x64xf32>
    %89 = arith.truncf %88 : vector<16x64xf32> to vector<16x64xbf16>
    %90 = vector.extract_strided_slice %70 {offsets = [2, 0, 0], sizes = [1, 64, 64], strides = [1, 1, 1]} : vector<3x64x64xbf16> to vector<1x64x64xbf16>
    %91 = vector.shape_cast %90 : vector<1x64x64xbf16> to vector<64x64xbf16>
    %cst_36 = arith.constant dense<0.000000e+00> : vector<16x64xf32>
    %92 = tpu.matmul %89, %91, %cst_36 {dimension_numbers = #tpu.dot_dimension_numbers<[1], [0], [0], [1], [0, 0, 1, 1], [], []>} : vector<16x64xbf16>, vector<64x64xbf16>, vector<16x64xf32> -> vector<16x64xf32>
    %93 = arith.addf %87, %92 : vector<16x64xf32>
    %94 = vector.extract_strided_slice %72 {offsets = [0, 0], sizes = [1, 64], strides = [1, 1]} : vector<2x64xf32> to vector<1x64xf32>
    %95 = vector.broadcast %94 : vector<1x64xf32> to vector<16x64xf32>
    %96 = arith.mulf %93, %95 : vector<16x64xf32>
    %97 = vector.extract_strided_slice %72 {offsets = [1, 0], sizes = [1, 64], strides = [1, 1]} : vector<2x64xf32> to vector<1x64xf32>
    %98 = vector.broadcast %97 : vector<1x64xf32> to vector<16x64xf32>
    %99 = arith.addf %96, %98 : vector<16x64xf32>
    %cst_37 = arith.constant 0.000000e+00 : f32
    %100 = vector.broadcast %cst_37 : f32 to vector<16x64xf32>
    %101 = arith.maximumf %99, %100 : vector<16x64xf32>
    %c3 = arith.constant 3 : index
    %c0_38 = arith.constant 0 : index
    %c0_39 = arith.constant 0 : index
    %c0_40 = arith.constant 0 : index
    %102 = vector.load %arg2[%c3, %c0_38, %c0_39, %c0_40] : memref<16x3x64x64xbf16, #tpu.memory_space<vmem>>, vector<1x3x64x64xbf16>
    %103 = vector.shape_cast %102 : vector<1x3x64x64xbf16> to vector<3x64x64xbf16>
    %c3_41 = arith.constant 3 : index
    %c0_42 = arith.constant 0 : index
    %c0_43 = arith.constant 0 : index
    %104 = vector.load %arg3[%c3_41, %c0_42, %c0_43] : memref<16x2x64xf32, #tpu.memory_space<vmem>>, vector<1x2x64xf32>
    %105 = vector.shape_cast %104 : vector<1x2x64xf32> to vector<2x64xf32>
    %cst_44 = arith.constant 0.000000e+00 : f32
    %106 = vector.broadcast %cst_44 : f32 to vector<1x64xf32>
    %107 = tpu.concatenate %106, %101, %106 in 0 : vector<1x64xf32>, vector<16x64xf32>, vector<1x64xf32> -> vector<18x64xf32>
    %cst_45 = arith.constant 0.000000e+00 : f32
    %108 = vector.broadcast %cst_45 : f32 to vector<16x64xf32>
    %109 = vector.extract_strided_slice %107 {offsets = [0, 0], sizes = [16, 64], strides = [1, 1]} : vector<18x64xf32> to vector<16x64xf32>
    %110 = arith.truncf %109 : vector<16x64xf32> to vector<16x64xbf16>
    %111 = vector.extract_strided_slice %103 {offsets = [0, 0, 0], sizes = [1, 64, 64], strides = [1, 1, 1]} : vector<3x64x64xbf16> to vector<1x64x64xbf16>
    %112 = vector.shape_cast %111 : vector<1x64x64xbf16> to vector<64x64xbf16>
    %cst_46 = arith.constant dense<0.000000e+00> : vector<16x64xf32>
    %113 = tpu.matmul %110, %112, %cst_46 {dimension_numbers = #tpu.dot_dimension_numbers<[1], [0], [0], [1], [0, 0, 1, 1], [], []>} : vector<16x64xbf16>, vector<64x64xbf16>, vector<16x64xf32> -> vector<16x64xf32>
    %114 = arith.addf %108, %113 : vector<16x64xf32>
    %115 = vector.extract_strided_slice %107 {offsets = [1, 0], sizes = [16, 64], strides = [1, 1]} : vector<18x64xf32> to vector<16x64xf32>
    %116 = arith.truncf %115 : vector<16x64xf32> to vector<16x64xbf16>
    %117 = vector.extract_strided_slice %103 {offsets = [1, 0, 0], sizes = [1, 64, 64], strides = [1, 1, 1]} : vector<3x64x64xbf16> to vector<1x64x64xbf16>
    %118 = vector.shape_cast %117 : vector<1x64x64xbf16> to vector<64x64xbf16>
    %cst_47 = arith.constant dense<0.000000e+00> : vector<16x64xf32>
    %119 = tpu.matmul %116, %118, %cst_47 {dimension_numbers = #tpu.dot_dimension_numbers<[1], [0], [0], [1], [0, 0, 1, 1], [], []>} : vector<16x64xbf16>, vector<64x64xbf16>, vector<16x64xf32> -> vector<16x64xf32>
    %120 = arith.addf %114, %119 : vector<16x64xf32>
    %121 = vector.extract_strided_slice %107 {offsets = [2, 0], sizes = [16, 64], strides = [1, 1]} : vector<18x64xf32> to vector<16x64xf32>
    %122 = arith.truncf %121 : vector<16x64xf32> to vector<16x64xbf16>
    %123 = vector.extract_strided_slice %103 {offsets = [2, 0, 0], sizes = [1, 64, 64], strides = [1, 1, 1]} : vector<3x64x64xbf16> to vector<1x64x64xbf16>
    %124 = vector.shape_cast %123 : vector<1x64x64xbf16> to vector<64x64xbf16>
    %cst_48 = arith.constant dense<0.000000e+00> : vector<16x64xf32>
    %125 = tpu.matmul %122, %124, %cst_48 {dimension_numbers = #tpu.dot_dimension_numbers<[1], [0], [0], [1], [0, 0, 1, 1], [], []>} : vector<16x64xbf16>, vector<64x64xbf16>, vector<16x64xf32> -> vector<16x64xf32>
    %126 = arith.addf %120, %125 : vector<16x64xf32>
    %127 = vector.extract_strided_slice %105 {offsets = [0, 0], sizes = [1, 64], strides = [1, 1]} : vector<2x64xf32> to vector<1x64xf32>
    %128 = vector.broadcast %127 : vector<1x64xf32> to vector<16x64xf32>
    %129 = arith.mulf %126, %128 : vector<16x64xf32>
    %130 = vector.extract_strided_slice %105 {offsets = [1, 0], sizes = [1, 64], strides = [1, 1]} : vector<2x64xf32> to vector<1x64xf32>
    %131 = vector.broadcast %130 : vector<1x64xf32> to vector<16x64xf32>
    %132 = arith.addf %129, %131 : vector<16x64xf32>
    %133 = arith.addf %132, %68 : vector<16x64xf32>
    %cst_49 = arith.constant 0.000000e+00 : f32
    %134 = vector.broadcast %cst_49 : f32 to vector<16x64xf32>
    %135 = arith.maximumf %133, %134 : vector<16x64xf32>
    %c4 = arith.constant 4 : index
    %c0_50 = arith.constant 0 : index
    %c0_51 = arith.constant 0 : index
    %c0_52 = arith.constant 0 : index
    %136 = vector.load %arg2[%c4, %c0_50, %c0_51, %c0_52] : memref<16x3x64x64xbf16, #tpu.memory_space<vmem>>, vector<1x3x64x64xbf16>
    %137 = vector.shape_cast %136 : vector<1x3x64x64xbf16> to vector<3x64x64xbf16>
    %c4_53 = arith.constant 4 : index
    %c0_54 = arith.constant 0 : index
    %c0_55 = arith.constant 0 : index
    %138 = vector.load %arg3[%c4_53, %c0_54, %c0_55] : memref<16x2x64xf32, #tpu.memory_space<vmem>>, vector<1x2x64xf32>
    %139 = vector.shape_cast %138 : vector<1x2x64xf32> to vector<2x64xf32>
    %cst_56 = arith.constant 0.000000e+00 : f32
    %140 = vector.broadcast %cst_56 : f32 to vector<1x64xf32>
    %141 = tpu.concatenate %140, %135, %140 in 0 : vector<1x64xf32>, vector<16x64xf32>, vector<1x64xf32> -> vector<18x64xf32>
    %cst_57 = arith.constant 0.000000e+00 : f32
    %142 = vector.broadcast %cst_57 : f32 to vector<16x64xf32>
    %143 = vector.extract_strided_slice %141 {offsets = [0, 0], sizes = [16, 64], strides = [1, 1]} : vector<18x64xf32> to vector<16x64xf32>
    %144 = arith.truncf %143 : vector<16x64xf32> to vector<16x64xbf16>
    %145 = vector.extract_strided_slice %137 {offsets = [0, 0, 0], sizes = [1, 64, 64], strides = [1, 1, 1]} : vector<3x64x64xbf16> to vector<1x64x64xbf16>
    %146 = vector.shape_cast %145 : vector<1x64x64xbf16> to vector<64x64xbf16>
    %cst_58 = arith.constant dense<0.000000e+00> : vector<16x64xf32>
    %147 = tpu.matmul %144, %146, %cst_58 {dimension_numbers = #tpu.dot_dimension_numbers<[1], [0], [0], [1], [0, 0, 1, 1], [], []>} : vector<16x64xbf16>, vector<64x64xbf16>, vector<16x64xf32> -> vector<16x64xf32>
    %148 = arith.addf %142, %147 : vector<16x64xf32>
    %149 = vector.extract_strided_slice %141 {offsets = [1, 0], sizes = [16, 64], strides = [1, 1]} : vector<18x64xf32> to vector<16x64xf32>
    %150 = arith.truncf %149 : vector<16x64xf32> to vector<16x64xbf16>
    %151 = vector.extract_strided_slice %137 {offsets = [1, 0, 0], sizes = [1, 64, 64], strides = [1, 1, 1]} : vector<3x64x64xbf16> to vector<1x64x64xbf16>
    %152 = vector.shape_cast %151 : vector<1x64x64xbf16> to vector<64x64xbf16>
    %cst_59 = arith.constant dense<0.000000e+00> : vector<16x64xf32>
    %153 = tpu.matmul %150, %152, %cst_59 {dimension_numbers = #tpu.dot_dimension_numbers<[1], [0], [0], [1], [0, 0, 1, 1], [], []>} : vector<16x64xbf16>, vector<64x64xbf16>, vector<16x64xf32> -> vector<16x64xf32>
    %154 = arith.addf %148, %153 : vector<16x64xf32>
    %155 = vector.extract_strided_slice %141 {offsets = [2, 0], sizes = [16, 64], strides = [1, 1]} : vector<18x64xf32> to vector<16x64xf32>
    %156 = arith.truncf %155 : vector<16x64xf32> to vector<16x64xbf16>
    %157 = vector.extract_strided_slice %137 {offsets = [2, 0, 0], sizes = [1, 64, 64], strides = [1, 1, 1]} : vector<3x64x64xbf16> to vector<1x64x64xbf16>
    %158 = vector.shape_cast %157 : vector<1x64x64xbf16> to vector<64x64xbf16>
    %cst_60 = arith.constant dense<0.000000e+00> : vector<16x64xf32>
    %159 = tpu.matmul %156, %158, %cst_60 {dimension_numbers = #tpu.dot_dimension_numbers<[1], [0], [0], [1], [0, 0, 1, 1], [], []>} : vector<16x64xbf16>, vector<64x64xbf16>, vector<16x64xf32> -> vector<16x64xf32>
    %160 = arith.addf %154, %159 : vector<16x64xf32>
    %161 = vector.extract_strided_slice %139 {offsets = [0, 0], sizes = [1, 64], strides = [1, 1]} : vector<2x64xf32> to vector<1x64xf32>
    %162 = vector.broadcast %161 : vector<1x64xf32> to vector<16x64xf32>
    %163 = arith.mulf %160, %162 : vector<16x64xf32>
    %164 = vector.extract_strided_slice %139 {offsets = [1, 0], sizes = [1, 64], strides = [1, 1]} : vector<2x64xf32> to vector<1x64xf32>
    %165 = vector.broadcast %164 : vector<1x64xf32> to vector<16x64xf32>
    %166 = arith.addf %163, %165 : vector<16x64xf32>
    %cst_61 = arith.constant 0.000000e+00 : f32
    %167 = vector.broadcast %cst_61 : f32 to vector<16x64xf32>
    %168 = arith.maximumf %166, %167 : vector<16x64xf32>
    %c5 = arith.constant 5 : index
    %c0_62 = arith.constant 0 : index
    %c0_63 = arith.constant 0 : index
    %c0_64 = arith.constant 0 : index
    %169 = vector.load %arg2[%c5, %c0_62, %c0_63, %c0_64] : memref<16x3x64x64xbf16, #tpu.memory_space<vmem>>, vector<1x3x64x64xbf16>
    %170 = vector.shape_cast %169 : vector<1x3x64x64xbf16> to vector<3x64x64xbf16>
    %c5_65 = arith.constant 5 : index
    %c0_66 = arith.constant 0 : index
    %c0_67 = arith.constant 0 : index
    %171 = vector.load %arg3[%c5_65, %c0_66, %c0_67] : memref<16x2x64xf32, #tpu.memory_space<vmem>>, vector<1x2x64xf32>
    %172 = vector.shape_cast %171 : vector<1x2x64xf32> to vector<2x64xf32>
    %cst_68 = arith.constant 0.000000e+00 : f32
    %173 = vector.broadcast %cst_68 : f32 to vector<1x64xf32>
    %174 = tpu.concatenate %173, %168, %173 in 0 : vector<1x64xf32>, vector<16x64xf32>, vector<1x64xf32> -> vector<18x64xf32>
    %cst_69 = arith.constant 0.000000e+00 : f32
    %175 = vector.broadcast %cst_69 : f32 to vector<16x64xf32>
    %176 = vector.extract_strided_slice %174 {offsets = [0, 0], sizes = [16, 64], strides = [1, 1]} : vector<18x64xf32> to vector<16x64xf32>
    %177 = arith.truncf %176 : vector<16x64xf32> to vector<16x64xbf16>
    %178 = vector.extract_strided_slice %170 {offsets = [0, 0, 0], sizes = [1, 64, 64], strides = [1, 1, 1]} : vector<3x64x64xbf16> to vector<1x64x64xbf16>
    %179 = vector.shape_cast %178 : vector<1x64x64xbf16> to vector<64x64xbf16>
    %cst_70 = arith.constant dense<0.000000e+00> : vector<16x64xf32>
    %180 = tpu.matmul %177, %179, %cst_70 {dimension_numbers = #tpu.dot_dimension_numbers<[1], [0], [0], [1], [0, 0, 1, 1], [], []>} : vector<16x64xbf16>, vector<64x64xbf16>, vector<16x64xf32> -> vector<16x64xf32>
    %181 = arith.addf %175, %180 : vector<16x64xf32>
    %182 = vector.extract_strided_slice %174 {offsets = [1, 0], sizes = [16, 64], strides = [1, 1]} : vector<18x64xf32> to vector<16x64xf32>
    %183 = arith.truncf %182 : vector<16x64xf32> to vector<16x64xbf16>
    %184 = vector.extract_strided_slice %170 {offsets = [1, 0, 0], sizes = [1, 64, 64], strides = [1, 1, 1]} : vector<3x64x64xbf16> to vector<1x64x64xbf16>
    %185 = vector.shape_cast %184 : vector<1x64x64xbf16> to vector<64x64xbf16>
    %cst_71 = arith.constant dense<0.000000e+00> : vector<16x64xf32>
    %186 = tpu.matmul %183, %185, %cst_71 {dimension_numbers = #tpu.dot_dimension_numbers<[1], [0], [0], [1], [0, 0, 1, 1], [], []>} : vector<16x64xbf16>, vector<64x64xbf16>, vector<16x64xf32> -> vector<16x64xf32>
    %187 = arith.addf %181, %186 : vector<16x64xf32>
    %188 = vector.extract_strided_slice %174 {offsets = [2, 0], sizes = [16, 64], strides = [1, 1]} : vector<18x64xf32> to vector<16x64xf32>
    %189 = arith.truncf %188 : vector<16x64xf32> to vector<16x64xbf16>
    %190 = vector.extract_strided_slice %170 {offsets = [2, 0, 0], sizes = [1, 64, 64], strides = [1, 1, 1]} : vector<3x64x64xbf16> to vector<1x64x64xbf16>
    %191 = vector.shape_cast %190 : vector<1x64x64xbf16> to vector<64x64xbf16>
    %cst_72 = arith.constant dense<0.000000e+00> : vector<16x64xf32>
    %192 = tpu.matmul %189, %191, %cst_72 {dimension_numbers = #tpu.dot_dimension_numbers<[1], [0], [0], [1], [0, 0, 1, 1], [], []>} : vector<16x64xbf16>, vector<64x64xbf16>, vector<16x64xf32> -> vector<16x64xf32>
    %193 = arith.addf %187, %192 : vector<16x64xf32>
    %194 = vector.extract_strided_slice %172 {offsets = [0, 0], sizes = [1, 64], strides = [1, 1]} : vector<2x64xf32> to vector<1x64xf32>
    %195 = vector.broadcast %194 : vector<1x64xf32> to vector<16x64xf32>
    %196 = arith.mulf %193, %195 : vector<16x64xf32>
    %197 = vector.extract_strided_slice %172 {offsets = [1, 0], sizes = [1, 64], strides = [1, 1]} : vector<2x64xf32> to vector<1x64xf32>
    %198 = vector.broadcast %197 : vector<1x64xf32> to vector<16x64xf32>
    %199 = arith.addf %196, %198 : vector<16x64xf32>
    %200 = arith.addf %199, %135 : vector<16x64xf32>
    %cst_73 = arith.constant 0.000000e+00 : f32
    %201 = vector.broadcast %cst_73 : f32 to vector<16x64xf32>
    %202 = arith.maximumf %200, %201 : vector<16x64xf32>
    %c6 = arith.constant 6 : index
    %c0_74 = arith.constant 0 : index
    %c0_75 = arith.constant 0 : index
    %c0_76 = arith.constant 0 : index
    %203 = vector.load %arg2[%c6, %c0_74, %c0_75, %c0_76] : memref<16x3x64x64xbf16, #tpu.memory_space<vmem>>, vector<1x3x64x64xbf16>
    %204 = vector.shape_cast %203 : vector<1x3x64x64xbf16> to vector<3x64x64xbf16>
    %c6_77 = arith.constant 6 : index
    %c0_78 = arith.constant 0 : index
    %c0_79 = arith.constant 0 : index
    %205 = vector.load %arg3[%c6_77, %c0_78, %c0_79] : memref<16x2x64xf32, #tpu.memory_space<vmem>>, vector<1x2x64xf32>
    %206 = vector.shape_cast %205 : vector<1x2x64xf32> to vector<2x64xf32>
    %cst_80 = arith.constant 0.000000e+00 : f32
    %207 = vector.broadcast %cst_80 : f32 to vector<1x64xf32>
    %208 = tpu.concatenate %207, %202, %207 in 0 : vector<1x64xf32>, vector<16x64xf32>, vector<1x64xf32> -> vector<18x64xf32>
    %cst_81 = arith.constant 0.000000e+00 : f32
    %209 = vector.broadcast %cst_81 : f32 to vector<16x64xf32>
    %210 = vector.extract_strided_slice %208 {offsets = [0, 0], sizes = [16, 64], strides = [1, 1]} : vector<18x64xf32> to vector<16x64xf32>
    %211 = arith.truncf %210 : vector<16x64xf32> to vector<16x64xbf16>
    %212 = vector.extract_strided_slice %204 {offsets = [0, 0, 0], sizes = [1, 64, 64], strides = [1, 1, 1]} : vector<3x64x64xbf16> to vector<1x64x64xbf16>
    %213 = vector.shape_cast %212 : vector<1x64x64xbf16> to vector<64x64xbf16>
    %cst_82 = arith.constant dense<0.000000e+00> : vector<16x64xf32>
    %214 = tpu.matmul %211, %213, %cst_82 {dimension_numbers = #tpu.dot_dimension_numbers<[1], [0], [0], [1], [0, 0, 1, 1], [], []>} : vector<16x64xbf16>, vector<64x64xbf16>, vector<16x64xf32> -> vector<16x64xf32>
    %215 = arith.addf %209, %214 : vector<16x64xf32>
    %216 = vector.extract_strided_slice %208 {offsets = [1, 0], sizes = [16, 64], strides = [1, 1]} : vector<18x64xf32> to vector<16x64xf32>
    %217 = arith.truncf %216 : vector<16x64xf32> to vector<16x64xbf16>
    %218 = vector.extract_strided_slice %204 {offsets = [1, 0, 0], sizes = [1, 64, 64], strides = [1, 1, 1]} : vector<3x64x64xbf16> to vector<1x64x64xbf16>
    %219 = vector.shape_cast %218 : vector<1x64x64xbf16> to vector<64x64xbf16>
    %cst_83 = arith.constant dense<0.000000e+00> : vector<16x64xf32>
    %220 = tpu.matmul %217, %219, %cst_83 {dimension_numbers = #tpu.dot_dimension_numbers<[1], [0], [0], [1], [0, 0, 1, 1], [], []>} : vector<16x64xbf16>, vector<64x64xbf16>, vector<16x64xf32> -> vector<16x64xf32>
    %221 = arith.addf %215, %220 : vector<16x64xf32>
    %222 = vector.extract_strided_slice %208 {offsets = [2, 0], sizes = [16, 64], strides = [1, 1]} : vector<18x64xf32> to vector<16x64xf32>
    %223 = arith.truncf %222 : vector<16x64xf32> to vector<16x64xbf16>
    %224 = vector.extract_strided_slice %204 {offsets = [2, 0, 0], sizes = [1, 64, 64], strides = [1, 1, 1]} : vector<3x64x64xbf16> to vector<1x64x64xbf16>
    %225 = vector.shape_cast %224 : vector<1x64x64xbf16> to vector<64x64xbf16>
    %cst_84 = arith.constant dense<0.000000e+00> : vector<16x64xf32>
    %226 = tpu.matmul %223, %225, %cst_84 {dimension_numbers = #tpu.dot_dimension_numbers<[1], [0], [0], [1], [0, 0, 1, 1], [], []>} : vector<16x64xbf16>, vector<64x64xbf16>, vector<16x64xf32> -> vector<16x64xf32>
    %227 = arith.addf %221, %226 : vector<16x64xf32>
    %228 = vector.extract_strided_slice %206 {offsets = [0, 0], sizes = [1, 64], strides = [1, 1]} : vector<2x64xf32> to vector<1x64xf32>
    %229 = vector.broadcast %228 : vector<1x64xf32> to vector<16x64xf32>
    %230 = arith.mulf %227, %229 : vector<16x64xf32>
    %231 = vector.extract_strided_slice %206 {offsets = [1, 0], sizes = [1, 64], strides = [1, 1]} : vector<2x64xf32> to vector<1x64xf32>
    %232 = vector.broadcast %231 : vector<1x64xf32> to vector<16x64xf32>
    %233 = arith.addf %230, %232 : vector<16x64xf32>
    %cst_85 = arith.constant 0.000000e+00 : f32
    %234 = vector.broadcast %cst_85 : f32 to vector<16x64xf32>
    %235 = arith.maximumf %233, %234 : vector<16x64xf32>
    %c7 = arith.constant 7 : index
    %c0_86 = arith.constant 0 : index
    %c0_87 = arith.constant 0 : index
    %c0_88 = arith.constant 0 : index
    %236 = vector.load %arg2[%c7, %c0_86, %c0_87, %c0_88] : memref<16x3x64x64xbf16, #tpu.memory_space<vmem>>, vector<1x3x64x64xbf16>
    %237 = vector.shape_cast %236 : vector<1x3x64x64xbf16> to vector<3x64x64xbf16>
    %c7_89 = arith.constant 7 : index
    %c0_90 = arith.constant 0 : index
    %c0_91 = arith.constant 0 : index
    %238 = vector.load %arg3[%c7_89, %c0_90, %c0_91] : memref<16x2x64xf32, #tpu.memory_space<vmem>>, vector<1x2x64xf32>
    %239 = vector.shape_cast %238 : vector<1x2x64xf32> to vector<2x64xf32>
    %cst_92 = arith.constant 0.000000e+00 : f32
    %240 = vector.broadcast %cst_92 : f32 to vector<1x64xf32>
    %241 = tpu.concatenate %240, %235, %240 in 0 : vector<1x64xf32>, vector<16x64xf32>, vector<1x64xf32> -> vector<18x64xf32>
    %cst_93 = arith.constant 0.000000e+00 : f32
    %242 = vector.broadcast %cst_93 : f32 to vector<16x64xf32>
    %243 = vector.extract_strided_slice %241 {offsets = [0, 0], sizes = [16, 64], strides = [1, 1]} : vector<18x64xf32> to vector<16x64xf32>
    %244 = arith.truncf %243 : vector<16x64xf32> to vector<16x64xbf16>
    %245 = vector.extract_strided_slice %237 {offsets = [0, 0, 0], sizes = [1, 64, 64], strides = [1, 1, 1]} : vector<3x64x64xbf16> to vector<1x64x64xbf16>
    %246 = vector.shape_cast %245 : vector<1x64x64xbf16> to vector<64x64xbf16>
    %cst_94 = arith.constant dense<0.000000e+00> : vector<16x64xf32>
    %247 = tpu.matmul %244, %246, %cst_94 {dimension_numbers = #tpu.dot_dimension_numbers<[1], [0], [0], [1], [0, 0, 1, 1], [], []>} : vector<16x64xbf16>, vector<64x64xbf16>, vector<16x64xf32> -> vector<16x64xf32>
    %248 = arith.addf %242, %247 : vector<16x64xf32>
    %249 = vector.extract_strided_slice %241 {offsets = [1, 0], sizes = [16, 64], strides = [1, 1]} : vector<18x64xf32> to vector<16x64xf32>
    %250 = arith.truncf %249 : vector<16x64xf32> to vector<16x64xbf16>
    %251 = vector.extract_strided_slice %237 {offsets = [1, 0, 0], sizes = [1, 64, 64], strides = [1, 1, 1]} : vector<3x64x64xbf16> to vector<1x64x64xbf16>
    %252 = vector.shape_cast %251 : vector<1x64x64xbf16> to vector<64x64xbf16>
    %cst_95 = arith.constant dense<0.000000e+00> : vector<16x64xf32>
    %253 = tpu.matmul %250, %252, %cst_95 {dimension_numbers = #tpu.dot_dimension_numbers<[1], [0], [0], [1], [0, 0, 1, 1], [], []>} : vector<16x64xbf16>, vector<64x64xbf16>, vector<16x64xf32> -> vector<16x64xf32>
    %254 = arith.addf %248, %253 : vector<16x64xf32>
    %255 = vector.extract_strided_slice %241 {offsets = [2, 0], sizes = [16, 64], strides = [1, 1]} : vector<18x64xf32> to vector<16x64xf32>
    %256 = arith.truncf %255 : vector<16x64xf32> to vector<16x64xbf16>
    %257 = vector.extract_strided_slice %237 {offsets = [2, 0, 0], sizes = [1, 64, 64], strides = [1, 1, 1]} : vector<3x64x64xbf16> to vector<1x64x64xbf16>
    %258 = vector.shape_cast %257 : vector<1x64x64xbf16> to vector<64x64xbf16>
    %cst_96 = arith.constant dense<0.000000e+00> : vector<16x64xf32>
    %259 = tpu.matmul %256, %258, %cst_96 {dimension_numbers = #tpu.dot_dimension_numbers<[1], [0], [0], [1], [0, 0, 1, 1], [], []>} : vector<16x64xbf16>, vector<64x64xbf16>, vector<16x64xf32> -> vector<16x64xf32>
    %260 = arith.addf %254, %259 : vector<16x64xf32>
    %261 = vector.extract_strided_slice %239 {offsets = [0, 0], sizes = [1, 64], strides = [1, 1]} : vector<2x64xf32> to vector<1x64xf32>
    %262 = vector.broadcast %261 : vector<1x64xf32> to vector<16x64xf32>
    %263 = arith.mulf %260, %262 : vector<16x64xf32>
    %264 = vector.extract_strided_slice %239 {offsets = [1, 0], sizes = [1, 64], strides = [1, 1]} : vector<2x64xf32> to vector<1x64xf32>
    %265 = vector.broadcast %264 : vector<1x64xf32> to vector<16x64xf32>
    %266 = arith.addf %263, %265 : vector<16x64xf32>
    %267 = arith.addf %266, %202 : vector<16x64xf32>
    %cst_97 = arith.constant 0.000000e+00 : f32
    %268 = vector.broadcast %cst_97 : f32 to vector<16x64xf32>
    %269 = arith.maximumf %267, %268 : vector<16x64xf32>
    %c8 = arith.constant 8 : index
    %c0_98 = arith.constant 0 : index
    %c0_99 = arith.constant 0 : index
    %c0_100 = arith.constant 0 : index
    %270 = vector.load %arg2[%c8, %c0_98, %c0_99, %c0_100] : memref<16x3x64x64xbf16, #tpu.memory_space<vmem>>, vector<1x3x64x64xbf16>
    %271 = vector.shape_cast %270 : vector<1x3x64x64xbf16> to vector<3x64x64xbf16>
    %c8_101 = arith.constant 8 : index
    %c0_102 = arith.constant 0 : index
    %c0_103 = arith.constant 0 : index
    %272 = vector.load %arg3[%c8_101, %c0_102, %c0_103] : memref<16x2x64xf32, #tpu.memory_space<vmem>>, vector<1x2x64xf32>
    %273 = vector.shape_cast %272 : vector<1x2x64xf32> to vector<2x64xf32>
    %cst_104 = arith.constant 0.000000e+00 : f32
    %274 = vector.broadcast %cst_104 : f32 to vector<1x64xf32>
    %275 = tpu.concatenate %274, %269, %274 in 0 : vector<1x64xf32>, vector<16x64xf32>, vector<1x64xf32> -> vector<18x64xf32>
    %cst_105 = arith.constant 0.000000e+00 : f32
    %276 = vector.broadcast %cst_105 : f32 to vector<16x64xf32>
    %277 = vector.extract_strided_slice %275 {offsets = [0, 0], sizes = [16, 64], strides = [1, 1]} : vector<18x64xf32> to vector<16x64xf32>
    %278 = arith.truncf %277 : vector<16x64xf32> to vector<16x64xbf16>
    %279 = vector.extract_strided_slice %271 {offsets = [0, 0, 0], sizes = [1, 64, 64], strides = [1, 1, 1]} : vector<3x64x64xbf16> to vector<1x64x64xbf16>
    %280 = vector.shape_cast %279 : vector<1x64x64xbf16> to vector<64x64xbf16>
    %cst_106 = arith.constant dense<0.000000e+00> : vector<16x64xf32>
    %281 = tpu.matmul %278, %280, %cst_106 {dimension_numbers = #tpu.dot_dimension_numbers<[1], [0], [0], [1], [0, 0, 1, 1], [], []>} : vector<16x64xbf16>, vector<64x64xbf16>, vector<16x64xf32> -> vector<16x64xf32>
    %282 = arith.addf %276, %281 : vector<16x64xf32>
    %283 = vector.extract_strided_slice %275 {offsets = [1, 0], sizes = [16, 64], strides = [1, 1]} : vector<18x64xf32> to vector<16x64xf32>
    %284 = arith.truncf %283 : vector<16x64xf32> to vector<16x64xbf16>
    %285 = vector.extract_strided_slice %271 {offsets = [1, 0, 0], sizes = [1, 64, 64], strides = [1, 1, 1]} : vector<3x64x64xbf16> to vector<1x64x64xbf16>
    %286 = vector.shape_cast %285 : vector<1x64x64xbf16> to vector<64x64xbf16>
    %cst_107 = arith.constant dense<0.000000e+00> : vector<16x64xf32>
    %287 = tpu.matmul %284, %286, %cst_107 {dimension_numbers = #tpu.dot_dimension_numbers<[1], [0], [0], [1], [0, 0, 1, 1], [], []>} : vector<16x64xbf16>, vector<64x64xbf16>, vector<16x64xf32> -> vector<16x64xf32>
    %288 = arith.addf %282, %287 : vector<16x64xf32>
    %289 = vector.extract_strided_slice %275 {offsets = [2, 0], sizes = [16, 64], strides = [1, 1]} : vector<18x64xf32> to vector<16x64xf32>
    %290 = arith.truncf %289 : vector<16x64xf32> to vector<16x64xbf16>
    %291 = vector.extract_strided_slice %271 {offsets = [2, 0, 0], sizes = [1, 64, 64], strides = [1, 1, 1]} : vector<3x64x64xbf16> to vector<1x64x64xbf16>
    %292 = vector.shape_cast %291 : vector<1x64x64xbf16> to vector<64x64xbf16>
    %cst_108 = arith.constant dense<0.000000e+00> : vector<16x64xf32>
    %293 = tpu.matmul %290, %292, %cst_108 {dimension_numbers = #tpu.dot_dimension_numbers<[1], [0], [0], [1], [0, 0, 1, 1], [], []>} : vector<16x64xbf16>, vector<64x64xbf16>, vector<16x64xf32> -> vector<16x64xf32>
    %294 = arith.addf %288, %293 : vector<16x64xf32>
    %295 = vector.extract_strided_slice %273 {offsets = [0, 0], sizes = [1, 64], strides = [1, 1]} : vector<2x64xf32> to vector<1x64xf32>
    %296 = vector.broadcast %295 : vector<1x64xf32> to vector<16x64xf32>
    %297 = arith.mulf %294, %296 : vector<16x64xf32>
    %298 = vector.extract_strided_slice %273 {offsets = [1, 0], sizes = [1, 64], strides = [1, 1]} : vector<2x64xf32> to vector<1x64xf32>
    %299 = vector.broadcast %298 : vector<1x64xf32> to vector<16x64xf32>
    %300 = arith.addf %297, %299 : vector<16x64xf32>
    %cst_109 = arith.constant 0.000000e+00 : f32
    %301 = vector.broadcast %cst_109 : f32 to vector<16x64xf32>
    %302 = arith.maximumf %300, %301 : vector<16x64xf32>
    %c9 = arith.constant 9 : index
    %c0_110 = arith.constant 0 : index
    %c0_111 = arith.constant 0 : index
    %c0_112 = arith.constant 0 : index
    %303 = vector.load %arg2[%c9, %c0_110, %c0_111, %c0_112] : memref<16x3x64x64xbf16, #tpu.memory_space<vmem>>, vector<1x3x64x64xbf16>
    %304 = vector.shape_cast %303 : vector<1x3x64x64xbf16> to vector<3x64x64xbf16>
    %c9_113 = arith.constant 9 : index
    %c0_114 = arith.constant 0 : index
    %c0_115 = arith.constant 0 : index
    %305 = vector.load %arg3[%c9_113, %c0_114, %c0_115] : memref<16x2x64xf32, #tpu.memory_space<vmem>>, vector<1x2x64xf32>
    %306 = vector.shape_cast %305 : vector<1x2x64xf32> to vector<2x64xf32>
    %cst_116 = arith.constant 0.000000e+00 : f32
    %307 = vector.broadcast %cst_116 : f32 to vector<1x64xf32>
    %308 = tpu.concatenate %307, %302, %307 in 0 : vector<1x64xf32>, vector<16x64xf32>, vector<1x64xf32> -> vector<18x64xf32>
    %cst_117 = arith.constant 0.000000e+00 : f32
    %309 = vector.broadcast %cst_117 : f32 to vector<16x64xf32>
    %310 = vector.extract_strided_slice %308 {offsets = [0, 0], sizes = [16, 64], strides = [1, 1]} : vector<18x64xf32> to vector<16x64xf32>
    %311 = arith.truncf %310 : vector<16x64xf32> to vector<16x64xbf16>
    %312 = vector.extract_strided_slice %304 {offsets = [0, 0, 0], sizes = [1, 64, 64], strides = [1, 1, 1]} : vector<3x64x64xbf16> to vector<1x64x64xbf16>
    %313 = vector.shape_cast %312 : vector<1x64x64xbf16> to vector<64x64xbf16>
    %cst_118 = arith.constant dense<0.000000e+00> : vector<16x64xf32>
    %314 = tpu.matmul %311, %313, %cst_118 {dimension_numbers = #tpu.dot_dimension_numbers<[1], [0], [0], [1], [0, 0, 1, 1], [], []>} : vector<16x64xbf16>, vector<64x64xbf16>, vector<16x64xf32> -> vector<16x64xf32>
    %315 = arith.addf %309, %314 : vector<16x64xf32>
    %316 = vector.extract_strided_slice %308 {offsets = [1, 0], sizes = [16, 64], strides = [1, 1]} : vector<18x64xf32> to vector<16x64xf32>
    %317 = arith.truncf %316 : vector<16x64xf32> to vector<16x64xbf16>
    %318 = vector.extract_strided_slice %304 {offsets = [1, 0, 0], sizes = [1, 64, 64], strides = [1, 1, 1]} : vector<3x64x64xbf16> to vector<1x64x64xbf16>
    %319 = vector.shape_cast %318 : vector<1x64x64xbf16> to vector<64x64xbf16>
    %cst_119 = arith.constant dense<0.000000e+00> : vector<16x64xf32>
    %320 = tpu.matmul %317, %319, %cst_119 {dimension_numbers = #tpu.dot_dimension_numbers<[1], [0], [0], [1], [0, 0, 1, 1], [], []>} : vector<16x64xbf16>, vector<64x64xbf16>, vector<16x64xf32> -> vector<16x64xf32>
    %321 = arith.addf %315, %320 : vector<16x64xf32>
    %322 = vector.extract_strided_slice %308 {offsets = [2, 0], sizes = [16, 64], strides = [1, 1]} : vector<18x64xf32> to vector<16x64xf32>
    %323 = arith.truncf %322 : vector<16x64xf32> to vector<16x64xbf16>
    %324 = vector.extract_strided_slice %304 {offsets = [2, 0, 0], sizes = [1, 64, 64], strides = [1, 1, 1]} : vector<3x64x64xbf16> to vector<1x64x64xbf16>
    %325 = vector.shape_cast %324 : vector<1x64x64xbf16> to vector<64x64xbf16>
    %cst_120 = arith.constant dense<0.000000e+00> : vector<16x64xf32>
    %326 = tpu.matmul %323, %325, %cst_120 {dimension_numbers = #tpu.dot_dimension_numbers<[1], [0], [0], [1], [0, 0, 1, 1], [], []>} : vector<16x64xbf16>, vector<64x64xbf16>, vector<16x64xf32> -> vector<16x64xf32>
    %327 = arith.addf %321, %326 : vector<16x64xf32>
    %328 = vector.extract_strided_slice %306 {offsets = [0, 0], sizes = [1, 64], strides = [1, 1]} : vector<2x64xf32> to vector<1x64xf32>
    %329 = vector.broadcast %328 : vector<1x64xf32> to vector<16x64xf32>
    %330 = arith.mulf %327, %329 : vector<16x64xf32>
    %331 = vector.extract_strided_slice %306 {offsets = [1, 0], sizes = [1, 64], strides = [1, 1]} : vector<2x64xf32> to vector<1x64xf32>
    %332 = vector.broadcast %331 : vector<1x64xf32> to vector<16x64xf32>
    %333 = arith.addf %330, %332 : vector<16x64xf32>
    %334 = arith.addf %333, %269 : vector<16x64xf32>
    %cst_121 = arith.constant 0.000000e+00 : f32
    %335 = vector.broadcast %cst_121 : f32 to vector<16x64xf32>
    %336 = arith.maximumf %334, %335 : vector<16x64xf32>
    %c10 = arith.constant 10 : index
    %c0_122 = arith.constant 0 : index
    %c0_123 = arith.constant 0 : index
    %c0_124 = arith.constant 0 : index
    %337 = vector.load %arg2[%c10, %c0_122, %c0_123, %c0_124] : memref<16x3x64x64xbf16, #tpu.memory_space<vmem>>, vector<1x3x64x64xbf16>
    %338 = vector.shape_cast %337 : vector<1x3x64x64xbf16> to vector<3x64x64xbf16>
    %c10_125 = arith.constant 10 : index
    %c0_126 = arith.constant 0 : index
    %c0_127 = arith.constant 0 : index
    %339 = vector.load %arg3[%c10_125, %c0_126, %c0_127] : memref<16x2x64xf32, #tpu.memory_space<vmem>>, vector<1x2x64xf32>
    %340 = vector.shape_cast %339 : vector<1x2x64xf32> to vector<2x64xf32>
    %cst_128 = arith.constant 0.000000e+00 : f32
    %341 = vector.broadcast %cst_128 : f32 to vector<1x64xf32>
    %342 = tpu.concatenate %341, %336, %341 in 0 : vector<1x64xf32>, vector<16x64xf32>, vector<1x64xf32> -> vector<18x64xf32>
    %cst_129 = arith.constant 0.000000e+00 : f32
    %343 = vector.broadcast %cst_129 : f32 to vector<16x64xf32>
    %344 = vector.extract_strided_slice %342 {offsets = [0, 0], sizes = [16, 64], strides = [1, 1]} : vector<18x64xf32> to vector<16x64xf32>
    %345 = arith.truncf %344 : vector<16x64xf32> to vector<16x64xbf16>
    %346 = vector.extract_strided_slice %338 {offsets = [0, 0, 0], sizes = [1, 64, 64], strides = [1, 1, 1]} : vector<3x64x64xbf16> to vector<1x64x64xbf16>
    %347 = vector.shape_cast %346 : vector<1x64x64xbf16> to vector<64x64xbf16>
    %cst_130 = arith.constant dense<0.000000e+00> : vector<16x64xf32>
    %348 = tpu.matmul %345, %347, %cst_130 {dimension_numbers = #tpu.dot_dimension_numbers<[1], [0], [0], [1], [0, 0, 1, 1], [], []>} : vector<16x64xbf16>, vector<64x64xbf16>, vector<16x64xf32> -> vector<16x64xf32>
    %349 = arith.addf %343, %348 : vector<16x64xf32>
    %350 = vector.extract_strided_slice %342 {offsets = [1, 0], sizes = [16, 64], strides = [1, 1]} : vector<18x64xf32> to vector<16x64xf32>
    %351 = arith.truncf %350 : vector<16x64xf32> to vector<16x64xbf16>
    %352 = vector.extract_strided_slice %338 {offsets = [1, 0, 0], sizes = [1, 64, 64], strides = [1, 1, 1]} : vector<3x64x64xbf16> to vector<1x64x64xbf16>
    %353 = vector.shape_cast %352 : vector<1x64x64xbf16> to vector<64x64xbf16>
    %cst_131 = arith.constant dense<0.000000e+00> : vector<16x64xf32>
    %354 = tpu.matmul %351, %353, %cst_131 {dimension_numbers = #tpu.dot_dimension_numbers<[1], [0], [0], [1], [0, 0, 1, 1], [], []>} : vector<16x64xbf16>, vector<64x64xbf16>, vector<16x64xf32> -> vector<16x64xf32>
    %355 = arith.addf %349, %354 : vector<16x64xf32>
    %356 = vector.extract_strided_slice %342 {offsets = [2, 0], sizes = [16, 64], strides = [1, 1]} : vector<18x64xf32> to vector<16x64xf32>
    %357 = arith.truncf %356 : vector<16x64xf32> to vector<16x64xbf16>
    %358 = vector.extract_strided_slice %338 {offsets = [2, 0, 0], sizes = [1, 64, 64], strides = [1, 1, 1]} : vector<3x64x64xbf16> to vector<1x64x64xbf16>
    %359 = vector.shape_cast %358 : vector<1x64x64xbf16> to vector<64x64xbf16>
    %cst_132 = arith.constant dense<0.000000e+00> : vector<16x64xf32>
    %360 = tpu.matmul %357, %359, %cst_132 {dimension_numbers = #tpu.dot_dimension_numbers<[1], [0], [0], [1], [0, 0, 1, 1], [], []>} : vector<16x64xbf16>, vector<64x64xbf16>, vector<16x64xf32> -> vector<16x64xf32>
    %361 = arith.addf %355, %360 : vector<16x64xf32>
    %362 = vector.extract_strided_slice %340 {offsets = [0, 0], sizes = [1, 64], strides = [1, 1]} : vector<2x64xf32> to vector<1x64xf32>
    %363 = vector.broadcast %362 : vector<1x64xf32> to vector<16x64xf32>
    %364 = arith.mulf %361, %363 : vector<16x64xf32>
    %365 = vector.extract_strided_slice %340 {offsets = [1, 0], sizes = [1, 64], strides = [1, 1]} : vector<2x64xf32> to vector<1x64xf32>
    %366 = vector.broadcast %365 : vector<1x64xf32> to vector<16x64xf32>
    %367 = arith.addf %364, %366 : vector<16x64xf32>
    %cst_133 = arith.constant 0.000000e+00 : f32
    %368 = vector.broadcast %cst_133 : f32 to vector<16x64xf32>
    %369 = arith.maximumf %367, %368 : vector<16x64xf32>
    %c11 = arith.constant 11 : index
    %c0_134 = arith.constant 0 : index
    %c0_135 = arith.constant 0 : index
    %c0_136 = arith.constant 0 : index
    %370 = vector.load %arg2[%c11, %c0_134, %c0_135, %c0_136] : memref<16x3x64x64xbf16, #tpu.memory_space<vmem>>, vector<1x3x64x64xbf16>
    %371 = vector.shape_cast %370 : vector<1x3x64x64xbf16> to vector<3x64x64xbf16>
    %c11_137 = arith.constant 11 : index
    %c0_138 = arith.constant 0 : index
    %c0_139 = arith.constant 0 : index
    %372 = vector.load %arg3[%c11_137, %c0_138, %c0_139] : memref<16x2x64xf32, #tpu.memory_space<vmem>>, vector<1x2x64xf32>
    %373 = vector.shape_cast %372 : vector<1x2x64xf32> to vector<2x64xf32>
    %cst_140 = arith.constant 0.000000e+00 : f32
    %374 = vector.broadcast %cst_140 : f32 to vector<1x64xf32>
    %375 = tpu.concatenate %374, %369, %374 in 0 : vector<1x64xf32>, vector<16x64xf32>, vector<1x64xf32> -> vector<18x64xf32>
    %cst_141 = arith.constant 0.000000e+00 : f32
    %376 = vector.broadcast %cst_141 : f32 to vector<16x64xf32>
    %377 = vector.extract_strided_slice %375 {offsets = [0, 0], sizes = [16, 64], strides = [1, 1]} : vector<18x64xf32> to vector<16x64xf32>
    %378 = arith.truncf %377 : vector<16x64xf32> to vector<16x64xbf16>
    %379 = vector.extract_strided_slice %371 {offsets = [0, 0, 0], sizes = [1, 64, 64], strides = [1, 1, 1]} : vector<3x64x64xbf16> to vector<1x64x64xbf16>
    %380 = vector.shape_cast %379 : vector<1x64x64xbf16> to vector<64x64xbf16>
    %cst_142 = arith.constant dense<0.000000e+00> : vector<16x64xf32>
    %381 = tpu.matmul %378, %380, %cst_142 {dimension_numbers = #tpu.dot_dimension_numbers<[1], [0], [0], [1], [0, 0, 1, 1], [], []>} : vector<16x64xbf16>, vector<64x64xbf16>, vector<16x64xf32> -> vector<16x64xf32>
    %382 = arith.addf %376, %381 : vector<16x64xf32>
    %383 = vector.extract_strided_slice %375 {offsets = [1, 0], sizes = [16, 64], strides = [1, 1]} : vector<18x64xf32> to vector<16x64xf32>
    %384 = arith.truncf %383 : vector<16x64xf32> to vector<16x64xbf16>
    %385 = vector.extract_strided_slice %371 {offsets = [1, 0, 0], sizes = [1, 64, 64], strides = [1, 1, 1]} : vector<3x64x64xbf16> to vector<1x64x64xbf16>
    %386 = vector.shape_cast %385 : vector<1x64x64xbf16> to vector<64x64xbf16>
    %cst_143 = arith.constant dense<0.000000e+00> : vector<16x64xf32>
    %387 = tpu.matmul %384, %386, %cst_143 {dimension_numbers = #tpu.dot_dimension_numbers<[1], [0], [0], [1], [0, 0, 1, 1], [], []>} : vector<16x64xbf16>, vector<64x64xbf16>, vector<16x64xf32> -> vector<16x64xf32>
    %388 = arith.addf %382, %387 : vector<16x64xf32>
    %389 = vector.extract_strided_slice %375 {offsets = [2, 0], sizes = [16, 64], strides = [1, 1]} : vector<18x64xf32> to vector<16x64xf32>
    %390 = arith.truncf %389 : vector<16x64xf32> to vector<16x64xbf16>
    %391 = vector.extract_strided_slice %371 {offsets = [2, 0, 0], sizes = [1, 64, 64], strides = [1, 1, 1]} : vector<3x64x64xbf16> to vector<1x64x64xbf16>
    %392 = vector.shape_cast %391 : vector<1x64x64xbf16> to vector<64x64xbf16>
    %cst_144 = arith.constant dense<0.000000e+00> : vector<16x64xf32>
    %393 = tpu.matmul %390, %392, %cst_144 {dimension_numbers = #tpu.dot_dimension_numbers<[1], [0], [0], [1], [0, 0, 1, 1], [], []>} : vector<16x64xbf16>, vector<64x64xbf16>, vector<16x64xf32> -> vector<16x64xf32>
    %394 = arith.addf %388, %393 : vector<16x64xf32>
    %395 = vector.extract_strided_slice %373 {offsets = [0, 0], sizes = [1, 64], strides = [1, 1]} : vector<2x64xf32> to vector<1x64xf32>
    %396 = vector.broadcast %395 : vector<1x64xf32> to vector<16x64xf32>
    %397 = arith.mulf %394, %396 : vector<16x64xf32>
    %398 = vector.extract_strided_slice %373 {offsets = [1, 0], sizes = [1, 64], strides = [1, 1]} : vector<2x64xf32> to vector<1x64xf32>
    %399 = vector.broadcast %398 : vector<1x64xf32> to vector<16x64xf32>
    %400 = arith.addf %397, %399 : vector<16x64xf32>
    %401 = arith.addf %400, %336 : vector<16x64xf32>
    %cst_145 = arith.constant 0.000000e+00 : f32
    %402 = vector.broadcast %cst_145 : f32 to vector<16x64xf32>
    %403 = arith.maximumf %401, %402 : vector<16x64xf32>
    %c12 = arith.constant 12 : index
    %c0_146 = arith.constant 0 : index
    %c0_147 = arith.constant 0 : index
    %c0_148 = arith.constant 0 : index
    %404 = vector.load %arg2[%c12, %c0_146, %c0_147, %c0_148] : memref<16x3x64x64xbf16, #tpu.memory_space<vmem>>, vector<1x3x64x64xbf16>
    %405 = vector.shape_cast %404 : vector<1x3x64x64xbf16> to vector<3x64x64xbf16>
    %c12_149 = arith.constant 12 : index
    %c0_150 = arith.constant 0 : index
    %c0_151 = arith.constant 0 : index
    %406 = vector.load %arg3[%c12_149, %c0_150, %c0_151] : memref<16x2x64xf32, #tpu.memory_space<vmem>>, vector<1x2x64xf32>
    %407 = vector.shape_cast %406 : vector<1x2x64xf32> to vector<2x64xf32>
    %cst_152 = arith.constant 0.000000e+00 : f32
    %408 = vector.broadcast %cst_152 : f32 to vector<1x64xf32>
    %409 = tpu.concatenate %408, %403, %408 in 0 : vector<1x64xf32>, vector<16x64xf32>, vector<1x64xf32> -> vector<18x64xf32>
    %cst_153 = arith.constant 0.000000e+00 : f32
    %410 = vector.broadcast %cst_153 : f32 to vector<16x64xf32>
    %411 = vector.extract_strided_slice %409 {offsets = [0, 0], sizes = [16, 64], strides = [1, 1]} : vector<18x64xf32> to vector<16x64xf32>
    %412 = arith.truncf %411 : vector<16x64xf32> to vector<16x64xbf16>
    %413 = vector.extract_strided_slice %405 {offsets = [0, 0, 0], sizes = [1, 64, 64], strides = [1, 1, 1]} : vector<3x64x64xbf16> to vector<1x64x64xbf16>
    %414 = vector.shape_cast %413 : vector<1x64x64xbf16> to vector<64x64xbf16>
    %cst_154 = arith.constant dense<0.000000e+00> : vector<16x64xf32>
    %415 = tpu.matmul %412, %414, %cst_154 {dimension_numbers = #tpu.dot_dimension_numbers<[1], [0], [0], [1], [0, 0, 1, 1], [], []>} : vector<16x64xbf16>, vector<64x64xbf16>, vector<16x64xf32> -> vector<16x64xf32>
    %416 = arith.addf %410, %415 : vector<16x64xf32>
    %417 = vector.extract_strided_slice %409 {offsets = [1, 0], sizes = [16, 64], strides = [1, 1]} : vector<18x64xf32> to vector<16x64xf32>
    %418 = arith.truncf %417 : vector<16x64xf32> to vector<16x64xbf16>
    %419 = vector.extract_strided_slice %405 {offsets = [1, 0, 0], sizes = [1, 64, 64], strides = [1, 1, 1]} : vector<3x64x64xbf16> to vector<1x64x64xbf16>
    %420 = vector.shape_cast %419 : vector<1x64x64xbf16> to vector<64x64xbf16>
    %cst_155 = arith.constant dense<0.000000e+00> : vector<16x64xf32>
    %421 = tpu.matmul %418, %420, %cst_155 {dimension_numbers = #tpu.dot_dimension_numbers<[1], [0], [0], [1], [0, 0, 1, 1], [], []>} : vector<16x64xbf16>, vector<64x64xbf16>, vector<16x64xf32> -> vector<16x64xf32>
    %422 = arith.addf %416, %421 : vector<16x64xf32>
    %423 = vector.extract_strided_slice %409 {offsets = [2, 0], sizes = [16, 64], strides = [1, 1]} : vector<18x64xf32> to vector<16x64xf32>
    %424 = arith.truncf %423 : vector<16x64xf32> to vector<16x64xbf16>
    %425 = vector.extract_strided_slice %405 {offsets = [2, 0, 0], sizes = [1, 64, 64], strides = [1, 1, 1]} : vector<3x64x64xbf16> to vector<1x64x64xbf16>
    %426 = vector.shape_cast %425 : vector<1x64x64xbf16> to vector<64x64xbf16>
    %cst_156 = arith.constant dense<0.000000e+00> : vector<16x64xf32>
    %427 = tpu.matmul %424, %426, %cst_156 {dimension_numbers = #tpu.dot_dimension_numbers<[1], [0], [0], [1], [0, 0, 1, 1], [], []>} : vector<16x64xbf16>, vector<64x64xbf16>, vector<16x64xf32> -> vector<16x64xf32>
    %428 = arith.addf %422, %427 : vector<16x64xf32>
    %429 = vector.extract_strided_slice %407 {offsets = [0, 0], sizes = [1, 64], strides = [1, 1]} : vector<2x64xf32> to vector<1x64xf32>
    %430 = vector.broadcast %429 : vector<1x64xf32> to vector<16x64xf32>
    %431 = arith.mulf %428, %430 : vector<16x64xf32>
    %432 = vector.extract_strided_slice %407 {offsets = [1, 0], sizes = [1, 64], strides = [1, 1]} : vector<2x64xf32> to vector<1x64xf32>
    %433 = vector.broadcast %432 : vector<1x64xf32> to vector<16x64xf32>
    %434 = arith.addf %431, %433 : vector<16x64xf32>
    %cst_157 = arith.constant 0.000000e+00 : f32
    %435 = vector.broadcast %cst_157 : f32 to vector<16x64xf32>
    %436 = arith.maximumf %434, %435 : vector<16x64xf32>
    %c13 = arith.constant 13 : index
    %c0_158 = arith.constant 0 : index
    %c0_159 = arith.constant 0 : index
    %c0_160 = arith.constant 0 : index
    %437 = vector.load %arg2[%c13, %c0_158, %c0_159, %c0_160] : memref<16x3x64x64xbf16, #tpu.memory_space<vmem>>, vector<1x3x64x64xbf16>
    %438 = vector.shape_cast %437 : vector<1x3x64x64xbf16> to vector<3x64x64xbf16>
    %c13_161 = arith.constant 13 : index
    %c0_162 = arith.constant 0 : index
    %c0_163 = arith.constant 0 : index
    %439 = vector.load %arg3[%c13_161, %c0_162, %c0_163] : memref<16x2x64xf32, #tpu.memory_space<vmem>>, vector<1x2x64xf32>
    %440 = vector.shape_cast %439 : vector<1x2x64xf32> to vector<2x64xf32>
    %cst_164 = arith.constant 0.000000e+00 : f32
    %441 = vector.broadcast %cst_164 : f32 to vector<1x64xf32>
    %442 = tpu.concatenate %441, %436, %441 in 0 : vector<1x64xf32>, vector<16x64xf32>, vector<1x64xf32> -> vector<18x64xf32>
    %cst_165 = arith.constant 0.000000e+00 : f32
    %443 = vector.broadcast %cst_165 : f32 to vector<16x64xf32>
    %444 = vector.extract_strided_slice %442 {offsets = [0, 0], sizes = [16, 64], strides = [1, 1]} : vector<18x64xf32> to vector<16x64xf32>
    %445 = arith.truncf %444 : vector<16x64xf32> to vector<16x64xbf16>
    %446 = vector.extract_strided_slice %438 {offsets = [0, 0, 0], sizes = [1, 64, 64], strides = [1, 1, 1]} : vector<3x64x64xbf16> to vector<1x64x64xbf16>
    %447 = vector.shape_cast %446 : vector<1x64x64xbf16> to vector<64x64xbf16>
    %cst_166 = arith.constant dense<0.000000e+00> : vector<16x64xf32>
    %448 = tpu.matmul %445, %447, %cst_166 {dimension_numbers = #tpu.dot_dimension_numbers<[1], [0], [0], [1], [0, 0, 1, 1], [], []>} : vector<16x64xbf16>, vector<64x64xbf16>, vector<16x64xf32> -> vector<16x64xf32>
    %449 = arith.addf %443, %448 : vector<16x64xf32>
    %450 = vector.extract_strided_slice %442 {offsets = [1, 0], sizes = [16, 64], strides = [1, 1]} : vector<18x64xf32> to vector<16x64xf32>
    %451 = arith.truncf %450 : vector<16x64xf32> to vector<16x64xbf16>
    %452 = vector.extract_strided_slice %438 {offsets = [1, 0, 0], sizes = [1, 64, 64], strides = [1, 1, 1]} : vector<3x64x64xbf16> to vector<1x64x64xbf16>
    %453 = vector.shape_cast %452 : vector<1x64x64xbf16> to vector<64x64xbf16>
    %cst_167 = arith.constant dense<0.000000e+00> : vector<16x64xf32>
    %454 = tpu.matmul %451, %453, %cst_167 {dimension_numbers = #tpu.dot_dimension_numbers<[1], [0], [0], [1], [0, 0, 1, 1], [], []>} : vector<16x64xbf16>, vector<64x64xbf16>, vector<16x64xf32> -> vector<16x64xf32>
    %455 = arith.addf %449, %454 : vector<16x64xf32>
    %456 = vector.extract_strided_slice %442 {offsets = [2, 0], sizes = [16, 64], strides = [1, 1]} : vector<18x64xf32> to vector<16x64xf32>
    %457 = arith.truncf %456 : vector<16x64xf32> to vector<16x64xbf16>
    %458 = vector.extract_strided_slice %438 {offsets = [2, 0, 0], sizes = [1, 64, 64], strides = [1, 1, 1]} : vector<3x64x64xbf16> to vector<1x64x64xbf16>
    %459 = vector.shape_cast %458 : vector<1x64x64xbf16> to vector<64x64xbf16>
    %cst_168 = arith.constant dense<0.000000e+00> : vector<16x64xf32>
    %460 = tpu.matmul %457, %459, %cst_168 {dimension_numbers = #tpu.dot_dimension_numbers<[1], [0], [0], [1], [0, 0, 1, 1], [], []>} : vector<16x64xbf16>, vector<64x64xbf16>, vector<16x64xf32> -> vector<16x64xf32>
    %461 = arith.addf %455, %460 : vector<16x64xf32>
    %462 = vector.extract_strided_slice %440 {offsets = [0, 0], sizes = [1, 64], strides = [1, 1]} : vector<2x64xf32> to vector<1x64xf32>
    %463 = vector.broadcast %462 : vector<1x64xf32> to vector<16x64xf32>
    %464 = arith.mulf %461, %463 : vector<16x64xf32>
    %465 = vector.extract_strided_slice %440 {offsets = [1, 0], sizes = [1, 64], strides = [1, 1]} : vector<2x64xf32> to vector<1x64xf32>
    %466 = vector.broadcast %465 : vector<1x64xf32> to vector<16x64xf32>
    %467 = arith.addf %464, %466 : vector<16x64xf32>
    %468 = arith.addf %467, %403 : vector<16x64xf32>
    %cst_169 = arith.constant 0.000000e+00 : f32
    %469 = vector.broadcast %cst_169 : f32 to vector<16x64xf32>
    %470 = arith.maximumf %468, %469 : vector<16x64xf32>
    %c14 = arith.constant 14 : index
    %c0_170 = arith.constant 0 : index
    %c0_171 = arith.constant 0 : index
    %c0_172 = arith.constant 0 : index
    %471 = vector.load %arg2[%c14, %c0_170, %c0_171, %c0_172] : memref<16x3x64x64xbf16, #tpu.memory_space<vmem>>, vector<1x3x64x64xbf16>
    %472 = vector.shape_cast %471 : vector<1x3x64x64xbf16> to vector<3x64x64xbf16>
    %c14_173 = arith.constant 14 : index
    %c0_174 = arith.constant 0 : index
    %c0_175 = arith.constant 0 : index
    %473 = vector.load %arg3[%c14_173, %c0_174, %c0_175] : memref<16x2x64xf32, #tpu.memory_space<vmem>>, vector<1x2x64xf32>
    %474 = vector.shape_cast %473 : vector<1x2x64xf32> to vector<2x64xf32>
    %cst_176 = arith.constant 0.000000e+00 : f32
    %475 = vector.broadcast %cst_176 : f32 to vector<1x64xf32>
    %476 = tpu.concatenate %475, %470, %475 in 0 : vector<1x64xf32>, vector<16x64xf32>, vector<1x64xf32> -> vector<18x64xf32>
    %cst_177 = arith.constant 0.000000e+00 : f32
    %477 = vector.broadcast %cst_177 : f32 to vector<16x64xf32>
    %478 = vector.extract_strided_slice %476 {offsets = [0, 0], sizes = [16, 64], strides = [1, 1]} : vector<18x64xf32> to vector<16x64xf32>
    %479 = arith.truncf %478 : vector<16x64xf32> to vector<16x64xbf16>
    %480 = vector.extract_strided_slice %472 {offsets = [0, 0, 0], sizes = [1, 64, 64], strides = [1, 1, 1]} : vector<3x64x64xbf16> to vector<1x64x64xbf16>
    %481 = vector.shape_cast %480 : vector<1x64x64xbf16> to vector<64x64xbf16>
    %cst_178 = arith.constant dense<0.000000e+00> : vector<16x64xf32>
    %482 = tpu.matmul %479, %481, %cst_178 {dimension_numbers = #tpu.dot_dimension_numbers<[1], [0], [0], [1], [0, 0, 1, 1], [], []>} : vector<16x64xbf16>, vector<64x64xbf16>, vector<16x64xf32> -> vector<16x64xf32>
    %483 = arith.addf %477, %482 : vector<16x64xf32>
    %484 = vector.extract_strided_slice %476 {offsets = [1, 0], sizes = [16, 64], strides = [1, 1]} : vector<18x64xf32> to vector<16x64xf32>
    %485 = arith.truncf %484 : vector<16x64xf32> to vector<16x64xbf16>
    %486 = vector.extract_strided_slice %472 {offsets = [1, 0, 0], sizes = [1, 64, 64], strides = [1, 1, 1]} : vector<3x64x64xbf16> to vector<1x64x64xbf16>
    %487 = vector.shape_cast %486 : vector<1x64x64xbf16> to vector<64x64xbf16>
    %cst_179 = arith.constant dense<0.000000e+00> : vector<16x64xf32>
    %488 = tpu.matmul %485, %487, %cst_179 {dimension_numbers = #tpu.dot_dimension_numbers<[1], [0], [0], [1], [0, 0, 1, 1], [], []>} : vector<16x64xbf16>, vector<64x64xbf16>, vector<16x64xf32> -> vector<16x64xf32>
    %489 = arith.addf %483, %488 : vector<16x64xf32>
    %490 = vector.extract_strided_slice %476 {offsets = [2, 0], sizes = [16, 64], strides = [1, 1]} : vector<18x64xf32> to vector<16x64xf32>
    %491 = arith.truncf %490 : vector<16x64xf32> to vector<16x64xbf16>
    %492 = vector.extract_strided_slice %472 {offsets = [2, 0, 0], sizes = [1, 64, 64], strides = [1, 1, 1]} : vector<3x64x64xbf16> to vector<1x64x64xbf16>
    %493 = vector.shape_cast %492 : vector<1x64x64xbf16> to vector<64x64xbf16>
    %cst_180 = arith.constant dense<0.000000e+00> : vector<16x64xf32>
    %494 = tpu.matmul %491, %493, %cst_180 {dimension_numbers = #tpu.dot_dimension_numbers<[1], [0], [0], [1], [0, 0, 1, 1], [], []>} : vector<16x64xbf16>, vector<64x64xbf16>, vector<16x64xf32> -> vector<16x64xf32>
    %495 = arith.addf %489, %494 : vector<16x64xf32>
    %496 = vector.extract_strided_slice %474 {offsets = [0, 0], sizes = [1, 64], strides = [1, 1]} : vector<2x64xf32> to vector<1x64xf32>
    %497 = vector.broadcast %496 : vector<1x64xf32> to vector<16x64xf32>
    %498 = arith.mulf %495, %497 : vector<16x64xf32>
    %499 = vector.extract_strided_slice %474 {offsets = [1, 0], sizes = [1, 64], strides = [1, 1]} : vector<2x64xf32> to vector<1x64xf32>
    %500 = vector.broadcast %499 : vector<1x64xf32> to vector<16x64xf32>
    %501 = arith.addf %498, %500 : vector<16x64xf32>
    %cst_181 = arith.constant 0.000000e+00 : f32
    %502 = vector.broadcast %cst_181 : f32 to vector<16x64xf32>
    %503 = arith.maximumf %501, %502 : vector<16x64xf32>
    %c15 = arith.constant 15 : index
    %c0_182 = arith.constant 0 : index
    %c0_183 = arith.constant 0 : index
    %c0_184 = arith.constant 0 : index
    %504 = vector.load %arg2[%c15, %c0_182, %c0_183, %c0_184] : memref<16x3x64x64xbf16, #tpu.memory_space<vmem>>, vector<1x3x64x64xbf16>
    %505 = vector.shape_cast %504 : vector<1x3x64x64xbf16> to vector<3x64x64xbf16>
    %c15_185 = arith.constant 15 : index
    %c0_186 = arith.constant 0 : index
    %c0_187 = arith.constant 0 : index
    %506 = vector.load %arg3[%c15_185, %c0_186, %c0_187] : memref<16x2x64xf32, #tpu.memory_space<vmem>>, vector<1x2x64xf32>
    %507 = vector.shape_cast %506 : vector<1x2x64xf32> to vector<2x64xf32>
    %cst_188 = arith.constant 0.000000e+00 : f32
    %508 = vector.broadcast %cst_188 : f32 to vector<1x64xf32>
    %509 = tpu.concatenate %508, %503, %508 in 0 : vector<1x64xf32>, vector<16x64xf32>, vector<1x64xf32> -> vector<18x64xf32>
    %cst_189 = arith.constant 0.000000e+00 : f32
    %510 = vector.broadcast %cst_189 : f32 to vector<16x64xf32>
    %511 = vector.extract_strided_slice %509 {offsets = [0, 0], sizes = [16, 64], strides = [1, 1]} : vector<18x64xf32> to vector<16x64xf32>
    %512 = arith.truncf %511 : vector<16x64xf32> to vector<16x64xbf16>
    %513 = vector.extract_strided_slice %505 {offsets = [0, 0, 0], sizes = [1, 64, 64], strides = [1, 1, 1]} : vector<3x64x64xbf16> to vector<1x64x64xbf16>
    %514 = vector.shape_cast %513 : vector<1x64x64xbf16> to vector<64x64xbf16>
    %cst_190 = arith.constant dense<0.000000e+00> : vector<16x64xf32>
    %515 = tpu.matmul %512, %514, %cst_190 {dimension_numbers = #tpu.dot_dimension_numbers<[1], [0], [0], [1], [0, 0, 1, 1], [], []>} : vector<16x64xbf16>, vector<64x64xbf16>, vector<16x64xf32> -> vector<16x64xf32>
    %516 = arith.addf %510, %515 : vector<16x64xf32>
    %517 = vector.extract_strided_slice %509 {offsets = [1, 0], sizes = [16, 64], strides = [1, 1]} : vector<18x64xf32> to vector<16x64xf32>
    %518 = arith.truncf %517 : vector<16x64xf32> to vector<16x64xbf16>
    %519 = vector.extract_strided_slice %505 {offsets = [1, 0, 0], sizes = [1, 64, 64], strides = [1, 1, 1]} : vector<3x64x64xbf16> to vector<1x64x64xbf16>
    %520 = vector.shape_cast %519 : vector<1x64x64xbf16> to vector<64x64xbf16>
    %cst_191 = arith.constant dense<0.000000e+00> : vector<16x64xf32>
    %521 = tpu.matmul %518, %520, %cst_191 {dimension_numbers = #tpu.dot_dimension_numbers<[1], [0], [0], [1], [0, 0, 1, 1], [], []>} : vector<16x64xbf16>, vector<64x64xbf16>, vector<16x64xf32> -> vector<16x64xf32>
    %522 = arith.addf %516, %521 : vector<16x64xf32>
    %523 = vector.extract_strided_slice %509 {offsets = [2, 0], sizes = [16, 64], strides = [1, 1]} : vector<18x64xf32> to vector<16x64xf32>
    %524 = arith.truncf %523 : vector<16x64xf32> to vector<16x64xbf16>
    %525 = vector.extract_strided_slice %505 {offsets = [2, 0, 0], sizes = [1, 64, 64], strides = [1, 1, 1]} : vector<3x64x64xbf16> to vector<1x64x64xbf16>
    %526 = vector.shape_cast %525 : vector<1x64x64xbf16> to vector<64x64xbf16>
    %cst_192 = arith.constant dense<0.000000e+00> : vector<16x64xf32>
    %527 = tpu.matmul %524, %526, %cst_192 {dimension_numbers = #tpu.dot_dimension_numbers<[1], [0], [0], [1], [0, 0, 1, 1], [], []>} : vector<16x64xbf16>, vector<64x64xbf16>, vector<16x64xf32> -> vector<16x64xf32>
    %528 = arith.addf %522, %527 : vector<16x64xf32>
    %529 = vector.extract_strided_slice %507 {offsets = [0, 0], sizes = [1, 64], strides = [1, 1]} : vector<2x64xf32> to vector<1x64xf32>
    %530 = vector.broadcast %529 : vector<1x64xf32> to vector<16x64xf32>
    %531 = arith.mulf %528, %530 : vector<16x64xf32>
    %532 = vector.extract_strided_slice %507 {offsets = [1, 0], sizes = [1, 64], strides = [1, 1]} : vector<2x64xf32> to vector<1x64xf32>
    %533 = vector.broadcast %532 : vector<1x64xf32> to vector<16x64xf32>
    %534 = arith.addf %531, %533 : vector<16x64xf32>
    %535 = arith.addf %534, %470 : vector<16x64xf32>
    %cst_193 = arith.constant 0.000000e+00 : f32
    %536 = vector.broadcast %cst_193 : f32 to vector<16x64xf32>
    %537 = arith.maximumf %535, %536 : vector<16x64xf32>
    %c1_194 = arith.constant 1 : index
    %c0_195 = arith.constant 0 : index
    %c0_196 = arith.constant 0 : index
    %c0_197 = arith.constant 0 : index
    %538 = vector.load %arg4[%c1_194, %c0_195, %c0_196, %c0_197] : memref<2x3x64x64xbf16, #tpu.memory_space<vmem>>, vector<1x3x64x64xbf16>
    %539 = vector.shape_cast %538 : vector<1x3x64x64xbf16> to vector<3x64x64xbf16>
    %c1_198 = arith.constant 1 : index
    %c0_199 = arith.constant 0 : index
    %c0_200 = arith.constant 0 : index
    %540 = vector.load %arg5[%c1_198, %c0_199, %c0_200] : memref<2x2x64xf32, #tpu.memory_space<vmem>>, vector<1x2x64xf32>
    %541 = vector.shape_cast %540 : vector<1x2x64xf32> to vector<2x64xf32>
    %cst_201 = arith.constant 0.000000e+00 : f32
    %542 = vector.broadcast %cst_201 : f32 to vector<1x64xf32>
    %543 = tpu.concatenate %542, %537, %542 in 0 : vector<1x64xf32>, vector<16x64xf32>, vector<1x64xf32> -> vector<18x64xf32>
    %cst_202 = arith.constant 0.000000e+00 : f32
    %544 = vector.broadcast %cst_202 : f32 to vector<8x64xf32>
    %c0_203 = arith.constant 0 : index
    %c0_204 = arith.constant 0 : index
    %c0_205 = arith.constant 0 : index
    %545 = vector.load %arg8[%c0_203, %c0_204, %c0_205] : memref<3x8x18xf32, #tpu.memory_space<vmem>>, vector<1x8x18xf32>
    %546 = vector.shape_cast %545 : vector<1x8x18xf32> to vector<8x18xf32>
    %cst_206 = arith.constant dense<0.000000e+00> : vector<8x64xf32>
    %547 = tpu.matmul %546, %543, %cst_206 {dimension_numbers = #tpu.dot_dimension_numbers<[1], [0], [0], [1], [0, 0, 1, 1], [], []>} : vector<8x18xf32>, vector<18x64xf32>, vector<8x64xf32> -> vector<8x64xf32>
    %548 = arith.truncf %547 : vector<8x64xf32> to vector<8x64xbf16>
    %549 = vector.extract_strided_slice %539 {offsets = [0, 0, 0], sizes = [1, 64, 64], strides = [1, 1, 1]} : vector<3x64x64xbf16> to vector<1x64x64xbf16>
    %550 = vector.shape_cast %549 : vector<1x64x64xbf16> to vector<64x64xbf16>
    %cst_207 = arith.constant dense<0.000000e+00> : vector<8x64xf32>
    %551 = tpu.matmul %548, %550, %cst_207 {dimension_numbers = #tpu.dot_dimension_numbers<[1], [0], [0], [1], [0, 0, 1, 1], [], []>} : vector<8x64xbf16>, vector<64x64xbf16>, vector<8x64xf32> -> vector<8x64xf32>
    %552 = arith.addf %544, %551 : vector<8x64xf32>
    %c1_208 = arith.constant 1 : index
    %c0_209 = arith.constant 0 : index
    %c0_210 = arith.constant 0 : index
    %553 = vector.load %arg8[%c1_208, %c0_209, %c0_210] : memref<3x8x18xf32, #tpu.memory_space<vmem>>, vector<1x8x18xf32>
    %554 = vector.shape_cast %553 : vector<1x8x18xf32> to vector<8x18xf32>
    %cst_211 = arith.constant dense<0.000000e+00> : vector<8x64xf32>
    %555 = tpu.matmul %554, %543, %cst_211 {dimension_numbers = #tpu.dot_dimension_numbers<[1], [0], [0], [1], [0, 0, 1, 1], [], []>} : vector<8x18xf32>, vector<18x64xf32>, vector<8x64xf32> -> vector<8x64xf32>
    %556 = arith.truncf %555 : vector<8x64xf32> to vector<8x64xbf16>
    %557 = vector.extract_strided_slice %539 {offsets = [1, 0, 0], sizes = [1, 64, 64], strides = [1, 1, 1]} : vector<3x64x64xbf16> to vector<1x64x64xbf16>
    %558 = vector.shape_cast %557 : vector<1x64x64xbf16> to vector<64x64xbf16>
    %cst_212 = arith.constant dense<0.000000e+00> : vector<8x64xf32>
    %559 = tpu.matmul %556, %558, %cst_212 {dimension_numbers = #tpu.dot_dimension_numbers<[1], [0], [0], [1], [0, 0, 1, 1], [], []>} : vector<8x64xbf16>, vector<64x64xbf16>, vector<8x64xf32> -> vector<8x64xf32>
    %560 = arith.addf %552, %559 : vector<8x64xf32>
    %c2_213 = arith.constant 2 : index
    %c0_214 = arith.constant 0 : index
    %c0_215 = arith.constant 0 : index
    %561 = vector.load %arg8[%c2_213, %c0_214, %c0_215] : memref<3x8x18xf32, #tpu.memory_space<vmem>>, vector<1x8x18xf32>
    %562 = vector.shape_cast %561 : vector<1x8x18xf32> to vector<8x18xf32>
    %cst_216 = arith.constant dense<0.000000e+00> : vector<8x64xf32>
    %563 = tpu.matmul %562, %543, %cst_216 {dimension_numbers = #tpu.dot_dimension_numbers<[1], [0], [0], [1], [0, 0, 1, 1], [], []>} : vector<8x18xf32>, vector<18x64xf32>, vector<8x64xf32> -> vector<8x64xf32>
    %564 = arith.truncf %563 : vector<8x64xf32> to vector<8x64xbf16>
    %565 = vector.extract_strided_slice %539 {offsets = [2, 0, 0], sizes = [1, 64, 64], strides = [1, 1, 1]} : vector<3x64x64xbf16> to vector<1x64x64xbf16>
    %566 = vector.shape_cast %565 : vector<1x64x64xbf16> to vector<64x64xbf16>
    %cst_217 = arith.constant dense<0.000000e+00> : vector<8x64xf32>
    %567 = tpu.matmul %564, %566, %cst_217 {dimension_numbers = #tpu.dot_dimension_numbers<[1], [0], [0], [1], [0, 0, 1, 1], [], []>} : vector<8x64xbf16>, vector<64x64xbf16>, vector<8x64xf32> -> vector<8x64xf32>
    %568 = arith.addf %560, %567 : vector<8x64xf32>
    %569 = vector.extract_strided_slice %541 {offsets = [0, 0], sizes = [1, 64], strides = [1, 1]} : vector<2x64xf32> to vector<1x64xf32>
    %570 = vector.broadcast %569 : vector<1x64xf32> to vector<8x64xf32>
    %571 = arith.mulf %568, %570 : vector<8x64xf32>
    %572 = vector.extract_strided_slice %541 {offsets = [1, 0], sizes = [1, 64], strides = [1, 1]} : vector<2x64xf32> to vector<1x64xf32>
    %573 = vector.broadcast %572 : vector<1x64xf32> to vector<8x64xf32>
    %574 = arith.addf %571, %573 : vector<8x64xf32>
    %c0_218 = arith.constant 0 : index
    %c0_219 = arith.constant 0 : index
    %c0_220 = arith.constant 0 : index
    %c0_221 = arith.constant 0 : index
    %575 = vector.load %arg4[%c0_218, %c0_219, %c0_220, %c0_221] : memref<2x3x64x64xbf16, #tpu.memory_space<vmem>>, vector<1x3x64x64xbf16>
    %576 = vector.shape_cast %575 : vector<1x3x64x64xbf16> to vector<3x64x64xbf16>
    %c0_222 = arith.constant 0 : index
    %c0_223 = arith.constant 0 : index
    %c0_224 = arith.constant 0 : index
    %577 = vector.load %arg5[%c0_222, %c0_223, %c0_224] : memref<2x2x64xf32, #tpu.memory_space<vmem>>, vector<1x2x64xf32>
    %578 = vector.shape_cast %577 : vector<1x2x64xf32> to vector<2x64xf32>
    %cst_225 = arith.constant 0.000000e+00 : f32
    %579 = vector.broadcast %cst_225 : f32 to vector<1x64xf32>
    %580 = tpu.concatenate %579, %537, %579 in 0 : vector<1x64xf32>, vector<16x64xf32>, vector<1x64xf32> -> vector<18x64xf32>
    %cst_226 = arith.constant 0.000000e+00 : f32
    %581 = vector.broadcast %cst_226 : f32 to vector<8x64xf32>
    %c0_227 = arith.constant 0 : index
    %c0_228 = arith.constant 0 : index
    %c0_229 = arith.constant 0 : index
    %582 = vector.load %arg8[%c0_227, %c0_228, %c0_229] : memref<3x8x18xf32, #tpu.memory_space<vmem>>, vector<1x8x18xf32>
    %583 = vector.shape_cast %582 : vector<1x8x18xf32> to vector<8x18xf32>
    %cst_230 = arith.constant dense<0.000000e+00> : vector<8x64xf32>
    %584 = tpu.matmul %583, %580, %cst_230 {dimension_numbers = #tpu.dot_dimension_numbers<[1], [0], [0], [1], [0, 0, 1, 1], [], []>} : vector<8x18xf32>, vector<18x64xf32>, vector<8x64xf32> -> vector<8x64xf32>
    %585 = arith.truncf %584 : vector<8x64xf32> to vector<8x64xbf16>
    %586 = vector.extract_strided_slice %576 {offsets = [0, 0, 0], sizes = [1, 64, 64], strides = [1, 1, 1]} : vector<3x64x64xbf16> to vector<1x64x64xbf16>
    %587 = vector.shape_cast %586 : vector<1x64x64xbf16> to vector<64x64xbf16>
    %cst_231 = arith.constant dense<0.000000e+00> : vector<8x64xf32>
    %588 = tpu.matmul %585, %587, %cst_231 {dimension_numbers = #tpu.dot_dimension_numbers<[1], [0], [0], [1], [0, 0, 1, 1], [], []>} : vector<8x64xbf16>, vector<64x64xbf16>, vector<8x64xf32> -> vector<8x64xf32>
    %589 = arith.addf %581, %588 : vector<8x64xf32>
    %c1_232 = arith.constant 1 : index
    %c0_233 = arith.constant 0 : index
    %c0_234 = arith.constant 0 : index
    %590 = vector.load %arg8[%c1_232, %c0_233, %c0_234] : memref<3x8x18xf32, #tpu.memory_space<vmem>>, vector<1x8x18xf32>
    %591 = vector.shape_cast %590 : vector<1x8x18xf32> to vector<8x18xf32>
    %cst_235 = arith.constant dense<0.000000e+00> : vector<8x64xf32>
    %592 = tpu.matmul %591, %580, %cst_235 {dimension_numbers = #tpu.dot_dimension_numbers<[1], [0], [0], [1], [0, 0, 1, 1], [], []>} : vector<8x18xf32>, vector<18x64xf32>, vector<8x64xf32> -> vector<8x64xf32>
    %593 = arith.truncf %592 : vector<8x64xf32> to vector<8x64xbf16>
    %594 = vector.extract_strided_slice %576 {offsets = [1, 0, 0], sizes = [1, 64, 64], strides = [1, 1, 1]} : vector<3x64x64xbf16> to vector<1x64x64xbf16>
    %595 = vector.shape_cast %594 : vector<1x64x64xbf16> to vector<64x64xbf16>
    %cst_236 = arith.constant dense<0.000000e+00> : vector<8x64xf32>
    %596 = tpu.matmul %593, %595, %cst_236 {dimension_numbers = #tpu.dot_dimension_numbers<[1], [0], [0], [1], [0, 0, 1, 1], [], []>} : vector<8x64xbf16>, vector<64x64xbf16>, vector<8x64xf32> -> vector<8x64xf32>
    %597 = arith.addf %589, %596 : vector<8x64xf32>
    %c2_237 = arith.constant 2 : index
    %c0_238 = arith.constant 0 : index
    %c0_239 = arith.constant 0 : index
    %598 = vector.load %arg8[%c2_237, %c0_238, %c0_239] : memref<3x8x18xf32, #tpu.memory_space<vmem>>, vector<1x8x18xf32>
    %599 = vector.shape_cast %598 : vector<1x8x18xf32> to vector<8x18xf32>
    %cst_240 = arith.constant dense<0.000000e+00> : vector<8x64xf32>
    %600 = tpu.matmul %599, %580, %cst_240 {dimension_numbers = #tpu.dot_dimension_numbers<[1], [0], [0], [1], [0, 0, 1, 1], [], []>} : vector<8x18xf32>, vector<18x64xf32>, vector<8x64xf32> -> vector<8x64xf32>
    %601 = arith.truncf %600 : vector<8x64xf32> to vector<8x64xbf16>
    %602 = vector.extract_strided_slice %576 {offsets = [2, 0, 0], sizes = [1, 64, 64], strides = [1, 1, 1]} : vector<3x64x64xbf16> to vector<1x64x64xbf16>
    %603 = vector.shape_cast %602 : vector<1x64x64xbf16> to vector<64x64xbf16>
    %cst_241 = arith.constant dense<0.000000e+00> : vector<8x64xf32>
    %604 = tpu.matmul %601, %603, %cst_241 {dimension_numbers = #tpu.dot_dimension_numbers<[1], [0], [0], [1], [0, 0, 1, 1], [], []>} : vector<8x64xbf16>, vector<64x64xbf16>, vector<8x64xf32> -> vector<8x64xf32>
    %605 = arith.addf %597, %604 : vector<8x64xf32>
    %606 = vector.extract_strided_slice %578 {offsets = [0, 0], sizes = [1, 64], strides = [1, 1]} : vector<2x64xf32> to vector<1x64xf32>
    %607 = vector.broadcast %606 : vector<1x64xf32> to vector<8x64xf32>
    %608 = arith.mulf %605, %607 : vector<8x64xf32>
    %609 = vector.extract_strided_slice %578 {offsets = [1, 0], sizes = [1, 64], strides = [1, 1]} : vector<2x64xf32> to vector<1x64xf32>
    %610 = vector.broadcast %609 : vector<1x64xf32> to vector<8x64xf32>
    %611 = arith.addf %608, %610 : vector<8x64xf32>
    %cst_242 = arith.constant 0.000000e+00 : f32
    %612 = vector.broadcast %cst_242 : f32 to vector<8x64xf32>
    %613 = arith.maximumf %611, %612 : vector<8x64xf32>
    %c0_243 = arith.constant 0 : index
    %c0_244 = arith.constant 0 : index
    %c0_245 = arith.constant 0 : index
    %c0_246 = arith.constant 0 : index
    %614 = vector.load %arg6[%c0_243, %c0_244, %c0_245, %c0_246] : memref<3x3x64x64xbf16, #tpu.memory_space<vmem>>, vector<1x3x64x64xbf16>
    %615 = vector.shape_cast %614 : vector<1x3x64x64xbf16> to vector<3x64x64xbf16>
    %c0_247 = arith.constant 0 : index
    %c0_248 = arith.constant 0 : index
    %c0_249 = arith.constant 0 : index
    %616 = vector.load %arg7[%c0_247, %c0_248, %c0_249] : memref<3x2x64xf32, #tpu.memory_space<vmem>>, vector<1x2x64xf32>
    %617 = vector.shape_cast %616 : vector<1x2x64xf32> to vector<2x64xf32>
    %cst_250 = arith.constant 0.000000e+00 : f32
    %618 = vector.broadcast %cst_250 : f32 to vector<1x64xf32>
    %619 = tpu.concatenate %618, %613, %618 in 0 : vector<1x64xf32>, vector<8x64xf32>, vector<1x64xf32> -> vector<10x64xf32>
    %cst_251 = arith.constant 0.000000e+00 : f32
    %620 = vector.broadcast %cst_251 : f32 to vector<8x64xf32>
    %621 = vector.extract_strided_slice %619 {offsets = [0, 0], sizes = [8, 64], strides = [1, 1]} : vector<10x64xf32> to vector<8x64xf32>
    %622 = arith.truncf %621 : vector<8x64xf32> to vector<8x64xbf16>
    %623 = vector.extract_strided_slice %615 {offsets = [0, 0, 0], sizes = [1, 64, 64], strides = [1, 1, 1]} : vector<3x64x64xbf16> to vector<1x64x64xbf16>
    %624 = vector.shape_cast %623 : vector<1x64x64xbf16> to vector<64x64xbf16>
    %cst_252 = arith.constant dense<0.000000e+00> : vector<8x64xf32>
    %625 = tpu.matmul %622, %624, %cst_252 {dimension_numbers = #tpu.dot_dimension_numbers<[1], [0], [0], [1], [0, 0, 1, 1], [], []>} : vector<8x64xbf16>, vector<64x64xbf16>, vector<8x64xf32> -> vector<8x64xf32>
    %626 = arith.addf %620, %625 : vector<8x64xf32>
    %627 = vector.extract_strided_slice %619 {offsets = [1, 0], sizes = [8, 64], strides = [1, 1]} : vector<10x64xf32> to vector<8x64xf32>
    %628 = arith.truncf %627 : vector<8x64xf32> to vector<8x64xbf16>
    %629 = vector.extract_strided_slice %615 {offsets = [1, 0, 0], sizes = [1, 64, 64], strides = [1, 1, 1]} : vector<3x64x64xbf16> to vector<1x64x64xbf16>
    %630 = vector.shape_cast %629 : vector<1x64x64xbf16> to vector<64x64xbf16>
    %cst_253 = arith.constant dense<0.000000e+00> : vector<8x64xf32>
    %631 = tpu.matmul %628, %630, %cst_253 {dimension_numbers = #tpu.dot_dimension_numbers<[1], [0], [0], [1], [0, 0, 1, 1], [], []>} : vector<8x64xbf16>, vector<64x64xbf16>, vector<8x64xf32> -> vector<8x64xf32>
    %632 = arith.addf %626, %631 : vector<8x64xf32>
    %633 = vector.extract_strided_slice %619 {offsets = [2, 0], sizes = [8, 64], strides = [1, 1]} : vector<10x64xf32> to vector<8x64xf32>
    %634 = arith.truncf %633 : vector<8x64xf32> to vector<8x64xbf16>
    %635 = vector.extract_strided_slice %615 {offsets = [2, 0, 0], sizes = [1, 64, 64], strides = [1, 1, 1]} : vector<3x64x64xbf16> to vector<1x64x64xbf16>
    %636 = vector.shape_cast %635 : vector<1x64x64xbf16> to vector<64x64xbf16>
    %cst_254 = arith.constant dense<0.000000e+00> : vector<8x64xf32>
    %637 = tpu.matmul %634, %636, %cst_254 {dimension_numbers = #tpu.dot_dimension_numbers<[1], [0], [0], [1], [0, 0, 1, 1], [], []>} : vector<8x64xbf16>, vector<64x64xbf16>, vector<8x64xf32> -> vector<8x64xf32>
    %638 = arith.addf %632, %637 : vector<8x64xf32>
    %639 = vector.extract_strided_slice %617 {offsets = [0, 0], sizes = [1, 64], strides = [1, 1]} : vector<2x64xf32> to vector<1x64xf32>
    %640 = vector.broadcast %639 : vector<1x64xf32> to vector<8x64xf32>
    %641 = arith.mulf %638, %640 : vector<8x64xf32>
    %642 = vector.extract_strided_slice %617 {offsets = [1, 0], sizes = [1, 64], strides = [1, 1]} : vector<2x64xf32> to vector<1x64xf32>
    %643 = vector.broadcast %642 : vector<1x64xf32> to vector<8x64xf32>
    %644 = arith.addf %641, %643 : vector<8x64xf32>
    %645 = arith.addf %644, %574 : vector<8x64xf32>
    %cst_255 = arith.constant 0.000000e+00 : f32
    %646 = vector.broadcast %cst_255 : f32 to vector<8x64xf32>
    %647 = arith.maximumf %645, %646 : vector<8x64xf32>
    %c1_256 = arith.constant 1 : index
    %c0_257 = arith.constant 0 : index
    %c0_258 = arith.constant 0 : index
    %c0_259 = arith.constant 0 : index
    %648 = vector.load %arg6[%c1_256, %c0_257, %c0_258, %c0_259] : memref<3x3x64x64xbf16, #tpu.memory_space<vmem>>, vector<1x3x64x64xbf16>
    %649 = vector.shape_cast %648 : vector<1x3x64x64xbf16> to vector<3x64x64xbf16>
    %c1_260 = arith.constant 1 : index
    %c0_261 = arith.constant 0 : index
    %c0_262 = arith.constant 0 : index
    %650 = vector.load %arg7[%c1_260, %c0_261, %c0_262] : memref<3x2x64xf32, #tpu.memory_space<vmem>>, vector<1x2x64xf32>
    %651 = vector.shape_cast %650 : vector<1x2x64xf32> to vector<2x64xf32>
    %cst_263 = arith.constant 0.000000e+00 : f32
    %652 = vector.broadcast %cst_263 : f32 to vector<1x64xf32>
    %653 = tpu.concatenate %652, %647, %652 in 0 : vector<1x64xf32>, vector<8x64xf32>, vector<1x64xf32> -> vector<10x64xf32>
    %cst_264 = arith.constant 0.000000e+00 : f32
    %654 = vector.broadcast %cst_264 : f32 to vector<8x64xf32>
    %655 = vector.extract_strided_slice %653 {offsets = [0, 0], sizes = [8, 64], strides = [1, 1]} : vector<10x64xf32> to vector<8x64xf32>
    %656 = arith.truncf %655 : vector<8x64xf32> to vector<8x64xbf16>
    %657 = vector.extract_strided_slice %649 {offsets = [0, 0, 0], sizes = [1, 64, 64], strides = [1, 1, 1]} : vector<3x64x64xbf16> to vector<1x64x64xbf16>
    %658 = vector.shape_cast %657 : vector<1x64x64xbf16> to vector<64x64xbf16>
    %cst_265 = arith.constant dense<0.000000e+00> : vector<8x64xf32>
    %659 = tpu.matmul %656, %658, %cst_265 {dimension_numbers = #tpu.dot_dimension_numbers<[1], [0], [0], [1], [0, 0, 1, 1], [], []>} : vector<8x64xbf16>, vector<64x64xbf16>, vector<8x64xf32> -> vector<8x64xf32>
    %660 = arith.addf %654, %659 : vector<8x64xf32>
    %661 = vector.extract_strided_slice %653 {offsets = [1, 0], sizes = [8, 64], strides = [1, 1]} : vector<10x64xf32> to vector<8x64xf32>
    %662 = arith.truncf %661 : vector<8x64xf32> to vector<8x64xbf16>
    %663 = vector.extract_strided_slice %649 {offsets = [1, 0, 0], sizes = [1, 64, 64], strides = [1, 1, 1]} : vector<3x64x64xbf16> to vector<1x64x64xbf16>
    %664 = vector.shape_cast %663 : vector<1x64x64xbf16> to vector<64x64xbf16>
    %cst_266 = arith.constant dense<0.000000e+00> : vector<8x64xf32>
    %665 = tpu.matmul %662, %664, %cst_266 {dimension_numbers = #tpu.dot_dimension_numbers<[1], [0], [0], [1], [0, 0, 1, 1], [], []>} : vector<8x64xbf16>, vector<64x64xbf16>, vector<8x64xf32> -> vector<8x64xf32>
    %666 = arith.addf %660, %665 : vector<8x64xf32>
    %667 = vector.extract_strided_slice %653 {offsets = [2, 0], sizes = [8, 64], strides = [1, 1]} : vector<10x64xf32> to vector<8x64xf32>
    %668 = arith.truncf %667 : vector<8x64xf32> to vector<8x64xbf16>
    %669 = vector.extract_strided_slice %649 {offsets = [2, 0, 0], sizes = [1, 64, 64], strides = [1, 1, 1]} : vector<3x64x64xbf16> to vector<1x64x64xbf16>
    %670 = vector.shape_cast %669 : vector<1x64x64xbf16> to vector<64x64xbf16>
    %cst_267 = arith.constant dense<0.000000e+00> : vector<8x64xf32>
    %671 = tpu.matmul %668, %670, %cst_267 {dimension_numbers = #tpu.dot_dimension_numbers<[1], [0], [0], [1], [0, 0, 1, 1], [], []>} : vector<8x64xbf16>, vector<64x64xbf16>, vector<8x64xf32> -> vector<8x64xf32>
    %672 = arith.addf %666, %671 : vector<8x64xf32>
    %673 = vector.extract_strided_slice %651 {offsets = [0, 0], sizes = [1, 64], strides = [1, 1]} : vector<2x64xf32> to vector<1x64xf32>
    %674 = vector.broadcast %673 : vector<1x64xf32> to vector<8x64xf32>
    %675 = arith.mulf %672, %674 : vector<8x64xf32>
    %676 = vector.extract_strided_slice %651 {offsets = [1, 0], sizes = [1, 64], strides = [1, 1]} : vector<2x64xf32> to vector<1x64xf32>
    %677 = vector.broadcast %676 : vector<1x64xf32> to vector<8x64xf32>
    %678 = arith.addf %675, %677 : vector<8x64xf32>
    %cst_268 = arith.constant 0.000000e+00 : f32
    %679 = vector.broadcast %cst_268 : f32 to vector<8x64xf32>
    %680 = arith.maximumf %678, %679 : vector<8x64xf32>
    %c2_269 = arith.constant 2 : index
    %c0_270 = arith.constant 0 : index
    %c0_271 = arith.constant 0 : index
    %c0_272 = arith.constant 0 : index
    %681 = vector.load %arg6[%c2_269, %c0_270, %c0_271, %c0_272] : memref<3x3x64x64xbf16, #tpu.memory_space<vmem>>, vector<1x3x64x64xbf16>
    %682 = vector.shape_cast %681 : vector<1x3x64x64xbf16> to vector<3x64x64xbf16>
    %c2_273 = arith.constant 2 : index
    %c0_274 = arith.constant 0 : index
    %c0_275 = arith.constant 0 : index
    %683 = vector.load %arg7[%c2_273, %c0_274, %c0_275] : memref<3x2x64xf32, #tpu.memory_space<vmem>>, vector<1x2x64xf32>
    %684 = vector.shape_cast %683 : vector<1x2x64xf32> to vector<2x64xf32>
    %cst_276 = arith.constant 0.000000e+00 : f32
    %685 = vector.broadcast %cst_276 : f32 to vector<1x64xf32>
    %686 = tpu.concatenate %685, %680, %685 in 0 : vector<1x64xf32>, vector<8x64xf32>, vector<1x64xf32> -> vector<10x64xf32>
    %cst_277 = arith.constant 0.000000e+00 : f32
    %687 = vector.broadcast %cst_277 : f32 to vector<8x64xf32>
    %688 = vector.extract_strided_slice %686 {offsets = [0, 0], sizes = [8, 64], strides = [1, 1]} : vector<10x64xf32> to vector<8x64xf32>
    %689 = arith.truncf %688 : vector<8x64xf32> to vector<8x64xbf16>
    %690 = vector.extract_strided_slice %682 {offsets = [0, 0, 0], sizes = [1, 64, 64], strides = [1, 1, 1]} : vector<3x64x64xbf16> to vector<1x64x64xbf16>
    %691 = vector.shape_cast %690 : vector<1x64x64xbf16> to vector<64x64xbf16>
    %cst_278 = arith.constant dense<0.000000e+00> : vector<8x64xf32>
    %692 = tpu.matmul %689, %691, %cst_278 {dimension_numbers = #tpu.dot_dimension_numbers<[1], [0], [0], [1], [0, 0, 1, 1], [], []>} : vector<8x64xbf16>, vector<64x64xbf16>, vector<8x64xf32> -> vector<8x64xf32>
    %693 = arith.addf %687, %692 : vector<8x64xf32>
    %694 = vector.extract_strided_slice %686 {offsets = [1, 0], sizes = [8, 64], strides = [1, 1]} : vector<10x64xf32> to vector<8x64xf32>
    %695 = arith.truncf %694 : vector<8x64xf32> to vector<8x64xbf16>
    %696 = vector.extract_strided_slice %682 {offsets = [1, 0, 0], sizes = [1, 64, 64], strides = [1, 1, 1]} : vector<3x64x64xbf16> to vector<1x64x64xbf16>
    %697 = vector.shape_cast %696 : vector<1x64x64xbf16> to vector<64x64xbf16>
    %cst_279 = arith.constant dense<0.000000e+00> : vector<8x64xf32>
    %698 = tpu.matmul %695, %697, %cst_279 {dimension_numbers = #tpu.dot_dimension_numbers<[1], [0], [0], [1], [0, 0, 1, 1], [], []>} : vector<8x64xbf16>, vector<64x64xbf16>, vector<8x64xf32> -> vector<8x64xf32>
    %699 = arith.addf %693, %698 : vector<8x64xf32>
    %700 = vector.extract_strided_slice %686 {offsets = [2, 0], sizes = [8, 64], strides = [1, 1]} : vector<10x64xf32> to vector<8x64xf32>
    %701 = arith.truncf %700 : vector<8x64xf32> to vector<8x64xbf16>
    %702 = vector.extract_strided_slice %682 {offsets = [2, 0, 0], sizes = [1, 64, 64], strides = [1, 1, 1]} : vector<3x64x64xbf16> to vector<1x64x64xbf16>
    %703 = vector.shape_cast %702 : vector<1x64x64xbf16> to vector<64x64xbf16>
    %cst_280 = arith.constant dense<0.000000e+00> : vector<8x64xf32>
    %704 = tpu.matmul %701, %703, %cst_280 {dimension_numbers = #tpu.dot_dimension_numbers<[1], [0], [0], [1], [0, 0, 1, 1], [], []>} : vector<8x64xbf16>, vector<64x64xbf16>, vector<8x64xf32> -> vector<8x64xf32>
    %705 = arith.addf %699, %704 : vector<8x64xf32>
    %706 = vector.extract_strided_slice %684 {offsets = [0, 0], sizes = [1, 64], strides = [1, 1]} : vector<2x64xf32> to vector<1x64xf32>
    %707 = vector.broadcast %706 : vector<1x64xf32> to vector<8x64xf32>
    %708 = arith.mulf %705, %707 : vector<8x64xf32>
    %709 = vector.extract_strided_slice %684 {offsets = [1, 0], sizes = [1, 64], strides = [1, 1]} : vector<2x64xf32> to vector<1x64xf32>
    %710 = vector.broadcast %709 : vector<1x64xf32> to vector<8x64xf32>
    %711 = arith.addf %708, %710 : vector<8x64xf32>
    %712 = arith.addf %711, %647 : vector<8x64xf32>
    %cst_281 = arith.constant 0.000000e+00 : f32
    %713 = vector.broadcast %cst_281 : f32 to vector<8x64xf32>
    %714 = arith.maximumf %712, %713 : vector<8x64xf32>
    %c0_282 = arith.constant 0 : index
    %c0_283 = arith.constant 0 : index
    %715 = vector.load %arg9[%c0_282, %c0_283] : memref<64x8xf32, #tpu.memory_space<vmem>>, vector<64x8xf32>
    %cst_284 = arith.constant dense<0.000000e+00> : vector<8x8xf32>
    %716 = tpu.matmul %714, %715, %cst_284 {dimension_numbers = #tpu.dot_dimension_numbers<[1], [0], [0], [1], [0, 0, 1, 1], [], []>} : vector<8x64xf32>, vector<64x8xf32>, vector<8x8xf32> -> vector<8x8xf32>
    %cst_285 = arith.constant dense<0.000000e+00> : vector<8xf32>
    %717 = vector.multi_reduction <add>, %716, %cst_285 [0] : vector<8x8xf32> to vector<8xf32>
    %718 = vector.shape_cast %717 : vector<8xf32> to vector<1x8xf32>
    %c0_286 = arith.constant 0 : index
    %c0_287 = arith.constant 0 : index
    %c0_288 = arith.constant 0 : index
    %719 = vector.load %arg10[%c0_286, %c0_287, %c0_288] : memref<1x1x8xf32, #tpu.memory_space<vmem>>, vector<1x1x8xf32>
    %720 = vector.shape_cast %719 : vector<1x1x8xf32> to vector<1x8xf32>
    %721 = vector.shape_cast %718 : vector<1x8xf32> to vector<1x1x8xf32>
    tpu.vector_store %arg10[%c0_286, %c0_287, %c0_288], %721 {strides = array<i32>} : memref<1x1x8xf32, #tpu.memory_space<vmem>>, vector<1x1x8xf32>,
    return
  }
  func.func @transform_0(%arg0: i32) -> (i32, i32, i32) {
    %c0_i32 = arith.constant 0 : i32
    %c0_i32_0 = arith.constant 0 : i32
    %c0_i32_1 = arith.constant 0 : i32
    return %arg0, %c0_i32, %c0_i32_0 : i32, i32, i32
  }
  func.func @transform_1(%arg0: i32) -> (i32, i32, i32, i32) {
    %c0_i32 = arith.constant 0 : i32
    %c0_i32_0 = arith.constant 0 : i32
    %c0_i32_1 = arith.constant 0 : i32
    %c0_i32_2 = arith.constant 0 : i32
    %c0_i32_3 = arith.constant 0 : i32
    return %c0_i32, %c0_i32_0, %c0_i32_1, %c0_i32_2 : i32, i32, i32, i32
  }
  func.func @transform_2(%arg0: i32) -> (i32, i32, i32) {
    %c0_i32 = arith.constant 0 : i32
    %c0_i32_0 = arith.constant 0 : i32
    %c0_i32_1 = arith.constant 0 : i32
    %c0_i32_2 = arith.constant 0 : i32
    return %c0_i32, %c0_i32_0, %c0_i32_1 : i32, i32, i32
  }
  func.func @transform_3(%arg0: i32) -> (i32, i32, i32, i32) {
    %c0_i32 = arith.constant 0 : i32
    %c0_i32_0 = arith.constant 0 : i32
    %c0_i32_1 = arith.constant 0 : i32
    %c0_i32_2 = arith.constant 0 : i32
    %c0_i32_3 = arith.constant 0 : i32
    return %c0_i32, %c0_i32_0, %c0_i32_1, %c0_i32_2 : i32, i32, i32, i32
  }
  func.func @transform_4(%arg0: i32) -> (i32, i32, i32) {
    %c0_i32 = arith.constant 0 : i32
    %c0_i32_0 = arith.constant 0 : i32
    %c0_i32_1 = arith.constant 0 : i32
    %c0_i32_2 = arith.constant 0 : i32
    return %c0_i32, %c0_i32_0, %c0_i32_1 : i32, i32, i32
  }
  func.func @transform_5(%arg0: i32) -> (i32, i32, i32, i32) {
    %c0_i32 = arith.constant 0 : i32
    %c0_i32_0 = arith.constant 0 : i32
    %c0_i32_1 = arith.constant 0 : i32
    %c0_i32_2 = arith.constant 0 : i32
    %c0_i32_3 = arith.constant 0 : i32
    return %c0_i32, %c0_i32_0, %c0_i32_1, %c0_i32_2 : i32, i32, i32, i32
  }
  func.func @transform_6(%arg0: i32) -> (i32, i32, i32) {
    %c0_i32 = arith.constant 0 : i32
    %c0_i32_0 = arith.constant 0 : i32
    %c0_i32_1 = arith.constant 0 : i32
    %c0_i32_2 = arith.constant 0 : i32
    return %c0_i32, %c0_i32_0, %c0_i32_1 : i32, i32, i32
  }
  func.func @transform_7(%arg0: i32) -> (i32, i32, i32) {
    %c0_i32 = arith.constant 0 : i32
    %c0_i32_0 = arith.constant 0 : i32
    %c0_i32_1 = arith.constant 0 : i32
    %c0_i32_2 = arith.constant 0 : i32
    return %c0_i32, %c0_i32_0, %c0_i32_1 : i32, i32, i32
  }
  func.func @transform_8(%arg0: i32) -> (i32, i32) {
    %c0_i32 = arith.constant 0 : i32
    %c0_i32_0 = arith.constant 0 : i32
    %c0_i32_1 = arith.constant 0 : i32
    return %c0_i32, %c0_i32_0 : i32, i32
  }
  func.func @transform_9(%arg0: i32) -> (i32, i32, i32) {
    %c0_i32 = arith.constant 0 : i32
    %c0_i32_0 = arith.constant 0 : i32
    %c0_i32_1 = arith.constant 0 : i32
    return %arg0, %c0_i32, %c0_i32_0 : i32, i32, i32
  }
}

</mosaic_0001>

<llo_original>
// kernel: resnet10_block_forward.1
$region0: #{resnet10_block_forward.1}
  #allocation0 [shape = 'u32[]', space=smem, size = 0x4, offset = 0x4, fixed_abs, tag = 'smem constant byte address 0x4 - core index']
  #allocation1 [shape = 'u32[72,128]{1,0:T(1,128)}', space=vmem, size = 0x9000, scoped, tag = 'internal scratch']
  %s0 = inlined_call_operand.vmem [shape: f32[2,16,64], index: 0, kind: input, shape index: {}]
  %s1 = inlined_call_operand.hbm [shape: bf16[16,3,64,64], index: 1, kind: input, shape index: {}]
  %s2 = inlined_call_operand.hbm [shape: f32[16,2,64], index: 2, kind: input, shape index: {}]
  %s3 = inlined_call_operand.vmem [shape: bf16[2,3,64,64], index: 3, kind: input, shape index: {}]
  %s4 = inlined_call_operand.vmem [shape: f32[2,2,64], index: 4, kind: input, shape index: {}]
  %s5 = inlined_call_operand.vmem [shape: bf16[3,3,64,64], index: 5, kind: input, shape index: {}]
  %s6 = inlined_call_operand.hbm [shape: f32[3,2,64], index: 6, kind: input, shape index: {}]
  %s7 = inlined_call_operand.hbm [shape: f32[3,8,18], index: 7, kind: input, shape index: {}]
  %s8 = inlined_call_operand.vmem [shape: f32[64,8], index: 8, kind: input, shape index: {}]
  %s9 = inlined_call_operand.hbm [shape: f32[2,1,8], index: 9, kind: output, shape index: {}]
  %s10 = sld [smem:[#allocation0]]
  $region85: #{resnet10_block_forward.1} parent=0
    _
  %s12 = ssub.s32 1, %s10
  %s13 = scalar_select 0, %s12, %s10
  $region1: #{resnet10_block_forward.1} parent=0
    #allocation2 [shape = 'u8[786432]{0}', space=vmem, size = 0xc0000, scoped, tag = 'input window, operand 1, single buffered']
    #allocation3 [shape = 's32[2]{0}', space=sflag, size = 0x8, scoped, tag = 'scoped memory for resnet10_block_forward.1']
    #allocation4 [shape = 's32[2]{0}', space=sflag, size = 0x8, scoped, tag = 'scoped memory for resnet10_block_forward.1']
    #allocation5 [shape = 'u8[16384]{0}', space=vmem, size = 0x4000, scoped, tag = 'input window, operand 2, single buffered']
    #allocation6 [shape = 's32[1]{0}', space=sflag, size = 0x4, scoped, tag = 'scoped memory for resnet10_block_forward.1']
    #allocation7 [shape = 'u8[3072]{0}', space=vmem, size = 0xc00, scoped, tag = 'input window, operand 6, single buffered']
    #allocation8 [shape = 'u8[12288]{0}', space=vmem, size = 0x3000, scoped, tag = 'input window, operand 7, single buffered']
    #allocation9 [shape = 's32[1]{0}', space=sflag, size = 0x4, scoped, tag = 'scoped memory for resnet10_block_forward.1']
    #allocation10 [shape = 'u8[1024]{0}', space=vmem, size = 0x400, scoped, tag = 'output window, operand 0']
    %14 = vsyncpa [#allocation3], 0
    %15 = vsyncpa [#allocation6], 0
    %16 = vsyncpa [#allocation9], 0
    %17 = vsyncpa [#allocation4], 0
    %s18 = scalar_lea.sflag [#allocation4], 1
    %19 = vsyncpa %s18, 0
    loop: start=0, step=1, limit=4
    $region2: #{resnet10_block_forward.1} parent=1 // loop_pre_header
      _
    $region3: #{resnet10_block_forward.1} parent=1 // loop_header
      %s21 = sphi 0, %s25
      %p22 = scmp.ge.s32.totalorder %s21, 4
      %s31 = sphi 0, %s33
      %s34 = sphi 0, %s31
      %s35 = sphi 0, %s34
      %s51 = sphi 0, %s35
      %s55 = sphi 0, %s55
      %s57 = sphi 0, %s55
      %s58 = sphi 0, %s57
      %s72 = sphi 0, %s58
      %s76 = sphi 0, %s76
      %s78 = sphi 0, %s76
      %s79 = sphi 0, %s78
      %s93 = sphi 0, %s79
      %s97 = sphi 0, %s97
      %s99 = sphi 0, %s97
      %s100 = sphi 0, %s99
      %s114 = sphi 0, %s100
      %s118 = sphi 0, %s118
      %s120 = sphi 0, %s118
      %s121 = sphi 0, %s120
      %s135 = sphi 0, %s121
      %s139 = sphi 0, %s139
      %s141 = sphi 0, %s139
      %s142 = sphi 0, %s141
      %s156 = sphi 0, %s142
      %s160 = sphi 0, %s160
      %s162 = sphi 0, %s160
      %s163 = sphi 0, %s162
      %s177 = sphi 0, %s163
      %s181 = sphi 0, %s181
      %s183 = sphi 0, %s181
      %s184 = sphi 0, %s183
      %s198 = sphi 0, %s184
      %s202 = sphi 0, %s202
      %s204 = sphi 0, %s202
      %s205 = sphi 0, %s204
      %s219 = sphi 0, %s205
      %s225 = sphi 0, %s227
      %s228 = sphi 0, %s225
      %s229 = sphi 0, %s228
      %s245 = sphi 0, %s229
    $region4: #{resnet10_block_forward.1} parent=1 // loop_header_branch
      %24 = sbr.rel (%p22) target = $region8
    $region5: #{resnet10_block_forward.1} parent=1 // loop_body
      %s26 = ssub.s32 %s21, 1
      %s27 = ssub.s32 %s21, 2
      %s28 = sadd.s32 %s21, 1
      %s29 = ssub.s32 %s21, %s28
      %p30 = scmp.eq.s32.totalorder %s29, 0
      %s32 = sadd.s32 %s31, 1
      %s33 = scalar_select %p30, %s31, %s32
      %p36 = pneg %p30
      %p37 = scmp.eq.s32.totalorder %s21, 1
      %p38 = por %p36, %p37
      %p39 = scmp.ne.s32.totalorder %s31, %s34
      %p40 = scmp.eq.s32.totalorder %s21, 0
      %p41 = por %p39, %p40
      %p42 = scmp.ne.s32.totalorder %s31, %s34
      %p43 = scmp.eq.s32.totalorder %s26, 1
      %p44 = por %p42, %p43
      %p45 = scmp.ne.s32.totalorder %s34, %s35
      %p46 = scmp.eq.s32.totalorder %s26, 0
      %p47 = por %p45, %p46
      %p48 = scmp.ne.s32.totalorder %s34, %s35
      %p49 = scmp.eq.s32.totalorder %s27, 1
      %p50 = por %p48, %p49
      %p52 = scmp.ne.s32.totalorder %s35, %s51
      %p53 = scmp.eq.s32.totalorder %s27, 0
      %p54 = por %p52, %p53
      %s56 = sadd.s32 %s55, 1
      %p59 = scmp.eq.s32.totalorder %s21, 1
      %p60 = scmp.ne.s32.totalorder %s55, %s57
      %p61 = scmp.eq.s32.totalorder %s21, 0
      %p62 = por %p60, %p61
      %p63 = scmp.ne.s32.totalorder %s55, %s57
      %p64 = scmp.eq.s32.totalorder %s26, 1
      %p65 = por %p63, %p64
      %p66 = scmp.ne.s32.totalorder %s57, %s58
      %p67 = scmp.eq.s32.totalorder %s26, 0
      %p68 = por %p66, %p67
      %p69 = scmp.ne.s32.totalorder %s57, %s58
      %p70 = scmp.eq.s32.totalorder %s27, 1
      %p71 = por %p69, %p70
      %p73 = scmp.ne.s32.totalorder %s58, %s72
      %p74 = scmp.eq.s32.totalorder %s27, 0
      %p75 = por %p73, %p74
      %s77 = sadd.s32 %s76, 1
      %p80 = scmp.eq.s32.totalorder %s21, 1
      %p81 = scmp.ne.s32.totalorder %s76, %s78
      %p82 = scmp.eq.s32.totalorder %s21, 0
      %p83 = por %p81, %p82
      %p84 = scmp.ne.s32.totalorder %s76, %s78
      %p85 = scmp.eq.s32.totalorder %s26, 1
      %p86 = por %p84, %p85
      %p87 = scmp.ne.s32.totalorder %s78, %s79
      %p88 = scmp.eq.s32.totalorder %s26, 0
      %p89 = por %p87, %p88
      %p90 = scmp.ne.s32.totalorder %s78, %s79
      %p91 = scmp.eq.s32.totalorder %s27, 1
      %p92 = por %p90, %p91
      %p94 = scmp.ne.s32.totalorder %s79, %s93
      %p95 = scmp.eq.s32.totalorder %s27, 0
      %p96 = por %p94, %p95
      %s98 = sadd.s32 %s97, 1
      %p101 = scmp.eq.s32.totalorder %s21, 1
      %p102 = scmp.ne.s32.totalorder %s97, %s99
      %p103 = scmp.eq.s32.totalorder %s21, 0
      %p104 = por %p102, %p103
      %p105 = scmp.ne.s32.totalorder %s97, %s99
      %p106 = scmp.eq.s32.totalorder %s26, 1
      %p107 = por %p105, %p106
      %p108 = scmp.ne.s32.totalorder %s99, %s100
      %p109 = scmp.eq.s32.totalorder %s26, 0
      %p110 = por %p108, %p109
      %p111 = scmp.ne.s32.totalorder %s99, %s100
      %p112 = scmp.eq.s32.totalorder %s27, 1
      %p113 = por %p111, %p112
      %p115 = scmp.ne.s32.totalorder %s100, %s114
      %p116 = scmp.eq.s32.totalorder %s27, 0
      %p117 = por %p115, %p116
      %s119 = sadd.s32 %s118, 1
      %p122 = scmp.eq.s32.totalorder %s21, 1
      %p123 = scmp.ne.s32.totalorder %s118, %s120
      %p124 = scmp.eq.s32.totalorder %s21, 0
      %p125 = por %p123, %p124
      %p126 = scmp.ne.s32.totalorder %s118, %s120
      %p127 = scmp.eq.s32.totalorder %s26, 1
      %p128 = por %p126, %p127
      %p129 = scmp.ne.s32.totalorder %s120, %s121
      %p130 = scmp.eq.s32.totalorder %s26, 0
      %p131 = por %p129, %p130
      %p132 = scmp.ne.s32.totalorder %s120, %s121
      %p133 = scmp.eq.s32.totalorder %s27, 1
      %p134 = por %p132, %p133
      %p136 = scmp.ne.s32.totalorder %s121, %s135
      %p137 = scmp.eq.s32.totalorder %s27, 0
      %p138 = por %p136, %p137
      %s140 = sadd.s32 %s139, 1
      %p143 = scmp.eq.s32.totalorder %s21, 1
      %p144 = scmp.ne.s32.totalorder %s139, %s141
      %p145 = scmp.eq.s32.totalorder %s21, 0
      %p146 = por %p144, %p145
      %p147 = scmp.ne.s32.totalorder %s139, %s141
      %p148 = scmp.eq.s32.totalorder %s26, 1
      %p149 = por %p147, %p148
      %p150 = scmp.ne.s32.totalorder %s141, %s142
      %p151 = scmp.eq.s32.totalorder %s26, 0
      %p152 = por %p150, %p151
      %p153 = scmp.ne.s32.totalorder %s141, %s142
      %p154 = scmp.eq.s32.totalorder %s27, 1
      %p155 = por %p153, %p154
      %p157 = scmp.ne.s32.totalorder %s142, %s156
      %p158 = scmp.eq.s32.totalorder %s27, 0
      %p159 = por %p157, %p158
      %s161 = sadd.s32 %s160, 1
      %p164 = scmp.eq.s32.totalorder %s21, 1
      %p165 = scmp.ne.s32.totalorder %s160, %s162
      %p166 = scmp.eq.s32.totalorder %s21, 0
      %p167 = por %p165, %p166
      %p168 = scmp.ne.s32.totalorder %s160, %s162
      %p169 = scmp.eq.s32.totalorder %s26, 1
      %p170 = por %p168, %p169
      %p171 = scmp.ne.s32.totalorder %s162, %s163
      %p172 = scmp.eq.s32.totalorder %s26, 0
      %p173 = por %p171, %p172
      %p174 = scmp.ne.s32.totalorder %s162, %s163
      %p175 = scmp.eq.s32.totalorder %s27, 1
      %p176 = por %p174, %p175
      %p178 = scmp.ne.s32.totalorder %s163, %s177
      %p179 = scmp.eq.s32.totalorder %s27, 0
      %p180 = por %p178, %p179
      %s182 = sadd.s32 %s181, 1
      %p185 = scmp.eq.s32.totalorder %s21, 1
      %p186 = scmp.ne.s32.totalorder %s181, %s183
      %p187 = scmp.eq.s32.totalorder %s21, 0
      %p188 = por %p186, %p187
      %p189 = scmp.ne.s32.totalorder %s181, %s183
      %p190 = scmp.eq.s32.totalorder %s26, 1
      %p191 = por %p189, %p190
      %p192 = scmp.ne.s32.totalorder %s183, %s184
      %p193 = scmp.eq.s32.totalorder %s26, 0
      %p194 = por %p192, %p193
      %p195 = scmp.ne.s32.totalorder %s183, %s184
      %p196 = scmp.eq.s32.totalorder %s27, 1
      %p197 = por %p195, %p196
      %p199 = scmp.ne.s32.totalorder %s184, %s198
      %p200 = scmp.eq.s32.totalorder %s27, 0
      %p201 = por %p199, %p200
      %s203 = sadd.s32 %s202, 1
      %p206 = scmp.eq.s32.totalorder %s21, 1
      %p207 = scmp.ne.s32.totalorder %s202, %s204
      %p208 = scmp.eq.s32.totalorder %s21, 0
      %p209 = por %p207, %p208
      %p210 = scmp.ne.s32.totalorder %s202, %s204
      %p211 = scmp.eq.s32.totalorder %s26, 1
      %p212 = por %p210, %p211
      %p213 = scmp.ne.s32.totalorder %s204, %s205
      %p214 = scmp.eq.s32.totalorder %s26, 0
      %p215 = por %p213, %p214
      %p216 = scmp.ne.s32.totalorder %s204, %s205
      %p217 = scmp.eq.s32.totalorder %s27, 1
      %p218 = por %p216, %p217
      %p220 = scmp.ne.s32.totalorder %s205, %s219
      %p221 = scmp.eq.s32.totalorder %s27, 0
      %p222 = por %p220, %p221
      %s223 = ssub.s32 %s21, %s28
      %p224 = scmp.eq.s32.totalorder %s223, 0
      %s226 = sadd.s32 %s225, 1
      %s227 = scalar_select %p224, %s225, %s226
      %p230 = pneg %p224
      %p231 = scmp.eq.s32.totalorder %s21, 1
      %p232 = por %p230, %p231
      %p233 = scmp.ne.s32.totalorder %s225, %s228
      %p234 = scmp.eq.s32.totalorder %s21, 0
      %p235 = por %p233, %p234
      %p236 = scmp.ne.s32.totalorder %s225, %s228
      %p237 = scmp.eq.s32.totalorder %s26, 1
      %p238 = por %p236, %p237
      %p239 = scmp.ne.s32.totalorder %s228, %s229
      %p240 = scmp.eq.s32.totalorder %s26, 0
      %p241 = por %p239, %p240
      %p242 = scmp.ne.s32.totalorder %s228, %s229
      %p243 = scmp.eq.s32.totalorder %s27, 1
      %p244 = por %p242, %p243
      %p246 = scmp.ne.s32.totalorder %s229, %s245
      %p247 = scmp.eq.s32.totalorder %s27, 0
      %p248 = por %p246, %p247
      %p249 = scmp.le.s32.totalorder 1, %s21
      %p250 = scmp.lt.s32.totalorder %s21, 3
      %p251 = pnand %p249, %p250
      %p252 = pneg %p251
      // Predicated region
      $region9: #{resnet10_block_forward.1} parent=5 // pred_check
        _
      $region10: #{resnet10_block_forward.1} parent=5 // pred_check_branch
        %254 = sbr.rel (%p251) target = $region12
      $region11: #{resnet10_block_forward.1} parent=5 // pred_region
        %s255 = ssub.s32 %s21, 1
        // Predicated region
        $region13: #{resnet10_block_forward.1} parent=11 // pred_check
          %p256 = pneg %p68
        $region14: #{resnet10_block_forward.1} parent=11 // pred_check_branch
          %258 = sbr.rel (%p256) target = $region16
        $region15: #{resnet10_block_forward.1} parent=11 // pred_region
          %260 = vsyncadd [#allocation3], 0
          %s261 = sshll.u32 %s1, 4
          %s262 = int_to_ptr.hbm [resolvable:$true] %s261
          %s263 = sshll.u32 [#allocation2], 4
          %s264 = int_to_ptr.vmem [resolvable:$true] %s263
          %269 = dma.hbm_to_vmem [thread:$0]  %s262, 24576, %s264, [#allocation3], 64, 64, 4
        $region16: #{resnet10_block_forward.1} parent=11 // pred_fallthru
          _
        // Predicated region
        $region17: #{resnet10_block_forward.1} parent=11 // pred_check
          %p270 = pneg %p89
        $region18: #{resnet10_block_forward.1} parent=11 // pred_check_branch
          %272 = sbr.rel (%p270) target = $region20
        $region19: #{resnet10_block_forward.1} parent=11 // pred_region
          %274 = vsyncadd [#allocation6], 0
          %s275 = sshll.u32 %s2, 4
          %s276 = int_to_ptr.hbm [resolvable:$true] %s275
          %s277 = sshll.u32 [#allocation5], 4
          %s278 = int_to_ptr.vmem [resolvable:$true] %s277
          %283 = dma.hbm_to_vmem [thread:$0]  %s276, 512, %s278, [#allocation6], 32, 32, 2
        $region20: #{resnet10_block_forward.1} parent=11 // pred_fallthru
          _
        // Predicated region
        $region21: #{resnet10_block_forward.1} parent=11 // pred_check
          %p284 = pneg %p110
        $region22: #{resnet10_block_forward.1} parent=11 // pred_check_branch
          %286 = sbr.rel (%p284) target = $region24
        $region23: #{resnet10_block_forward.1} parent=11 // pred_region
          _
        $region24: #{resnet10_block_forward.1} parent=11 // pred_fallthru
          _
        // Predicated region
        $region25: #{resnet10_block_forward.1} parent=11 // pred_check
          %p287 = pneg %p131
        $region26: #{resnet10_block_forward.1} parent=11 // pred_check_branch
          %289 = sbr.rel (%p287) target = $region28
        $region27: #{resnet10_block_forward.1} parent=11 // pred_region
          _
        $region28: #{resnet10_block_forward.1} parent=11 // pred_fallthru
          _
        // Predicated region
        $region29: #{resnet10_block_forward.1} parent=11 // pred_check
          %p290 = pneg %p152
        $region30: #{resnet10_block_forward.1} parent=11 // pred_check_branch
          %292 = sbr.rel (%p290) target = $region32
        $region31: #{resnet10_block_forward.1} parent=11 // pred_region
          _
        $region32: #{resnet10_block_forward.1} parent=11 // pred_fallthru
          _
        // Predicated region
        $region33: #{resnet10_block_forward.1} parent=11 // pred_check
          %p293 = pneg %p173
        $region34: #{resnet10_block_forward.1} parent=11 // pred_check_branch
          %295 = sbr.rel (%p293) target = $region36
        $region35: #{resnet10_block_forward.1} parent=11 // pred_region
          %297 = vsyncadd [#allocation6], 0
          %s298 = sshll.u32 %s6, 4
          %s299 = int_to_ptr.hbm [resolvable:$true] %s298
          %s300 = sshll.u32 [#allocation7], 4
          %s301 = int_to_ptr.vmem [resolvable:$true] %s300
          %306 = dma.hbm_to_vmem [thread:$0]  %s299, 96, %s301, [#allocation6], 32, 32, 2
        $region36: #{resnet10_block_forward.1} parent=11 // pred_fallthru
          _
        // Predicated region
        $region37: #{resnet10_block_forward.1} parent=11 // pred_check
          %p307 = pneg %p194
        $region38: #{resnet10_block_forward.1} parent=11 // pred_check_branch
          %309 = sbr.rel (%p307) target = $region40
        $region39: #{resnet10_block_forward.1} parent=11 // pred_region
          %311 = vsyncadd [#allocation9], 0
          %s312 = sshll.u32 %s7, 4
          %s313 = int_to_ptr.hbm [resolvable:$true] %s312
          %s314 = sshll.u32 [#allocation8], 4
          %s315 = int_to_ptr.vmem [resolvable:$true] %s314
          %320 = dma.hbm_to_vmem [thread:$0]  %s313, 384, %s315, [#allocation9], 128, 128, 8
        $region40: #{resnet10_block_forward.1} parent=11 // pred_fallthru
          _
        // Predicated region
        $region41: #{resnet10_block_forward.1} parent=11 // pred_check
          %p321 = pneg %p215
        $region42: #{resnet10_block_forward.1} parent=11 // pred_check_branch
          %323 = sbr.rel (%p321) target = $region44
        $region43: #{resnet10_block_forward.1} parent=11 // pred_region
          _
        $region44: #{resnet10_block_forward.1} parent=11 // pred_fallthru
          _
      $region12: #{resnet10_block_forward.1} parent=5 // pred_fallthru
        _
      %p324 = scmp.lt.s32.totalorder %s21, 2
      // Predicated region
      $region45: #{resnet10_block_forward.1} parent=5 // pred_check
        %p325 = pneg %p324
      $region46: #{resnet10_block_forward.1} parent=5 // pred_check_branch
        %327 = sbr.rel (%p325) target = $region48
      $region47: #{resnet10_block_forward.1} parent=5 // pred_region
        // Predicated region
        $region49: #{resnet10_block_forward.1} parent=47 // pred_check
          %p328 = pneg %p41
        $region50: #{resnet10_block_forward.1} parent=47 // pred_check_branch
          %330 = sbr.rel (%p328) target = $region52
        $region51: #{resnet10_block_forward.1} parent=47 // pred_region
          %p331 = scmp.lt.s32.totalorder %s21, 1
          %s332 = scalar_select %p331, %s21, 1
          %s333 = smul.addr %s332, 2
          %s334 = smul.addr %s333, 8
          %s335 = scalar_lea.vmem %s0, %s334
        $region52: #{resnet10_block_forward.1} parent=47 // pred_fallthru
          _
      $region48: #{resnet10_block_forward.1} parent=5 // pred_fallthru
        _
      %p336 = scmp.le.s32.totalorder 1, %s21
      %p337 = scmp.lt.s32.totalorder %s21, 3
      %p338 = pnand %p336, %p337
      %p339 = pneg %p338
      // Predicated region
      $region53: #{resnet10_block_forward.1} parent=5 // pred_check
        _
      $region54: #{resnet10_block_forward.1} parent=5 // pred_check_branch
        %341 = sbr.rel (%p338) target = $region56
      $region55: #{resnet10_block_forward.1} parent=5 // pred_region
        %s342 = ssub.s32 %s21, 1
        // Predicated region
        $region57: #{resnet10_block_forward.1} parent=55 // pred_check
          %p343 = pneg %p68
        $region58: #{resnet10_block_forward.1} parent=55 // pred_check_branch
          %345 = sbr.rel (%p343) target = $region60
        $region59: #{resnet10_block_forward.1} parent=55 // pred_region
          %347 = dma.done [#allocation3], 24576
        $region60: #{resnet10_block_forward.1} parent=55 // pred_fallthru
          _
        // Predicated region
        $region61: #{resnet10_block_forward.1} parent=55 // pred_check
          %p348 = pneg %p89
        $region62: #{resnet10_block_forward.1} parent=55 // pred_check_branch
          %350 = sbr.rel (%p348) target = $region64
        $region63: #{resnet10_block_forward.1} parent=55 // pred_region
          %352 = dma.done [#allocation6], 512
        $region64: #{resnet10_block_forward.1} parent=55 // pred_fallthru
          _
        // Predicated region
        $region65: #{resnet10_block_forward.1} parent=55 // pred_check
          %p353 = pneg %p173
        $region66: #{resnet10_block_forward.1} parent=55 // pred_check_branch
          %355 = sbr.rel (%p353) target = $region68
        $region67: #{resnet10_block_forward.1} parent=55 // pred_region
          %357 = dma.done [#allocation6], 96
        $region68: #{resnet10_block_forward.1} parent=55 // pred_fallthru
          _
        // Predicated region
        $region69: #{resnet10_block_forward.1} parent=55 // pred_check
          %p358 = pneg %p194
        $region70: #{resnet10_block_forward.1} parent=55 // pred_check_branch
          %360 = sbr.rel (%p358) target = $region72
        $region71: #{resnet10_block_forward.1} parent=55 // pred_region
          %362 = dma.done [#allocation9], 384
        $region72: #{resnet10_block_forward.1} parent=55 // pred_fallthru
          _
        %p363 = scmp.lt.s32.totalorder %s26, 1
        %s364 = scalar_select %p363, %s26, 1
        %s365 = smul.addr %s364, 2
        %s366 = smul.addr %s365, 8
        %s367 = scalar_lea.vmem %s0, %s366
        %p368 = pneg %p47
        %p369 = pneg %p44
        %p370 = pneg %p68
        %p371 = pneg %p65
        %p372 = pneg %p89
        %p373 = pneg %p86
        %p374 = pneg %p110
        %p375 = pneg %p107
        %p376 = pneg %p131
        %p377 = pneg %p128
        %p378 = pneg %p152
        %p379 = pneg %p149
        %p380 = pneg %p173
        %p381 = pneg %p170
        %p382 = pneg %p194
        %p383 = pneg %p191
        %p384 = pneg %p215
        %p385 = pneg %p212
        %p386 = pneg %p241
        %p387 = pneg %p238
        %s388 = sand.u32 %s228, 1
        %s389 = scalar_lea.sflag [#allocation4], %s388
        %s390 = sand.u32 %s228, 1
        %s391 = scalar_lea.vmem [#allocation10], %s390
        %p392 = scmp.lt.s32.totalorder %s26, 1
        %s393 = scalar_select %p392, %s26, 1
        %s394 = smul.addr %s393, 2
        %s395 = smul.addr %s394, 8
        %s396 = scalar_lea.vmem %s0, %s395
        %v398 = vld [vmem:[%s396] sm:$0xff]
        %v399 = vld [vmem:[%s396 + $0x8] sm:$0xff]
        %v400 = vld [vmem:[#allocation2] sm:$0xf]
        %v401 = vld [vmem:[#allocation2 + $0x4] sm:$0xf]
        %v402 = vld [vmem:[#allocation2 + $0x8] sm:$0xf]
        %v403 = vld [vmem:[#allocation2 + $0xc] sm:$0xf]
        %v404 = vld [vmem:[#allocation2 + $0x10] sm:$0xf]
        %v405 = vld [vmem:[#allocation2 + $0x14] sm:$0xf]
        %v406 = vld [vmem:[#allocation2 + $0x18] sm:$0xf]
        %v407 = vld [vmem:[#allocation2 + $0x1c] sm:$0xf]
        %v408 = vld [vmem:[#allocation2 + $0x20] sm:$0xf]
        %v409 = vld [vmem:[#allocation2 + $0x24] sm:$0xf]
        %v410 = vld [vmem:[#allocation2 + $0x28] sm:$0xf]
        %v411 = vld [vmem:[#allocation2 + $0x2c] sm:$0xf]
        %v412 = vld [vmem:[#allocation2 + $0x30] sm:$0xf]
        %v413 = vld [vmem:[#allocation2 + $0x34] sm:$0xf]
        %v414 = vld [vmem:[#allocation2 + $0x38] sm:$0xf]
        %v415 = vld [vmem:[#allocation2 + $0x3c] sm:$0xf]
        %v416 = vld [vmem:[#allocation2 + $0x40] sm:$0xf]
        %v417 = vld [vmem:[#allocation2 + $0x44] sm:$0xf]
        %v418 = vld [vmem:[#allocation2 + $0x48] sm:$0xf]
        %v419 = vld [vmem:[#allocation2 + $0x4c] sm:$0xf]
        %v420 = vld [vmem:[#allocation2 + $0x50] sm:$0xf]
        %v421 = vld [vmem:[#allocation2 + $0x54] sm:$0xf]
        %v422 = vld [vmem:[#allocation2 + $0x58] sm:$0xf]
        %v423 = vld [vmem:[#allocation2 + $0x5c] sm:$0xf]
        %v424 = vld [vmem:[#allocation5] sm:$0x3]
        %vm427 = vcmask 1040384
        %v428 = vrot.slane %v398, 7
        %v429 = vrot.slane %v399, 7
        %v430 = vsel %vm427, %v428, %v429
        %v434 = vsel %vm427, 0.0, %v428
        %v435 = vsel %vm427, %v429, 0.0
        %v436 = vpack.c.bf16 %v430, %v434
        %v437 = vpack.c.bf16 %v435, %v435
        %vm438 = vsmask.f32 7424
        %v440 = vshrl.u32 %v436, 16
        %v442 = vshll.u32 %v436, 16
        %v444 = vrot.slane %v442, 1
        %v445 = vor.u32 %v440, %v444
        %v447 = vshll.u32 %v437, 16
        %v449 = vrot.slane %v447, 1
        %v450 = vsel %vm438, %v445, %v449
        %v459 = vunpack.c.l.b16 %v408
        %v460 = vunpack.c.l.b16 %v409
        %v461 = vunpack.c.l.b16 %v410
        %v462 = vunpack.c.l.b16 %v411
        %v463 = vunpack.c.l.b16 %v412
        %v464 = vunpack.c.l.b16 %v413
        %v465 = vunpack.c.l.b16 %v414
        %v466 = vunpack.c.l.b16 %v415
        %v467 = vpack.c.b16 %v460, %v459
        %v468 = vpack.c.b16 %v462, %v461
        %v469 = vpack.c.b16 %v464, %v463
        %v470 = vpack.c.b16 %v466, %v465
        %vm475 = vcmask 523264
        %v477 = vsel %vm475, %v450, 0
        %479 = vmatpush.bf16.msra.mxu0 0
        %480 = vmatpush.bf16.msra.mxu0 0
        %481 = vmatpush.bf16.msra.mxu0 0
        %482 = vmatpush.bf16.msra.mxu0 0
        %483 = vmatpush.bf16.msra.mxu0 %v470
        %484 = vmatpush.bf16.msra.mxu0 %v469
        %485 = vmatpush.bf16.msra.mxu0 %v468
        %486 = vmatpush.bf16.msra.mxu0 %v467
        %487 = vmatmul.bf16.gmra.mxu0 %v477
        %v488 = vpop.f32.mrf.mxu0
        %v489 = vadd.f32 0.0, %v488
        %v490 = vpop.f32.mrf.mxu0
        %v491 = vadd.f32 0.0, %v490
        %492 = vdwg.mxu0
        %v501 = vunpack.c.l.b16 %v400
        %v502 = vunpack.c.l.b16 %v401
        %v503 = vunpack.c.l.b16 %v402
        %v504 = vunpack.c.l.b16 %v403
        %v505 = vunpack.c.l.b16 %v404
        %v506 = vunpack.c.l.b16 %v405
        %v507 = vunpack.c.l.b16 %v406
        %v508 = vunpack.c.l.b16 %v407
        %v509 = vpack.c.b16 %v502, %v501
        %v510 = vpack.c.b16 %v504, %v503
        %v511 = vpack.c.b16 %v506, %v505
        %v512 = vpack.c.b16 %v508, %v507
        %v517 = vsel %vm475, %v436, 0
        %519 = vmatpush.bf16.msra.mxu0 0
        %520 = vmatpush.bf16.msra.mxu0 0
        %521 = vmatpush.bf16.msra.mxu0 0
        %522 = vmatpush.bf16.msra.mxu0 0
        %523 = vmatpush.bf16.msra.mxu0 %v512
        %524 = vmatpush.bf16.msra.mxu0 %v511
        %525 = vmatpush.bf16.msra.mxu0 %v510
        %526 = vmatpush.bf16.msra.mxu0 %v509
        %527 = vmatmul.bf16.gmra.mxu0 %v517
        %v528 = vpop.f32.mrf.mxu0
        %v529 = vadd.f32 %v489, %v528
        %v530 = vpop.f32.mrf.mxu0
        %v531 = vadd.f32 %v491, %v530
        %532 = vdwg.mxu0
        %vm535 = vcmask 1046528
        %v536 = vrot.slane %v436, 1
        %v537 = vrot.slane %v437, 1
        %v538 = vsel %vm535, %v536, %v537
        %v547 = vunpack.c.l.b16 %v416
        %v548 = vunpack.c.l.b16 %v417
        %v549 = vunpack.c.l.b16 %v418
        %v550 = vunpack.c.l.b16 %v419
        %v551 = vunpack.c.l.b16 %v420
        %v552 = vunpack.c.l.b16 %v421
        %v553 = vunpack.c.l.b16 %v422
        %v554 = vunpack.c.l.b16 %v423
        %v555 = vpack.c.b16 %v548, %v547
        %v556 = vpack.c.b16 %v550, %v549
        %v557 = vpack.c.b16 %v552, %v551
        %v558 = vpack.c.b16 %v554, %v553
        %v564 = vsel %vm475, %v538, 0
        %566 = vmatpush.bf16.msra.mxu0 0
        %567 = vmatpush.bf16.msra.mxu0 0
        %568 = vmatpush.bf16.msra.mxu0 0
        %569 = vmatpush.bf16.msra.mxu0 0
        %570 = vmatpush.bf16.msra.mxu0 %v558
        %571 = vmatpush.bf16.msra.mxu0 %v557
        %572 = vmatpush.bf16.msra.mxu0 %v556
        %573 = vmatpush.bf16.msra.mxu0 %v555
        %574 = vmatmul.bf16.gmra.mxu0 %v564
        %v575 = vpop.f32.mrf.mxu0
        %v576 = vadd.f32 0.0, %v575
        %v577 = vpop.f32.mrf.mxu0
        %v578 = vadd.f32 0.0, %v577
        %579 = vdwg.mxu0
        %v580 = vadd.f32 %v529, %v576
        %v581 = vadd.f32 %v531, %v578
        %v582 = vperm.slane %v424, 0
        %v583 = vmul.f32 %v580, %v582
        %v584 = vmul.f32 %v581, %v582
        %v585 = vperm.slane %v424, 1
        %v586 = vadd.f32 %v583, %v585
        %v587 = vadd.f32 %v584, %v585
        %v588 = vmax.f32 %v586, 0.0
        %v589 = vmax.f32 %v587, 0.0
        %s590 = scalar_lea.vmem [#allocation2], 96
        %v591 = vld [vmem:[%s590] sm:$0xf]
        %v592 = vld [vmem:[%s590 + $0x4] sm:$0xf]
        %v593 = vld [vmem:[%s590 + $0x8] sm:$0xf]
        %v594 = vld [vmem:[%s590 + $0xc] sm:$0xf]
        %v595 = vld [vmem:[%s590 + $0x10] sm:$0xf]
        %v596 = vld [vmem:[%s590 + $0x14] sm:$0xf]
        %v597 = vld [vmem:[%s590 + $0x18] sm:$0xf]
        %v598 = vld [vmem:[%s590 + $0x1c] sm:$0xf]
        %v599 = vld [vmem:[%s590 + $0x20] sm:$0xf]
        %v600 = vld [vmem:[%s590 + $0x24] sm:$0xf]
        %v601 = vld [vmem:[%s590 + $0x28] sm:$0xf]
        %v602 = vld [vmem:[%s590 + $0x2c] sm:$0xf]
        %v603 = vld [vmem:[%s590 + $0x30] sm:$0xf]
        %v604 = vld [vmem:[%s590 + $0x34] sm:$0xf]
        %v605 = vld [vmem:[%s590 + $0x38] sm:$0xf]
        %v606 = vld [vmem:[%s590 + $0x3c] sm:$0xf]
        %v607 = vld [vmem:[%s590 + $0x40] sm:$0xf]
        %v608 = vld [vmem:[%s590 + $0x44] sm:$0xf]
        %v609 = vld [vmem:[%s590 + $0x48] sm:$0xf]
        %v610 = vld [vmem:[%s590 + $0x4c] sm:$0xf]
        %v611 = vld [vmem:[%s590 + $0x50] sm:$0xf]
        %v612 = vld [vmem:[%s590 + $0x54] sm:$0xf]
        %v613 = vld [vmem:[%s590 + $0x58] sm:$0xf]
        %v614 = vld [vmem:[%s590 + $0x5c] sm:$0xf]
        %s615 = scalar_lea.vmem [#allocation5], 2
        %v616 = vld [vmem:[%s615] sm:$0x3]
        %v619 = vrot.slane %v588, 7
        %v620 = vrot.slane %v589, 7
        %v621 = vsel %vm427, %v619, %v620
        %v625 = vsel %vm427, 0.0, %v619
        %v626 = vsel %vm427, %v620, 0.0
        %v627 = vpack.c.bf16 %v621, %v625
        %v628 = vpack.c.bf16 %v626, %v626
        %v630 = vshrl.u32 %v627, 16
        %v632 = vshll.u32 %v627, 16
        %v634 = vrot.slane %v632, 1
        %v635 = vor.u32 %v630, %v634
        %v637 = vshll.u32 %v628, 16
        %v639 = vrot.slane %v637, 1
        %v640 = vsel %vm438, %v635, %v639
        %v649 = vunpack.c.l.b16 %v599
        %v650 = vunpack.c.l.b16 %v600
        %v651 = vunpack.c.l.b16 %v601
        %v652 = vunpack.c.l.b16 %v602
        %v653 = vunpack.c.l.b16 %v603
        %v654 = vunpack.c.l.b16 %v604
        %v655 = vunpack.c.l.b16 %v605
        %v656 = vunpack.c.l.b16 %v606
        %v657 = vpack.c.b16 %v650, %v649
        %v658 = vpack.c.b16 %v652, %v651
        %v659 = vpack.c.b16 %v654, %v653
        %v660 = vpack.c.b16 %v656, %v655
        %v666 = vsel %vm475, %v640, 0
        %668 = vmatpush.bf16.msra.mxu0 0
        %669 = vmatpush.bf16.msra.mxu0 0
        %670 = vmatpush.bf16.msra.mxu0 0
        %671 = vmatpush.bf16.msra.mxu0 0
        %672 = vmatpush.bf16.msra.mxu0 %v660
        %673 = vmatpush.bf16.msra.mxu0 %v659
        %674 = vmatpush.bf16.msra.mxu0 %v658
        %675 = vmatpush.bf16.msra.mxu0 %v657
        %676 = vmatmul.bf16.gmra.mxu0 %v666
        %v677 = vpop.f32.mrf.mxu0
        %v678 = vadd.f32 0.0, %v677
        %v679 = vpop.f32.mrf.mxu0
        %v680 = vadd.f32 0.0, %v679
        %681 = vdwg.mxu0
        %v690 = vunpack.c.l.b16 %v591
        %v691 = vunpack.c.l.b16 %v592
        %v692 = vunpack.c.l.b16 %v593
        %v693 = vunpack.c.l.b16 %v594
        %v694 = vunpack.c.l.b16 %v595
        %v695 = vunpack.c.l.b16 %v596
        %v696 = vunpack.c.l.b16 %v597
        %v697 = vunpack.c.l.b16 %v598
        %v698 = vpack.c.b16 %v691, %v690
        %v699 = vpack.c.b16 %v693, %v692
        %v700 = vpack.c.b16 %v695, %v694
        %v701 = vpack.c.b16 %v697, %v696
        %v706 = vsel %vm475, %v627, 0
        %708 = vmatpush.bf16.msra.mxu0 0
        %709 = vmatpush.bf16.msra.mxu0 0
        %710 = vmatpush.bf16.msra.mxu0 0
        %711 = vmatpush.bf16.msra.mxu0 0
        %712 = vmatpush.bf16.msra.mxu0 %v701
        %713 = vmatpush.bf16.msra.mxu0 %v700
        %714 = vmatpush.bf16.msra.mxu0 %v699
        %715 = vmatpush.bf16.msra.mxu0 %v698
        %716 = vmatmul.bf16.gmra.mxu0 %v706
        %v717 = vpop.f32.mrf.mxu0
        %v718 = vadd.f32 %v678, %v717
        %v719 = vpop.f32.mrf.mxu0
        %v720 = vadd.f32 %v680, %v719
        %721 = vdwg.mxu0
        %v724 = vrot.slane %v627, 1
        %v725 = vrot.slane %v628, 1
        %v726 = vsel %vm535, %v724, %v725
        %v735 = vunpack.c.l.b16 %v607
        %v736 = vunpack.c.l.b16 %v608
        %v737 = vunpack.c.l.b16 %v609
        %v738 = vunpack.c.l.b16 %v610
        %v739 = vunpack.c.l.b16 %v611
        %v740 = vunpack.c.l.b16 %v612
        %v741 = vunpack.c.l.b16 %v613
        %v742 = vunpack.c.l.b16 %v614
        %v743 = vpack.c.b16 %v736, %v735
        %v744 = vpack.c.b16 %v738, %v737
        %v745 = vpack.c.b16 %v740, %v739
        %v746 = vpack.c.b16 %v742, %v741
        %v752 = vsel %vm475, %v726, 0
        %754 = vmatpush.bf16.msra.mxu0 0
        %755 = vmatpush.bf16.msra.mxu0 0
        %756 = vmatpush.bf16.msra.mxu0 0
        %757 = vmatpush.bf16.msra.mxu0 0
        %758 = vmatpush.bf16.msra.mxu0 %v746
        %759 = vmatpush.bf16.msra.mxu0 %v745
        %760 = vmatpush.bf16.msra.mxu0 %v744
        %761 = vmatpush.bf16.msra.mxu0 %v743
        %762 = vmatmul.bf16.gmra.mxu0 %v752
        %v763 = vpop.f32.mrf.mxu0
        %v764 = vadd.f32 0.0, %v763
        %v765 = vpop.f32.mrf.mxu0
        %v766 = vadd.f32 0.0, %v765
        %767 = vdwg.mxu0
        %v768 = vadd.f32 %v718, %v764
        %v769 = vadd.f32 %v720, %v766
        %v770 = vperm.slane %v616, 0
        %v771 = vmul.f32 %v768, %v770
        %v772 = vmul.f32 %v769, %v770
        %v773 = vperm.slane %v616, 1
        %v774 = vadd.f32 %v771, %v773
        %v775 = vadd.f32 %v772, %v773
        %v776 = vadd.f32 %v774, %v398
        %v777 = vadd.f32 %v775, %v399
        %v778 = vmax.f32 %v776, 0.0
        %v779 = vmax.f32 %v777, 0.0
        %s780 = scalar_lea.vmem [#allocation2], 192
        %v781 = vld [vmem:[%s780] sm:$0xf]
        %v782 = vld [vmem:[%s780 + $0x4] sm:$0xf]
        %v783 = vld [vmem:[%s780 + $0x8] sm:$0xf]
        %v784 = vld [vmem:[%s780 + $0xc] sm:$0xf]
        %v785 = vld [vmem:[%s780 + $0x10] sm:$0xf]
        %v786 = vld [vmem:[%s780 + $0x14] sm:$0xf]
        %v787 = vld [vmem:[%s780 + $0x18] sm:$0xf]
        %v788 = vld [vmem:[%s780 + $0x1c] sm:$0xf]
        %v789 = vld [vmem:[%s780 + $0x20] sm:$0xf]
        %v790 = vld [vmem:[%s780 + $0x24] sm:$0xf]
        %v791 = vld [vmem:[%s780 + $0x28] sm:$0xf]
        %v792 = vld [vmem:[%s780 + $0x2c] sm:$0xf]
        %v793 = vld [vmem:[%s780 + $0x30] sm:$0xf]
        %v794 = vld [vmem:[%s780 + $0x34] sm:$0xf]
        %v795 = vld [vmem:[%s780 + $0x38] sm:$0xf]
        %v796 = vld [vmem:[%s780 + $0x3c] sm:$0xf]
        %v797 = vld [vmem:[%s780 + $0x40] sm:$0xf]
        %v798 = vld [vmem:[%s780 + $0x44] sm:$0xf]
        %v799 = vld [vmem:[%s780 + $0x48] sm:$0xf]
        %v800 = vld [vmem:[%s780 + $0x4c] sm:$0xf]
        %v801 = vld [vmem:[%s780 + $0x50] sm:$0xf]
        %v802 = vld [vmem:[%s780 + $0x54] sm:$0xf]
        %v803 = vld [vmem:[%s780 + $0x58] sm:$0xf]
        %v804 = vld [vmem:[%s780 + $0x5c] sm:$0xf]
        %s805 = scalar_lea.vmem [#allocation5], 4
        %v806 = vld [vmem:[%s805] sm:$0x3]
        %v809 = vrot.slane %v778, 7
        %v810 = vrot.slane %v779, 7
        %v811 = vsel %vm427, %v809, %v810
        %v815 = vsel %vm427, 0.0, %v809
        %v816 = vsel %vm427, %v810, 0.0
        %v817 = vpack.c.bf16 %v811, %v815
        %v818 = vpack.c.bf16 %v816, %v816
        %v820 = vshrl.u32 %v817, 16
        %v822 = vshll.u32 %v817, 16
        %v824 = vrot.slane %v822, 1
        %v825 = vor.u32 %v820, %v824
        %v827 = vshll.u32 %v818, 16
        %v829 = vrot.slane %v827, 1
        %v830 = vsel %vm438, %v825, %v829
        %v839 = vunpack.c.l.b16 %v789
        %v840 = vunpack.c.l.b16 %v790
        %v841 = vunpack.c.l.b16 %v791
        %v842 = vunpack.c.l.b16 %v792
        %v843 = vunpack.c.l.b16 %v793
        %v844 = vunpack.c.l.b16 %v794
        %v845 = vunpack.c.l.b16 %v795
        %v846 = vunpack.c.l.b16 %v796
        %v847 = vpack.c.b16 %v840, %v839
        %v848 = vpack.c.b16 %v842, %v841
        %v849 = vpack.c.b16 %v844, %v843
        %v850 = vpack.c.b16 %v846, %v845
        %v856 = vsel %vm475, %v830, 0
        %858 = vmatpush.bf16.msra.mxu0 0
        %859 = vmatpush.bf16.msra.mxu0 0
        %860 = vmatpush.bf16.msra.mxu0 0
        %861 = vmatpush.bf16.msra.mxu0 0
        %862 = vmatpush.bf16.msra.mxu0 %v850
        %863 = vmatpush.bf16.msra.mxu0 %v849
        %864 = vmatpush.bf16.msra.mxu0 %v848
        %865 = vmatpush.bf16.msra.mxu0 %v847
        %866 = vmatmul.bf16.gmra.mxu0 %v856
        %v867 = vpop.f32.mrf.mxu0
        %v868 = vadd.f32 0.0, %v867
        %v869 = vpop.f32.mrf.mxu0
        %v870 = vadd.f32 0.0, %v869
        %871 = vdwg.mxu0
        %v880 = vunpack.c.l.b16 %v781
        %v881 = vunpack.c.l.b16 %v782
        %v882 = vunpack.c.l.b16 %v783
        %v883 = vunpack.c.l.b16 %v784
        %v884 = vunpack.c.l.b16 %v785
        %v885 = vunpack.c.l.b16 %v786
        %v886 = vunpack.c.l.b16 %v787
        %v887 = vunpack.c.l.b16 %v788
        %v888 = vpack.c.b16 %v881, %v880
        %v889 = vpack.c.b16 %v883, %v882
        %v890 = vpack.c.b16 %v885, %v884
        %v891 = vpack.c.b16 %v887, %v886
        %v896 = vsel %vm475, %v817, 0
        %898 = vmatpush.bf16.msra.mxu0 0
        %899 = vmatpush.bf16.msra.mxu0 0
        %900 = vmatpush.bf16.msra.mxu0 0
        %901 = vmatpush.bf16.msra.mxu0 0
        %902 = vmatpush.bf16.msra.mxu0 %v891
        %903 = vmatpush.bf16.msra.mxu0 %v890
        %904 = vmatpush.bf16.msra.mxu0 %v889
        %905 = vmatpush.bf16.msra.mxu0 %v888
        %906 = vmatmul.bf16.gmra.mxu0 %v896
        %v907 = vpop.f32.mrf.mxu0
        %v908 = vadd.f32 %v868, %v907
        %v909 = vpop.f32.mrf.mxu0
        %v910 = vadd.f32 %v870, %v909
        %911 = vdwg.mxu0
        %v914 = vrot.slane %v817, 1
        %v915 = vrot.slane %v818, 1
        %v916 = vsel %vm535, %v914, %v915
        %v925 = vunpack.c.l.b16 %v797
        %v926 = vunpack.c.l.b16 %v798
        %v927 = vunpack.c.l.b16 %v799
        %v928 = vunpack.c.l.b16 %v800
        %v929 = vunpack.c.l.b16 %v801
        %v930 = vunpack.c.l.b16 %v802
        %v931 = vunpack.c.l.b16 %v803
        %v932 = vunpack.c.l.b16 %v804
        %v933 = vpack.c.b16 %v926, %v925
        %v934 = vpack.c.b16 %v928, %v927
        %v935 = vpack.c.b16 %v930, %v929
        %v936 = vpack.c.b16 %v932, %v931
        %v942 = vsel %vm475, %v916, 0
        %944 = vmatpush.bf16.msra.mxu0 0
        %945 = vmatpush.bf16.msra.mxu0 0
        %946 = vmatpush.bf16.msra.mxu0 0
        %947 = vmatpush.bf16.msra.mxu0 0
        %948 = vmatpush.bf16.msra.mxu0 %v936
        %949 = vmatpush.bf16.msra.mxu0 %v935
        %950 = vmatpush.bf16.msra.mxu0 %v934
        %951 = vmatpush.bf16.msra.mxu0 %v933
        %952 = vmatmul.bf16.gmra.mxu0 %v942
        %v953 = vpop.f32.mrf.mxu0
        %v954 = vadd.f32 0.0, %v953
        %v955 = vpop.f32.mrf.mxu0
        %v956 = vadd.f32 0.0, %v955
        %957 = vdwg.mxu0
        %v958 = vadd.f32 %v908, %v954
        %v959 = vadd.f32 %v910, %v956
        %v960 = vperm.slane %v806, 0
        %v961 = vmul.f32 %v958, %v960
        %v962 = vmul.f32 %v959, %v960
        %v963 = vperm.slane %v806, 1
        %v964 = vadd.f32 %v961, %v963
        %v965 = vadd.f32 %v962, %v963
        %v966 = vmax.f32 %v964, 0.0
        %v967 = vmax.f32 %v965, 0.0
        %s968 = scalar_lea.vmem [#allocation2], 288
        %v969 = vld [vmem:[%s968] sm:$0xf]
        %v970 = vld [vmem:[%s968 + $0x4] sm:$0xf]
        %v971 = vld [vmem:[%s968 + $0x8] sm:$0xf]
        %v972 = vld [vmem:[%s968 + $0xc] sm:$0xf]
        %v973 = vld [vmem:[%s968 + $0x10] sm:$0xf]
        %v974 = vld [vmem:[%s968 + $0x14] sm:$0xf]
        %v975 = vld [vmem:[%s968 + $0x18] sm:$0xf]
        %v976 = vld [vmem:[%s968 + $0x1c] sm:$0xf]
        %v977 = vld [vmem:[%s968 + $0x20] sm:$0xf]
        %v978 = vld [vmem:[%s968 + $0x24] sm:$0xf]
        %v979 = vld [vmem:[%s968 + $0x28] sm:$0xf]
        %v980 = vld [vmem:[%s968 + $0x2c] sm:$0xf]
        %v981 = vld [vmem:[%s968 + $0x30] sm:$0xf]
        %v982 = vld [vmem:[%s968 + $0x34] sm:$0xf]
        %v983 = vld [vmem:[%s968 + $0x38] sm:$0xf]
        %v984 = vld [vmem:[%s968 + $0x3c] sm:$0xf]
        %v985 = vld [vmem:[%s968 + $0x40] sm:$0xf]
        %v986 = vld [vmem:[%s968 + $0x44] sm:$0xf]
        %v987 = vld [vmem:[%s968 + $0x48] sm:$0xf]
        %v988 = vld [vmem:[%s968 + $0x4c] sm:$0xf]
        %v989 = vld [vmem:[%s968 + $0x50] sm:$0xf]
        %v990 = vld [vmem:[%s968 + $0x54] sm:$0xf]
        %v991 = vld [vmem:[%s968 + $0x58] sm:$0xf]
        %v992 = vld [vmem:[%s968 + $0x5c] sm:$0xf]
        %s993 = scalar_lea.vmem [#allocation5], 6
        %v994 = vld [vmem:[%s993] sm:$0x3]
        %v997 = vrot.slane %v966, 7
        %v998 = vrot.slane %v967, 7
        %v999 = vsel %vm427, %v997, %v998
        %v1003 = vsel %vm427, 0.0, %v997
        %v1004 = vsel %vm427, %v998, 0.0
        %v1005 = vpack.c.bf16 %v999, %v1003
        %v1006 = vpack.c.bf16 %v1004, %v1004
        %v1008 = vshrl.u32 %v1005, 16
        %v1010 = vshll.u32 %v1005, 16
        %v1012 = vrot.slane %v1010, 1
        %v1013 = vor.u32 %v1008, %v1012
        %v1015 = vshll.u32 %v1006, 16
        %v1017 = vrot.slane %v1015, 1
        %v1018 = vsel %vm438, %v1013, %v1017
        %v1027 = vunpack.c.l.b16 %v977
        %v1028 = vunpack.c.l.b16 %v978
        %v1029 = vunpack.c.l.b16 %v979
        %v1030 = vunpack.c.l.b16 %v980
        %v1031 = vunpack.c.l.b16 %v981
        %v1032 = vunpack.c.l.b16 %v982
        %v1033 = vunpack.c.l.b16 %v983
        %v1034 = vunpack.c.l.b16 %v984
        %v1035 = vpack.c.b16 %v1028, %v1027
        %v1036 = vpack.c.b16 %v1030, %v1029
        %v1037 = vpack.c.b16 %v1032, %v1031
        %v1038 = vpack.c.b16 %v1034, %v1033
        %v1044 = vsel %vm475, %v1018, 0
        %1046 = vmatpush.bf16.msra.mxu0 0
        %1047 = vmatpush.bf16.msra.mxu0 0
        %1048 = vmatpush.bf16.msra.mxu0 0
        %1049 = vmatpush.bf16.msra.mxu0 0
        %1050 = vmatpush.bf16.msra.mxu0 %v1038
        %1051 = vmatpush.bf16.msra.mxu0 %v1037
        %1052 = vmatpush.bf16.msra.mxu0 %v1036
        %1053 = vmatpush.bf16.msra.mxu0 %v1035
        %1054 = vmatmul.bf16.gmra.mxu0 %v1044
        %v1055 = vpop.f32.mrf.mxu0
        %v1056 = vadd.f32 0.0, %v1055
        %v1057 = vpop.f32.mrf.mxu0
        %v1058 = vadd.f32 0.0, %v1057
        %1059 = vdwg.mxu0
        %v1068 = vunpack.c.l.b16 %v969
        %v1069 = vunpack.c.l.b16 %v970
        %v1070 = vunpack.c.l.b16 %v971
        %v1071 = vunpack.c.l.b16 %v972
        %v1072 = vunpack.c.l.b16 %v973
        %v1073 = vunpack.c.l.b16 %v974
        %v1074 = vunpack.c.l.b16 %v975
        %v1075 = vunpack.c.l.b16 %v976
        %v1076 = vpack.c.b16 %v1069, %v1068
        %v1077 = vpack.c.b16 %v1071, %v1070
        %v1078 = vpack.c.b16 %v1073, %v1072
        %v1079 = vpack.c.b16 %v1075, %v1074
        %v1084 = vsel %vm475, %v1005, 0
        %1086 = vmatpush.bf16.msra.mxu0 0
        %1087 = vmatpush.bf16.msra.mxu0 0
        %1088 = vmatpush.bf16.msra.mxu0 0
        %1089 = vmatpush.bf16.msra.mxu0 0
        %1090 = vmatpush.bf16.msra.mxu0 %v1079
        %1091 = vmatpush.bf16.msra.mxu0 %v1078
        %1092 = vmatpush.bf16.msra.mxu0 %v1077
        %1093 = vmatpush.bf16.msra.mxu0 %v1076
        %1094 = vmatmul.bf16.gmra.mxu0 %v1084
        %v1095 = vpop.f32.mrf.mxu0
        %v1096 = vadd.f32 %v1056, %v1095
        %v1097 = vpop.f32.mrf.mxu0
        %v1098 = vadd.f32 %v1058, %v1097
        %1099 = vdwg.mxu0
        %v1102 = vrot.slane %v1005, 1
        %v1103 = vrot.slane %v1006, 1
        %v1104 = vsel %vm535, %v1102, %v1103
        %v1113 = vunpack.c.l.b16 %v985
        %v1114 = vunpack.c.l.b16 %v986
        %v1115 = vunpack.c.l.b16 %v987
        %v1116 = vunpack.c.l.b16 %v988
        %v1117 = vunpack.c.l.b16 %v989
        %v1118 = vunpack.c.l.b16 %v990
        %v1119 = vunpack.c.l.b16 %v991
        %v1120 = vunpack.c.l.b16 %v992
        %v1121 = vpack.c.b16 %v1114, %v1113
        %v1122 = vpack.c.b16 %v1116, %v1115
        %v1123 = vpack.c.b16 %v1118, %v1117
        %v1124 = vpack.c.b16 %v1120, %v1119
        %v1130 = vsel %vm475, %v1104, 0
        %1132 = vmatpush.bf16.msra.mxu0 0
        %1133 = vmatpush.bf16.msra.mxu0 0
        %1134 = vmatpush.bf16.msra.mxu0 0
        %1135 = vmatpush.bf16.msra.mxu0 0
        %1136 = vmatpush.bf16.msra.mxu0 %v1124
        %1137 = vmatpush.bf16.msra.mxu0 %v1123
        %1138 = vmatpush.bf16.msra.mxu0 %v1122
        %1139 = vmatpush.bf16.msra.mxu0 %v1121
        %1140 = vmatmul.bf16.gmra.mxu0 %v1130
        %v1141 = vpop.f32.mrf.mxu0
        %v1142 = vadd.f32 0.0, %v1141
        %v1143 = vpop.f32.mrf.mxu0
        %v1144 = vadd.f32 0.0, %v1143
        %1145 = vdwg.mxu0
        %v1146 = vadd.f32 %v1096, %v1142
        %v1147 = vadd.f32 %v1098, %v1144
        %v1148 = vperm.slane %v994, 0
        %v1149 = vmul.f32 %v1146, %v1148
        %v1150 = vmul.f32 %v1147, %v1148
        %v1151 = vperm.slane %v994, 1
        %v1152 = vadd.f32 %v1149, %v1151
        %v1153 = vadd.f32 %v1150, %v1151
        %v1154 = vadd.f32 %v1152, %v778
        %v1155 = vadd.f32 %v1153, %v779
        %v1156 = vmax.f32 %v1154, 0.0
        %v1157 = vmax.f32 %v1155, 0.0
        %s1158 = scalar_lea.vmem [#allocation2], 384
        %v1159 = vld [vmem:[%s1158] sm:$0xf]
        %v1160 = vld [vmem:[%s1158 + $0x4] sm:$0xf]
        %v1161 = vld [vmem:[%s1158 + $0x8] sm:$0xf]
        %v1162 = vld [vmem:[%s1158 + $0xc] sm:$0xf]
        %v1163 = vld [vmem:[%s1158 + $0x10] sm:$0xf]
        %v1164 = vld [vmem:[%s1158 + $0x14] sm:$0xf]
        %v1165 = vld [vmem:[%s1158 + $0x18] sm:$0xf]
        %v1166 = vld [vmem:[%s1158 + $0x1c] sm:$0xf]
        %v1167 = vld [vmem:[%s1158 + $0x20] sm:$0xf]
        %v1168 = vld [vmem:[%s1158 + $0x24] sm:$0xf]
        %v1169 = vld [vmem:[%s1158 + $0x28] sm:$0xf]
        %v1170 = vld [vmem:[%s1158 + $0x2c] sm:$0xf]
        %v1171 = vld [vmem:[%s1158 + $0x30] sm:$0xf]
        %v1172 = vld [vmem:[%s1158 + $0x34] sm:$0xf]
        %v1173 = vld [vmem:[%s1158 + $0x38] sm:$0xf]
        %v1174 = vld [vmem:[%s1158 + $0x3c] sm:$0xf]
        %v1175 = vld [vmem:[%s1158 + $0x40] sm:$0xf]
        %v1176 = vld [vmem:[%s1158 + $0x44] sm:$0xf]
        %v1177 = vld [vmem:[%s1158 + $0x48] sm:$0xf]
        %v1178 = vld [vmem:[%s1158 + $0x4c] sm:$0xf]
        %v1179 = vld [vmem:[%s1158 + $0x50] sm:$0xf]
        %v1180 = vld [vmem:[%s1158 + $0x54] sm:$0xf]
        %v1181 = vld [vmem:[%s1158 + $0x58] sm:$0xf]
        %v1182 = vld [vmem:[%s1158 + $0x5c] sm:$0xf]
        %s1183 = scalar_lea.vmem [#allocation5], 8
        %v1184 = vld [vmem:[%s1183] sm:$0x3]
        %v1187 = vrot.slane %v1156, 7
        %v1188 = vrot.slane %v1157, 7
        %v1189 = vsel %vm427, %v1187, %v1188
        %v1193 = vsel %vm427, 0.0, %v1187
        %v1194 = vsel %vm427, %v1188, 0.0
        %v1195 = vpack.c.bf16 %v1189, %v1193
        %v1196 = vpack.c.bf16 %v1194, %v1194
        %v1198 = vshrl.u32 %v1195, 16
        %v1200 = vshll.u32 %v1195, 16
        %v1202 = vrot.slane %v1200, 1
        %v1203 = vor.u32 %v1198, %v1202
        %v1205 = vshll.u32 %v1196, 16
        %v1207 = vrot.slane %v1205, 1
        %v1208 = vsel %vm438, %v1203, %v1207
        %v1217 = vunpack.c.l.b16 %v1167
        %v1218 = vunpack.c.l.b16 %v1168
        %v1219 = vunpack.c.l.b16 %v1169
        %v1220 = vunpack.c.l.b16 %v1170
        %v1221 = vunpack.c.l.b16 %v1171
        %v1222 = vunpack.c.l.b16 %v1172
        %v1223 = vunpack.c.l.b16 %v1173
        %v1224 = vunpack.c.l.b16 %v1174
        %v1225 = vpack.c.b16 %v1218, %v1217
        %v1226 = vpack.c.b16 %v1220, %v1219
        %v1227 = vpack.c.b16 %v1222, %v1221
        %v1228 = vpack.c.b16 %v1224, %v1223
        %v1234 = vsel %vm475, %v1208, 0
        %1236 = vmatpush.bf16.msra.mxu0 0
        %1237 = vmatpush.bf16.msra.mxu0 0
        %1238 = vmatpush.bf16.msra.mxu0 0
        %1239 = vmatpush.bf16.msra.mxu0 0
        %1240 = vmatpush.bf16.msra.mxu0 %v1228
        %1241 = vmatpush.bf16.msra.mxu0 %v1227
        %1242 = vmatpush.bf16.msra.mxu0 %v1226
        %1243 = vmatpush.bf16.msra.mxu0 %v1225
        %1244 = vmatmul.bf16.gmra.mxu0 %v1234
        %v1245 = vpop.f32.mrf.mxu0
        %v1246 = vadd.f32 0.0, %v1245
        %v1247 = vpop.f32.mrf.mxu0
        %v1248 = vadd.f32 0.0, %v1247
        %1249 = vdwg.mxu0
        %v1258 = vunpack.c.l.b16 %v1159
        %v1259 = vunpack.c.l.b16 %v1160
        %v1260 = vunpack.c.l.b16 %v1161
        %v1261 = vunpack.c.l.b16 %v1162
        %v1262 = vunpack.c.l.b16 %v1163
        %v1263 = vunpack.c.l.b16 %v1164
        %v1264 = vunpack.c.l.b16 %v1165
        %v1265 = vunpack.c.l.b16 %v1166
        %v1266 = vpack.c.b16 %v1259, %v1258
        %v1267 = vpack.c.b16 %v1261, %v1260
        %v1268 = vpack.c.b16 %v1263, %v1262
        %v1269 = vpack.c.b16 %v1265, %v1264
        %v1274 = vsel %vm475, %v1195, 0
        %1276 = vmatpush.bf16.msra.mxu0 0
        %1277 = vmatpush.bf16.msra.mxu0 0
        %1278 = vmatpush.bf16.msra.mxu0 0
        %1279 = vmatpush.bf16.msra.mxu0 0
        %1280 = vmatpush.bf16.msra.mxu0 %v1269
        %1281 = vmatpush.bf16.msra.mxu0 %v1268
        %1282 = vmatpush.bf16.msra.mxu0 %v1267
        %1283 = vmatpush.bf16.msra.mxu0 %v1266
        %1284 = vmatmul.bf16.gmra.mxu0 %v1274
        %v1285 = vpop.f32.mrf.mxu0
        %v1286 = vadd.f32 %v1246, %v1285
        %v1287 = vpop.f32.mrf.mxu0
        %v1288 = vadd.f32 %v1248, %v1287
        %1289 = vdwg.mxu0
        %v1292 = vrot.slane %v1195, 1
        %v1293 = vrot.slane %v1196, 1
        %v1294 = vsel %vm535, %v1292, %v1293
        %v1303 = vunpack.c.l.b16 %v1175
        %v1304 = vunpack.c.l.b16 %v1176
        %v1305 = vunpack.c.l.b16 %v1177
        %v1306 = vunpack.c.l.b16 %v1178
        %v1307 = vunpack.c.l.b16 %v1179
        %v1308 = vunpack.c.l.b16 %v1180
        %v1309 = vunpack.c.l.b16 %v1181
        %v1310 = vunpack.c.l.b16 %v1182
        %v1311 = vpack.c.b16 %v1304, %v1303
        %v1312 = vpack.c.b16 %v1306, %v1305
        %v1313 = vpack.c.b16 %v1308, %v1307
        %v1314 = vpack.c.b16 %v1310, %v1309
        %v1320 = vsel %vm475, %v1294, 0
        %1322 = vmatpush.bf16.msra.mxu0 0
        %1323 = vmatpush.bf16.msra.mxu0 0
        %1324 = vmatpush.bf16.msra.mxu0 0
        %1325 = vmatpush.bf16.msra.mxu0 0
        %1326 = vmatpush.bf16.msra.mxu0 %v1314
        %1327 = vmatpush.bf16.msra.mxu0 %v1313
        %1328 = vmatpush.bf16.msra.mxu0 %v1312
        %1329 = vmatpush.bf16.msra.mxu0 %v1311
        %1330 = vmatmul.bf16.gmra.mxu0 %v1320
        %v1331 = vpop.f32.mrf.mxu0
        %v1332 = vadd.f32 0.0, %v1331
        %v1333 = vpop.f32.mrf.mxu0
        %v1334 = vadd.f32 0.0, %v1333
        %1335 = vdwg.mxu0
        %v1336 = vadd.f32 %v1286, %v1332
        %v1337 = vadd.f32 %v1288, %v1334
        %v1338 = vperm.slane %v1184, 0
        %v1339 = vmul.f32 %v1336, %v1338
        %v1340 = vmul.f32 %v1337, %v1338
        %v1341 = vperm.slane %v1184, 1
        %v1342 = vadd.f32 %v1339, %v1341
        %v1343 = vadd.f32 %v1340, %v1341
        %v1344 = vmax.f32 %v1342, 0.0
        %v1345 = vmax.f32 %v1343, 0.0
        %s1346 = scalar_lea.vmem [#allocation2], 480
        %v1347 = vld [vmem:[%s1346] sm:$0xf]
        %v1348 = vld [vmem:[%s1346 + $0x4] sm:$0xf]
        %v1349 = vld [vmem:[%s1346 + $0x8] sm:$0xf]
        %v1350 = vld [vmem:[%s1346 + $0xc] sm:$0xf]
        %v1351 = vld [vmem:[%s1346 + $0x10] sm:$0xf]
        %v1352 = vld [vmem:[%s1346 + $0x14] sm:$0xf]
        %v1353 = vld [vmem:[%s1346 + $0x18] sm:$0xf]
        %v1354 = vld [vmem:[%s1346 + $0x1c] sm:$0xf]
        %v1355 = vld [vmem:[%s1346 + $0x20] sm:$0xf]
        %v1356 = vld [vmem:[%s1346 + $0x24] sm:$0xf]
        %v1357 = vld [vmem:[%s1346 + $0x28] sm:$0xf]
        %v1358 = vld [vmem:[%s1346 + $0x2c] sm:$0xf]
        %v1359 = vld [vmem:[%s1346 + $0x30] sm:$0xf]
        %v1360 = vld [vmem:[%s1346 + $0x34] sm:$0xf]
        %v1361 = vld [vmem:[%s1346 + $0x38] sm:$0xf]
        %v1362 = vld [vmem:[%s1346 + $0x3c] sm:$0xf]
        %v1363 = vld [vmem:[%s1346 + $0x40] sm:$0xf]
        %v1364 = vld [vmem:[%s1346 + $0x44] sm:$0xf]
        %v1365 = vld [vmem:[%s1346 + $0x48] sm:$0xf]
        %v1366 = vld [vmem:[%s1346 + $0x4c] sm:$0xf]
        %v1367 = vld [vmem:[%s1346 + $0x50] sm:$0xf]
        %v1368 = vld [vmem:[%s1346 + $0x54] sm:$0xf]
        %v1369 = vld [vmem:[%s1346 + $0x58] sm:$0xf]
        %v1370 = vld [vmem:[%s1346 + $0x5c] sm:$0xf]
        %s1371 = scalar_lea.vmem [#allocation5], 10
        %v1372 = vld [vmem:[%s1371] sm:$0x3]
        %v1375 = vrot.slane %v1344, 7
        %v1376 = vrot.slane %v1345, 7
        %v1377 = vsel %vm427, %v1375, %v1376
        %v1381 = vsel %vm427, 0.0, %v1375
        %v1382 = vsel %vm427, %v1376, 0.0
        %v1383 = vpack.c.bf16 %v1377, %v1381
        %v1384 = vpack.c.bf16 %v1382, %v1382
        %v1386 = vshrl.u32 %v1383, 16
        %v1388 = vshll.u32 %v1383, 16
        %v1390 = vrot.slane %v1388, 1
        %v1391 = vor.u32 %v1386, %v1390
        %v1393 = vshll.u32 %v1384, 16
        %v1395 = vrot.slane %v1393, 1
        %v1396 = vsel %vm438, %v1391, %v1395
        %v1405 = vunpack.c.l.b16 %v1355
        %v1406 = vunpack.c.l.b16 %v1356
        %v1407 = vunpack.c.l.b16 %v1357
        %v1408 = vunpack.c.l.b16 %v1358
        %v1409 = vunpack.c.l.b16 %v1359
        %v1410 = vunpack.c.l.b16 %v1360
        %v1411 = vunpack.c.l.b16 %v1361
        %v1412 = vunpack.c.l.b16 %v1362
        %v1413 = vpack.c.b16 %v1406, %v1405
        %v1414 = vpack.c.b16 %v1408, %v1407
        %v1415 = vpack.c.b16 %v1410, %v1409
        %v1416 = vpack.c.b16 %v1412, %v1411
        %v1422 = vsel %vm475, %v1396, 0
        %1424 = vmatpush.bf16.msra.mxu0 0
        %1425 = vmatpush.bf16.msra.mxu0 0
        %1426 = vmatpush.bf16.msra.mxu0 0
        %1427 = vmatpush.bf16.msra.mxu0 0
        %1428 = vmatpush.bf16.msra.mxu0 %v1416
        %1429 = vmatpush.bf16.msra.mxu0 %v1415
        %1430 = vmatpush.bf16.msra.mxu0 %v1414
        %1431 = vmatpush.bf16.msra.mxu0 %v1413
        %1432 = vmatmul.bf16.gmra.mxu0 %v1422
        %v1433 = vpop.f32.mrf.mxu0
        %v1434 = vadd.f32 0.0, %v1433
        %v1435 = vpop.f32.mrf.mxu0
        %v1436 = vadd.f32 0.0, %v1435
        %1437 = vdwg.mxu0
        %v1446 = vunpack.c.l.b16 %v1347
        %v1447 = vunpack.c.l.b16 %v1348
        %v1448 = vunpack.c.l.b16 %v1349
        %v1449 = vunpack.c.l.b16 %v1350
        %v1450 = vunpack.c.l.b16 %v1351
        %v1451 = vunpack.c.l.b16 %v1352
        %v1452 = vunpack.c.l.b16 %v1353
        %v1453 = vunpack.c.l.b16 %v1354
        %v1454 = vpack.c.b16 %v1447, %v1446
        %v1455 = vpack.c.b16 %v1449, %v1448
        %v1456 = vpack.c.b16 %v1451, %v1450
        %v1457 = vpack.c.b16 %v1453, %v1452
        %v1462 = vsel %vm475, %v1383, 0
        %1464 = vmatpush.bf16.msra.mxu0 0
        %1465 = vmatpush.bf16.msra.mxu0 0
        %1466 = vmatpush.bf16.msra.mxu0 0
        %1467 = vmatpush.bf16.msra.mxu0 0
        %1468 = vmatpush.bf16.msra.mxu0 %v1457
        %1469 = vmatpush.bf16.msra.mxu0 %v1456
        %1470 = vmatpush.bf16.msra.mxu0 %v1455
        %1471 = vmatpush.bf16.msra.mxu0 %v1454
        %1472 = vmatmul.bf16.gmra.mxu0 %v1462
        %v1473 = vpop.f32.mrf.mxu0
        %v1474 = vadd.f32 %v1434, %v1473
        %v1475 = vpop.f32.mrf.mxu0
        %v1476 = vadd.f32 %v1436, %v1475
        %1477 = vdwg.mxu0
        %v1480 = vrot.slane %v1383, 1
        %v1481 = vrot.slane %v1384, 1
        %v1482 = vsel %vm535, %v1480, %v1481
        %v1491 = vunpack.c.l.b16 %v1363
        %v1492 = vunpack.c.l.b16 %v1364
        %v1493 = vunpack.c.l.b16 %v1365
        %v1494 = vunpack.c.l.b16 %v1366
        %v1495 = vunpack.c.l.b16 %v1367
        %v1496 = vunpack.c.l.b16 %v1368
        %v1497 = vunpack.c.l.b16 %v1369
        %v1498 = vunpack.c.l.b16 %v1370
        %v1499 = vpack.c.b16 %v1492, %v1491
        %v1500 = vpack.c.b16 %v1494, %v1493
        %v1501 = vpack.c.b16 %v1496, %v1495
        %v1502 = vpack.c.b16 %v1498, %v1497
        %v1508 = vsel %vm475, %v1482, 0
        %1510 = vmatpush.bf16.msra.mxu0 0
        %1511 = vmatpush.bf16.msra.mxu0 0
        %1512 = vmatpush.bf16.msra.mxu0 0
        %1513 = vmatpush.bf16.msra.mxu0 0
        %1514 = vmatpush.bf16.msra.mxu0 %v1502
        %1515 = vmatpush.bf16.msra.mxu0 %v1501
        %1516 = vmatpush.bf16.msra.mxu0 %v1500
        %1517 = vmatpush.bf16.msra.mxu0 %v1499
        %1518 = vmatmul.bf16.gmra.mxu0 %v1508
        %v1519 = vpop.f32.mrf.mxu0
        %v1520 = vadd.f32 0.0, %v1519
        %v1521 = vpop.f32.mrf.mxu0
        %v1522 = vadd.f32 0.0, %v1521
        %1523 = vdwg.mxu0
        %v1524 = vadd.f32 %v1474, %v1520
        %v1525 = vadd.f32 %v1476, %v1522
        %v1526 = vperm.slane %v1372, 0
        %v1527 = vmul.f32 %v1524, %v1526
        %v1528 = vmul.f32 %v1525, %v1526
        %v1529 = vperm.slane %v1372, 1
        %v1530 = vadd.f32 %v1527, %v1529
        %v1531 = vadd.f32 %v1528, %v1529
        %v1532 = vadd.f32 %v1530, %v1156
        %v1533 = vadd.f32 %v1531, %v1157
        %v1534 = vmax.f32 %v1532, 0.0
        %v1535 = vmax.f32 %v1533, 0.0
        %s1536 = scalar_lea.vmem [#allocation2], 576
        %v1537 = vld [vmem:[%s1536] sm:$0xf]
        %v1538 = vld [vmem:[%s1536 + $0x4] sm:$0xf]
        %v1539 = vld [vmem:[%s1536 + $0x8] sm:$0xf]
        %v1540 = vld [vmem:[%s1536 + $0xc] sm:$0xf]
        %v1541 = vld [vmem:[%s1536 + $0x10] sm:$0xf]
        %v1542 = vld [vmem:[%s1536 + $0x14] sm:$0xf]
        %v1543 = vld [vmem:[%s1536 + $0x18] sm:$0xf]
        %v1544 = vld [vmem:[%s1536 + $0x1c] sm:$0xf]
        %v1545 = vld [vmem:[%s1536 + $0x20] sm:$0xf]
        %v1546 = vld [vmem:[%s1536 + $0x24] sm:$0xf]
        %v1547 = vld [vmem:[%s1536 + $0x28] sm:$0xf]
        %v1548 = vld [vmem:[%s1536 + $0x2c] sm:$0xf]
        %v1549 = vld [vmem:[%s1536 + $0x30] sm:$0xf]
        %v1550 = vld [vmem:[%s1536 + $0x34] sm:$0xf]
        %v1551 = vld [vmem:[%s1536 + $0x38] sm:$0xf]
        %v1552 = vld [vmem:[%s1536 + $0x3c] sm:$0xf]
        %v1553 = vld [vmem:[%s1536 + $0x40] sm:$0xf]
        %v1554 = vld [vmem:[%s1536 + $0x44] sm:$0xf]
        %v1555 = vld [vmem:[%s1536 + $0x48] sm:$0xf]
        %v1556 = vld [vmem:[%s1536 + $0x4c] sm:$0xf]
        %v1557 = vld [vmem:[%s1536 + $0x50] sm:$0xf]
        %v1558 = vld [vmem:[%s1536 + $0x54] sm:$0xf]
        %v1559 = vld [vmem:[%s1536 + $0x58] sm:$0xf]
        %v1560 = vld [vmem:[%s1536 + $0x5c] sm:$0xf]
        %s1561 = scalar_lea.vmem [#allocation5], 12
        %v1562 = vld [vmem:[%s1561] sm:$0x3]
        %v1565 = vrot.slane %v1534, 7
        %v1566 = vrot.slane %v1535, 7
        %v1567 = vsel %vm427, %v1565, %v1566
        %v1571 = vsel %vm427, 0.0, %v1565
        %v1572 = vsel %vm427, %v1566, 0.0
        %v1573 = vpack.c.bf16 %v1567, %v1571
        %v1574 = vpack.c.bf16 %v1572, %v1572
        %v1576 = vshrl.u32 %v1573, 16
        %v1578 = vshll.u32 %v1573, 16
        %v1580 = vrot.slane %v1578, 1
        %v1581 = vor.u32 %v1576, %v1580
        %v1583 = vshll.u32 %v1574, 16
        %v1585 = vrot.slane %v1583, 1
        %v1586 = vsel %vm438, %v1581, %v1585
        %v1595 = vunpack.c.l.b16 %v1545
        %v1596 = vunpack.c.l.b16 %v1546
        %v1597 = vunpack.c.l.b16 %v1547
        %v1598 = vunpack.c.l.b16 %v1548
        %v1599 = vunpack.c.l.b16 %v1549
        %v1600 = vunpack.c.l.b16 %v1550
        %v1601 = vunpack.c.l.b16 %v1551
        %v1602 = vunpack.c.l.b16 %v1552
        %v1603 = vpack.c.b16 %v1596, %v1595
        %v1604 = vpack.c.b16 %v1598, %v1597
        %v1605 = vpack.c.b16 %v1600, %v1599
        %v1606 = vpack.c.b16 %v1602, %v1601
        %v1612 = vsel %vm475, %v1586, 0
        %1614 = vmatpush.bf16.msra.mxu0 0
        %1615 = vmatpush.bf16.msra.mxu0 0
        %1616 = vmatpush.bf16.msra.mxu0 0
        %1617 = vmatpush.bf16.msra.mxu0 0
        %1618 = vmatpush.bf16.msra.mxu0 %v1606
        %1619 = vmatpush.bf16.msra.mxu0 %v1605
        %1620 = vmatpush.bf16.msra.mxu0 %v1604
        %1621 = vmatpush.bf16.msra.mxu0 %v1603
        %1622 = vmatmul.bf16.gmra.mxu0 %v1612
        %v1623 = vpop.f32.mrf.mxu0
        %v1624 = vadd.f32 0.0, %v1623
        %v1625 = vpop.f32.mrf.mxu0
        %v1626 = vadd.f32 0.0, %v1625
        %1627 = vdwg.mxu0
        %v1636 = vunpack.c.l.b16 %v1537
        %v1637 = vunpack.c.l.b16 %v1538
        %v1638 = vunpack.c.l.b16 %v1539
        %v1639 = vunpack.c.l.b16 %v1540
        %v1640 = vunpack.c.l.b16 %v1541
        %v1641 = vunpack.c.l.b16 %v1542
        %v1642 = vunpack.c.l.b16 %v1543
        %v1643 = vunpack.c.l.b16 %v1544
        %v1644 = vpack.c.b16 %v1637, %v1636
        %v1645 = vpack.c.b16 %v1639, %v1638
        %v1646 = vpack.c.b16 %v1641, %v1640
        %v1647 = vpack.c.b16 %v1643, %v1642
        %v1652 = vsel %vm475, %v1573, 0
        %1654 = vmatpush.bf16.msra.mxu0 0
        %1655 = vmatpush.bf16.msra.mxu0 0
        %1656 = vmatpush.bf16.msra.mxu0 0
        %1657 = vmatpush.bf16.msra.mxu0 0
        %1658 = vmatpush.bf16.msra.mxu0 %v1647
        %1659 = vmatpush.bf16.msra.mxu0 %v1646
        %1660 = vmatpush.bf16.msra.mxu0 %v1645
        %1661 = vmatpush.bf16.msra.mxu0 %v1644
        %1662 = vmatmul.bf16.gmra.mxu0 %v1652
        %v1663 = vpop.f32.mrf.mxu0
        %v1664 = vadd.f32 %v1624, %v1663
        %v1665 = vpop.f32.mrf.mxu0
        %v1666 = vadd.f32 %v1626, %v1665
        %1667 = vdwg.mxu0
        %v1670 = vrot.slane %v1573, 1
        %v1671 = vrot.slane %v1574, 1
        %v1672 = vsel %vm535, %v1670, %v1671
        %v1681 = vunpack.c.l.b16 %v1553
        %v1682 = vunpack.c.l.b16 %v1554
        %v1683 = vunpack.c.l.b16 %v1555
        %v1684 = vunpack.c.l.b16 %v1556
        %v1685 = vunpack.c.l.b16 %v1557
        %v1686 = vunpack.c.l.b16 %v1558
        %v1687 = vunpack.c.l.b16 %v1559
        %v1688 = vunpack.c.l.b16 %v1560
        %v1689 = vpack.c.b16 %v1682, %v1681
        %v1690 = vpack.c.b16 %v1684, %v1683
        %v1691 = vpack.c.b16 %v1686, %v1685
        %v1692 = vpack.c.b16 %v1688, %v1687
        %v1698 = vsel %vm475, %v1672, 0
        %1700 = vmatpush.bf16.msra.mxu0 0
        %1701 = vmatpush.bf16.msra.mxu0 0
        %1702 = vmatpush.bf16.msra.mxu0 0
        %1703 = vmatpush.bf16.msra.mxu0 0
        %1704 = vmatpush.bf16.msra.mxu0 %v1692
        %1705 = vmatpush.bf16.msra.mxu0 %v1691
        %1706 = vmatpush.bf16.msra.mxu0 %v1690
        %1707 = vmatpush.bf16.msra.mxu0 %v1689
        %1708 = vmatmul.bf16.gmra.mxu0 %v1698
        %v1709 = vpop.f32.mrf.mxu0
        %v1710 = vadd.f32 0.0, %v1709
        %v1711 = vpop.f32.mrf.mxu0
        %v1712 = vadd.f32 0.0, %v1711
        %1713 = vdwg.mxu0
        %v1714 = vadd.f32 %v1664, %v1710
        %v1715 = vadd.f32 %v1666, %v1712
        %v1716 = vperm.slane %v1562, 0
        %v1717 = vmul.f32 %v1714, %v1716
        %v1718 = vmul.f32 %v1715, %v1716
        %v1719 = vperm.slane %v1562, 1
        %v1720 = vadd.f32 %v1717, %v1719
        %v1721 = vadd.f32 %v1718, %v1719
        %v1722 = vmax.f32 %v1720, 0.0
        %v1723 = vmax.f32 %v1721, 0.0
        %s1724 = scalar_lea.vmem [#allocation2], 672
        %v1725 = vld [vmem:[%s1724] sm:$0xf]
        %v1726 = vld [vmem:[%s1724 + $0x4] sm:$0xf]
        %v1727 = vld [vmem:[%s1724 + $0x8] sm:$0xf]
        %v1728 = vld [vmem:[%s1724 + $0xc] sm:$0xf]
        %v1729 = vld [vmem:[%s1724 + $0x10] sm:$0xf]
        %v1730 = vld [vmem:[%s1724 + $0x14] sm:$0xf]
        %v1731 = vld [vmem:[%s1724 + $0x18] sm:$0xf]
        %v1732 = vld [vmem:[%s1724 + $0x1c] sm:$0xf]
        %v1733 = vld [vmem:[%s1724 + $0x20] sm:$0xf]
        %v1734 = vld [vmem:[%s1724 + $0x24] sm:$0xf]
        %v1735 = vld [vmem:[%s1724 + $0x28] sm:$0xf]
        %v1736 = vld [vmem:[%s1724 + $0x2c] sm:$0xf]
        %v1737 = vld [vmem:[%s1724 + $0x30] sm:$0xf]
        %v1738 = vld [vmem:[%s1724 + $0x34] sm:$0xf]
        %v1739 = vld [vmem:[%s1724 + $0x38] sm:$0xf]
        %v1740 = vld [vmem:[%s1724 + $0x3c] sm:$0xf]
        %v1741 = vld [vmem:[%s1724 + $0x40] sm:$0xf]
        %v1742 = vld [vmem:[%s1724 + $0x44] sm:$0xf]
        %v1743 = vld [vmem:[%s1724 + $0x48] sm:$0xf]
        %v1744 = vld [vmem:[%s1724 + $0x4c] sm:$0xf]
        %v1745 = vld [vmem:[%s1724 + $0x50] sm:$0xf]
        %v1746 = vld [vmem:[%s1724 + $0x54] sm:$0xf]
        %v1747 = vld [vmem:[%s1724 + $0x58] sm:$0xf]
        %v1748 = vld [vmem:[%s1724 + $0x5c] sm:$0xf]
        %s1749 = scalar_lea.vmem [#allocation5], 14
        %v1750 = vld [vmem:[%s1749] sm:$0x3]
        %v1753 = vrot.slane %v1722, 7
        %v1754 = vrot.slane %v1723, 7
        %v1755 = vsel %vm427, %v1753, %v1754
        %v1759 = vsel %vm427, 0.0, %v1753
        %v1760 = vsel %vm427, %v1754, 0.0
        %v1761 = vpack.c.bf16 %v1755, %v1759
        %v1762 = vpack.c.bf16 %v1760, %v1760
        %v1764 = vshrl.u32 %v1761, 16
        %v1766 = vshll.u32 %v1761, 16
        %v1768 = vrot.slane %v1766, 1
        %v1769 = vor.u32 %v1764, %v1768
        %v1771 = vshll.u32 %v1762, 16
        %v1773 = vrot.slane %v1771, 1
        %v1774 = vsel %vm438, %v1769, %v1773
        %v1783 = vunpack.c.l.b16 %v1733
        %v1784 = vunpack.c.l.b16 %v1734
        %v1785 = vunpack.c.l.b16 %v1735
        %v1786 = vunpack.c.l.b16 %v1736
        %v1787 = vunpack.c.l.b16 %v1737
        %v1788 = vunpack.c.l.b16 %v1738
        %v1789 = vunpack.c.l.b16 %v1739
        %v1790 = vunpack.c.l.b16 %v1740
        %v1791 = vpack.c.b16 %v1784, %v1783
        %v1792 = vpack.c.b16 %v1786, %v1785
        %v1793 = vpack.c.b16 %v1788, %v1787
        %v1794 = vpack.c.b16 %v1790, %v1789
        %v1800 = vsel %vm475, %v1774, 0
        %1802 = vmatpush.bf16.msra.mxu0 0
        %1803 = vmatpush.bf16.msra.mxu0 0
        %1804 = vmatpush.bf16.msra.mxu0 0
        %1805 = vmatpush.bf16.msra.mxu0 0
        %1806 = vmatpush.bf16.msra.mxu0 %v1794
        %1807 = vmatpush.bf16.msra.mxu0 %v1793
        %1808 = vmatpush.bf16.msra.mxu0 %v1792
        %1809 = vmatpush.bf16.msra.mxu0 %v1791
        %1810 = vmatmul.bf16.gmra.mxu0 %v1800
        %v1811 = vpop.f32.mrf.mxu0
        %v1812 = vadd.f32 0.0, %v1811
        %v1813 = vpop.f32.mrf.mxu0
        %v1814 = vadd.f32 0.0, %v1813
        %1815 = vdwg.mxu0
        %v1824 = vunpack.c.l.b16 %v1725
        %v1825 = vunpack.c.l.b16 %v1726
        %v1826 = vunpack.c.l.b16 %v1727
        %v1827 = vunpack.c.l.b16 %v1728
        %v1828 = vunpack.c.l.b16 %v1729
        %v1829 = vunpack.c.l.b16 %v1730
        %v1830 = vunpack.c.l.b16 %v1731
        %v1831 = vunpack.c.l.b16 %v1732
        %v1832 = vpack.c.b16 %v1825, %v1824
        %v1833 = vpack.c.b16 %v1827, %v1826
        %v1834 = vpack.c.b16 %v1829, %v1828
        %v1835 = vpack.c.b16 %v1831, %v1830
        %v1840 = vsel %vm475, %v1761, 0
        %1842 = vmatpush.bf16.msra.mxu0 0
        %1843 = vmatpush.bf16.msra.mxu0 0
        %1844 = vmatpush.bf16.msra.mxu0 0
        %1845 = vmatpush.bf16.msra.mxu0 0
        %1846 = vmatpush.bf16.msra.mxu0 %v1835
        %1847 = vmatpush.bf16.msra.mxu0 %v1834
        %1848 = vmatpush.bf16.msra.mxu0 %v1833
        %1849 = vmatpush.bf16.msra.mxu0 %v1832
        %1850 = vmatmul.bf16.gmra.mxu0 %v1840
        %v1851 = vpop.f32.mrf.mxu0
        %v1852 = vadd.f32 %v1812, %v1851
        %v1853 = vpop.f32.mrf.mxu0
        %v1854 = vadd.f32 %v1814, %v1853
        %1855 = vdwg.mxu0
        %v1858 = vrot.slane %v1761, 1
        %v1859 = vrot.slane %v1762, 1
        %v1860 = vsel %vm535, %v1858, %v1859
        %v1869 = vunpack.c.l.b16 %v1741
        %v1870 = vunpack.c.l.b16 %v1742
        %v1871 = vunpack.c.l.b16 %v1743
        %v1872 = vunpack.c.l.b16 %v1744
        %v1873 = vunpack.c.l.b16 %v1745
        %v1874 = vunpack.c.l.b16 %v1746
        %v1875 = vunpack.c.l.b16 %v1747
        %v1876 = vunpack.c.l.b16 %v1748
        %v1877 = vpack.c.b16 %v1870, %v1869
        %v1878 = vpack.c.b16 %v1872, %v1871
        %v1879 = vpack.c.b16 %v1874, %v1873
        %v1880 = vpack.c.b16 %v1876, %v1875
        %v1886 = vsel %vm475, %v1860, 0
        %1888 = vmatpush.bf16.msra.mxu0 0
        %1889 = vmatpush.bf16.msra.mxu0 0
        %1890 = vmatpush.bf16.msra.mxu0 0
        %1891 = vmatpush.bf16.msra.mxu0 0
        %1892 = vmatpush.bf16.msra.mxu0 %v1880
        %1893 = vmatpush.bf16.msra.mxu0 %v1879
        %1894 = vmatpush.bf16.msra.mxu0 %v1878
        %1895 = vmatpush.bf16.msra.mxu0 %v1877
        %1896 = vmatmul.bf16.gmra.mxu0 %v1886
        %v1897 = vpop.f32.mrf.mxu0
        %v1898 = vadd.f32 0.0, %v1897
        %v1899 = vpop.f32.mrf.mxu0
        %v1900 = vadd.f32 0.0, %v1899
        %1901 = vdwg.mxu0
        %v1902 = vadd.f32 %v1852, %v1898
        %v1903 = vadd.f32 %v1854, %v1900
        %v1904 = vperm.slane %v1750, 0
        %v1905 = vmul.f32 %v1902, %v1904
        %v1906 = vmul.f32 %v1903, %v1904
        %v1907 = vperm.slane %v1750, 1
        %v1908 = vadd.f32 %v1905, %v1907
        %v1909 = vadd.f32 %v1906, %v1907
        %v1910 = vadd.f32 %v1908, %v1534
        %v1911 = vadd.f32 %v1909, %v1535
        %v1912 = vmax.f32 %v1910, 0.0
        %v1913 = vmax.f32 %v1911, 0.0
        %s1914 = scalar_lea.vmem [#allocation2], 768
        %v1915 = vld [vmem:[%s1914] sm:$0xf]
        %v1916 = vld [vmem:[%s1914 + $0x4] sm:$0xf]
        %v1917 = vld [vmem:[%s1914 + $0x8] sm:$0xf]
        %v1918 = vld [vmem:[%s1914 + $0xc] sm:$0xf]
        %v1919 = vld [vmem:[%s1914 + $0x10] sm:$0xf]
        %v1920 = vld [vmem:[%s1914 + $0x14] sm:$0xf]
        %v1921 = vld [vmem:[%s1914 + $0x18] sm:$0xf]
        %v1922 = vld [vmem:[%s1914 + $0x1c] sm:$0xf]
        %v1923 = vld [vmem:[%s1914 + $0x20] sm:$0xf]
        %v1924 = vld [vmem:[%s1914 + $0x24] sm:$0xf]
        %v1925 = vld [vmem:[%s1914 + $0x28] sm:$0xf]
        %v1926 = vld [vmem:[%s1914 + $0x2c] sm:$0xf]
        %v1927 = vld [vmem:[%s1914 + $0x30] sm:$0xf]
        %v1928 = vld [vmem:[%s1914 + $0x34] sm:$0xf]
        %v1929 = vld [vmem:[%s1914 + $0x38] sm:$0xf]
        %v1930 = vld [vmem:[%s1914 + $0x3c] sm:$0xf]
        %v1931 = vld [vmem:[%s1914 + $0x40] sm:$0xf]
        %v1932 = vld [vmem:[%s1914 + $0x44] sm:$0xf]
        %v1933 = vld [vmem:[%s1914 + $0x48] sm:$0xf]
        %v1934 = vld [vmem:[%s1914 + $0x4c] sm:$0xf]
        %v1935 = vld [vmem:[%s1914 + $0x50] sm:$0xf]
        %v1936 = vld [vmem:[%s1914 + $0x54] sm:$0xf]
        %v1937 = vld [vmem:[%s1914 + $0x58] sm:$0xf]
        %v1938 = vld [vmem:[%s1914 + $0x5c] sm:$0xf]
        %s1939 = scalar_lea.vmem [#allocation5], 16
        %v1940 = vld [vmem:[%s1939] sm:$0x3]
        %v1943 = vrot.slane %v1912, 7
        %v1944 = vrot.slane %v1913, 7
        %v1945 = vsel %vm427, %v1943, %v1944
        %v1949 = vsel %vm427, 0.0, %v1943
        %v1950 = vsel %vm427, %v1944, 0.0
        %v1951 = vpack.c.bf16 %v1945, %v1949
        %v1952 = vpack.c.bf16 %v1950, %v1950
        %v1954 = vshrl.u32 %v1951, 16
        %v1956 = vshll.u32 %v1951, 16
        %v1958 = vrot.slane %v1956, 1
        %v1959 = vor.u32 %v1954, %v1958
        %v1961 = vshll.u32 %v1952, 16
        %v1963 = vrot.slane %v1961, 1
        %v1964 = vsel %vm438, %v1959, %v1963
        %v1973 = vunpack.c.l.b16 %v1923
        %v1974 = vunpack.c.l.b16 %v1924
        %v1975 = vunpack.c.l.b16 %v1925
        %v1976 = vunpack.c.l.b16 %v1926
        %v1977 = vunpack.c.l.b16 %v1927
        %v1978 = vunpack.c.l.b16 %v1928
        %v1979 = vunpack.c.l.b16 %v1929
        %v1980 = vunpack.c.l.b16 %v1930
        %v1981 = vpack.c.b16 %v1974, %v1973
        %v1982 = vpack.c.b16 %v1976, %v1975
        %v1983 = vpack.c.b16 %v1978, %v1977
        %v1984 = vpack.c.b16 %v1980, %v1979
        %v1990 = vsel %vm475, %v1964, 0
        %1992 = vmatpush.bf16.msra.mxu0 0
        %1993 = vmatpush.bf16.msra.mxu0 0
        %1994 = vmatpush.bf16.msra.mxu0 0
        %1995 = vmatpush.bf16.msra.mxu0 0
        %1996 = vmatpush.bf16.msra.mxu0 %v1984
        %1997 = vmatpush.bf16.msra.mxu0 %v1983
        %1998 = vmatpush.bf16.msra.mxu0 %v1982
        %1999 = vmatpush.bf16.msra.mxu0 %v1981
        %2000 = vmatmul.bf16.gmra.mxu0 %v1990
        %v2001 = vpop.f32.mrf.mxu0
        %v2002 = vadd.f32 0.0, %v2001
        %v2003 = vpop.f32.mrf.mxu0
        %v2004 = vadd.f32 0.0, %v2003
        %2005 = vdwg.mxu0
        %v2014 = vunpack.c.l.b16 %v1915
        %v2015 = vunpack.c.l.b16 %v1916
        %v2016 = vunpack.c.l.b16 %v1917
        %v2017 = vunpack.c.l.b16 %v1918
        %v2018 = vunpack.c.l.b16 %v1919
        %v2019 = vunpack.c.l.b16 %v1920
        %v2020 = vunpack.c.l.b16 %v1921
        %v2021 = vunpack.c.l.b16 %v1922
        %v2022 = vpack.c.b16 %v2015, %v2014
        %v2023 = vpack.c.b16 %v2017, %v2016
        %v2024 = vpack.c.b16 %v2019, %v2018
        %v2025 = vpack.c.b16 %v2021, %v2020
        %v2030 = vsel %vm475, %v1951, 0
        %2032 = vmatpush.bf16.msra.mxu0 0
        %2033 = vmatpush.bf16.msra.mxu0 0
        %2034 = vmatpush.bf16.msra.mxu0 0
        %2035 = vmatpush.bf16.msra.mxu0 0
        %2036 = vmatpush.bf16.msra.mxu0 %v2025
        %2037 = vmatpush.bf16.msra.mxu0 %v2024
        %2038 = vmatpush.bf16.msra.mxu0 %v2023
        %2039 = vmatpush.bf16.msra.mxu0 %v2022
        %2040 = vmatmul.bf16.gmra.mxu0 %v2030
        %v2041 = vpop.f32.mrf.mxu0
        %v2042 = vadd.f32 %v2002, %v2041
        %v2043 = vpop.f32.mrf.mxu0
        %v2044 = vadd.f32 %v2004, %v2043
        %2045 = vdwg.mxu0
        %v2048 = vrot.slane %v1951, 1
        %v2049 = vrot.slane %v1952, 1
        %v2050 = vsel %vm535, %v2048, %v2049
        %v2059 = vunpack.c.l.b16 %v1931
        %v2060 = vunpack.c.l.b16 %v1932
        %v2061 = vunpack.c.l.b16 %v1933
        %v2062 = vunpack.c.l.b16 %v1934
        %v2063 = vunpack.c.l.b16 %v1935
        %v2064 = vunpack.c.l.b16 %v1936
        %v2065 = vunpack.c.l.b16 %v1937
        %v2066 = vunpack.c.l.b16 %v1938
        %v2067 = vpack.c.b16 %v2060, %v2059
        %v2068 = vpack.c.b16 %v2062, %v2061
        %v2069 = vpack.c.b16 %v2064, %v2063
        %v2070 = vpack.c.b16 %v2066, %v2065
        %v2076 = vsel %vm475, %v2050, 0
        %2078 = vmatpush.bf16.msra.mxu0 0
        %2079 = vmatpush.bf16.msra.mxu0 0
        %2080 = vmatpush.bf16.msra.mxu0 0
        %2081 = vmatpush.bf16.msra.mxu0 0
        %2082 = vmatpush.bf16.msra.mxu0 %v2070
        %2083 = vmatpush.bf16.msra.mxu0 %v2069
        %2084 = vmatpush.bf16.msra.mxu0 %v2068
        %2085 = vmatpush.bf16.msra.mxu0 %v2067
        %2086 = vmatmul.bf16.gmra.mxu0 %v2076
        %v2087 = vpop.f32.mrf.mxu0
        %v2088 = vadd.f32 0.0, %v2087
        %v2089 = vpop.f32.mrf.mxu0
        %v2090 = vadd.f32 0.0, %v2089
        %2091 = vdwg.mxu0
        %v2092 = vadd.f32 %v2042, %v2088
        %v2093 = vadd.f32 %v2044, %v2090
        %v2094 = vperm.slane %v1940, 0
        %v2095 = vmul.f32 %v2092, %v2094
        %v2096 = vmul.f32 %v2093, %v2094
        %v2097 = vperm.slane %v1940, 1
        %v2098 = vadd.f32 %v2095, %v2097
        %v2099 = vadd.f32 %v2096, %v2097
        %v2100 = vmax.f32 %v2098, 0.0
        %v2101 = vmax.f32 %v2099, 0.0
        %s2102 = scalar_lea.vmem [#allocation2], 864
        %v2103 = vld [vmem:[%s2102] sm:$0xf]
        %v2104 = vld [vmem:[%s2102 + $0x4] sm:$0xf]
        %v2105 = vld [vmem:[%s2102 + $0x8] sm:$0xf]
        %v2106 = vld [vmem:[%s2102 + $0xc] sm:$0xf]
        %v2107 = vld [vmem:[%s2102 + $0x10] sm:$0xf]
        %v2108 = vld [vmem:[%s2102 + $0x14] sm:$0xf]
        %v2109 = vld [vmem:[%s2102 + $0x18] sm:$0xf]
        %v2110 = vld [vmem:[%s2102 + $0x1c] sm:$0xf]
        %v2111 = vld [vmem:[%s2102 + $0x20] sm:$0xf]
        %v2112 = vld [vmem:[%s2102 + $0x24] sm:$0xf]
        %v2113 = vld [vmem:[%s2102 + $0x28] sm:$0xf]
        %v2114 = vld [vmem:[%s2102 + $0x2c] sm:$0xf]
        %v2115 = vld [vmem:[%s2102 + $0x30] sm:$0xf]
        %v2116 = vld [vmem:[%s2102 + $0x34] sm:$0xf]
        %v2117 = vld [vmem:[%s2102 + $0x38] sm:$0xf]
        %v2118 = vld [vmem:[%s2102 + $0x3c] sm:$0xf]
        %v2119 = vld [vmem:[%s2102 + $0x40] sm:$0xf]
        %v2120 = vld [vmem:[%s2102 + $0x44] sm:$0xf]
        %v2121 = vld [vmem:[%s2102 + $0x48] sm:$0xf]
        %v2122 = vld [vmem:[%s2102 + $0x4c] sm:$0xf]
        %v2123 = vld [vmem:[%s2102 + $0x50] sm:$0xf]
        %v2124 = vld [vmem:[%s2102 + $0x54] sm:$0xf]
        %v2125 = vld [vmem:[%s2102 + $0x58] sm:$0xf]
        %v2126 = vld [vmem:[%s2102 + $0x5c] sm:$0xf]
        %s2127 = scalar_lea.vmem [#allocation5], 18
        %v2128 = vld [vmem:[%s2127] sm:$0x3]
        %v2131 = vrot.slane %v2100, 7
        %v2132 = vrot.slane %v2101, 7
        %v2133 = vsel %vm427, %v2131, %v2132
        %v2137 = vsel %vm427, 0.0, %v2131
        %v2138 = vsel %vm427, %v2132, 0.0
        %v2139 = vpack.c.bf16 %v2133, %v2137
        %v2140 = vpack.c.bf16 %v2138, %v2138
        %v2142 = vshrl.u32 %v2139, 16
        %v2144 = vshll.u32 %v2139, 16
        %v2146 = vrot.slane %v2144, 1
        %v2147 = vor.u32 %v2142, %v2146
        %v2149 = vshll.u32 %v2140, 16
        %v2151 = vrot.slane %v2149, 1
        %v2152 = vsel %vm438, %v2147, %v2151
        %v2161 = vunpack.c.l.b16 %v2111
        %v2162 = vunpack.c.l.b16 %v2112
        %v2163 = vunpack.c.l.b16 %v2113
        %v2164 = vunpack.c.l.b16 %v2114
        %v2165 = vunpack.c.l.b16 %v2115
        %v2166 = vunpack.c.l.b16 %v2116
        %v2167 = vunpack.c.l.b16 %v2117
        %v2168 = vunpack.c.l.b16 %v2118
        %v2169 = vpack.c.b16 %v2162, %v2161
        %v2170 = vpack.c.b16 %v2164, %v2163
        %v2171 = vpack.c.b16 %v2166, %v2165
        %v2172 = vpack.c.b16 %v2168, %v2167
        %v2178 = vsel %vm475, %v2152, 0
        %2180 = vmatpush.bf16.msra.mxu0 0
        %2181 = vmatpush.bf16.msra.mxu0 0
        %2182 = vmatpush.bf16.msra.mxu0 0
        %2183 = vmatpush.bf16.msra.mxu0 0
        %2184 = vmatpush.bf16.msra.mxu0 %v2172
        %2185 = vmatpush.bf16.msra.mxu0 %v2171
        %2186 = vmatpush.bf16.msra.mxu0 %v2170
        %2187 = vmatpush.bf16.msra.mxu0 %v2169
        %2188 = vmatmul.bf16.gmra.mxu0 %v2178
        %v2189 = vpop.f32.mrf.mxu0
        %v2190 = vadd.f32 0.0, %v2189
        %v2191 = vpop.f32.mrf.mxu0
        %v2192 = vadd.f32 0.0, %v2191
        %2193 = vdwg.mxu0
        %v2202 = vunpack.c.l.b16 %v2103
        %v2203 = vunpack.c.l.b16 %v2104
        %v2204 = vunpack.c.l.b16 %v2105
        %v2205 = vunpack.c.l.b16 %v2106
        %v2206 = vunpack.c.l.b16 %v2107
        %v2207 = vunpack.c.l.b16 %v2108
        %v2208 = vunpack.c.l.b16 %v2109
        %v2209 = vunpack.c.l.b16 %v2110
        %v2210 = vpack.c.b16 %v2203, %v2202
        %v2211 = vpack.c.b16 %v2205, %v2204
        %v2212 = vpack.c.b16 %v2207, %v2206
        %v2213 = vpack.c.b16 %v2209, %v2208
        %v2218 = vsel %vm475, %v2139, 0
        %2220 = vmatpush.bf16.msra.mxu0 0
        %2221 = vmatpush.bf16.msra.mxu0 0
        %2222 = vmatpush.bf16.msra.mxu0 0
        %2223 = vmatpush.bf16.msra.mxu0 0
        %2224 = vmatpush.bf16.msra.mxu0 %v2213
        %2225 = vmatpush.bf16.msra.mxu0 %v2212
        %2226 = vmatpush.bf16.msra.mxu0 %v2211
        %2227 = vmatpush.bf16.msra.mxu0 %v2210
        %2228 = vmatmul.bf16.gmra.mxu0 %v2218
        %v2229 = vpop.f32.mrf.mxu0
        %v2230 = vadd.f32 %v2190, %v2229
        %v2231 = vpop.f32.mrf.mxu0
        %v2232 = vadd.f32 %v2192, %v2231
        %2233 = vdwg.mxu0
        %v2236 = vrot.slane %v2139, 1
        %v2237 = vrot.slane %v2140, 1
        %v2238 = vsel %vm535, %v2236, %v2237
        %v2247 = vunpack.c.l.b16 %v2119
        %v2248 = vunpack.c.l.b16 %v2120
        %v2249 = vunpack.c.l.b16 %v2121
        %v2250 = vunpack.c.l.b16 %v2122
        %v2251 = vunpack.c.l.b16 %v2123
        %v2252 = vunpack.c.l.b16 %v2124
        %v2253 = vunpack.c.l.b16 %v2125
        %v2254 = vunpack.c.l.b16 %v2126
        %v2255 = vpack.c.b16 %v2248, %v2247
        %v2256 = vpack.c.b16 %v2250, %v2249
        %v2257 = vpack.c.b16 %v2252, %v2251
        %v2258 = vpack.c.b16 %v2254, %v2253
        %v2264 = vsel %vm475, %v2238, 0
        %2266 = vmatpush.bf16.msra.mxu0 0
        %2267 = vmatpush.bf16.msra.mxu0 0
        %2268 = vmatpush.bf16.msra.mxu0 0
        %2269 = vmatpush.bf16.msra.mxu0 0
        %2270 = vmatpush.bf16.msra.mxu0 %v2258
        %2271 = vmatpush.bf16.msra.mxu0 %v2257
        %2272 = vmatpush.bf16.msra.mxu0 %v2256
        %2273 = vmatpush.bf16.msra.mxu0 %v2255
        %2274 = vmatmul.bf16.gmra.mxu0 %v2264
        %v2275 = vpop.f32.mrf.mxu0
        %v2276 = vadd.f32 0.0, %v2275
        %v2277 = vpop.f32.mrf.mxu0
        %v2278 = vadd.f32 0.0, %v2277
        %2279 = vdwg.mxu0
        %v2280 = vadd.f32 %v2230, %v2276
        %v2281 = vadd.f32 %v2232, %v2278
        %v2282 = vperm.slane %v2128, 0
        %v2283 = vmul.f32 %v2280, %v2282
        %v2284 = vmul.f32 %v2281, %v2282
        %v2285 = vperm.slane %v2128, 1
        %v2286 = vadd.f32 %v2283, %v2285
        %v2287 = vadd.f32 %v2284, %v2285
        %v2288 = vadd.f32 %v2286, %v1912
        %v2289 = vadd.f32 %v2287, %v1913
        %v2290 = vmax.f32 %v2288, 0.0
        %v2291 = vmax.f32 %v2289, 0.0
        %s2292 = scalar_lea.vmem [#allocation2], 960
        %v2293 = vld [vmem:[%s2292] sm:$0xf]
        %v2294 = vld [vmem:[%s2292 + $0x4] sm:$0xf]
        %v2295 = vld [vmem:[%s2292 + $0x8] sm:$0xf]
        %v2296 = vld [vmem:[%s2292 + $0xc] sm:$0xf]
        %v2297 = vld [vmem:[%s2292 + $0x10] sm:$0xf]
        %v2298 = vld [vmem:[%s2292 + $0x14] sm:$0xf]
        %v2299 = vld [vmem:[%s2292 + $0x18] sm:$0xf]
        %v2300 = vld [vmem:[%s2292 + $0x1c] sm:$0xf]
        %v2301 = vld [vmem:[%s2292 + $0x20] sm:$0xf]
        %v2302 = vld [vmem:[%s2292 + $0x24] sm:$0xf]
        %v2303 = vld [vmem:[%s2292 + $0x28] sm:$0xf]
        %v2304 = vld [vmem:[%s2292 + $0x2c] sm:$0xf]
        %v2305 = vld [vmem:[%s2292 + $0x30] sm:$0xf]
        %v2306 = vld [vmem:[%s2292 + $0x34] sm:$0xf]
        %v2307 = vld [vmem:[%s2292 + $0x38] sm:$0xf]
        %v2308 = vld [vmem:[%s2292 + $0x3c] sm:$0xf]
        %v2309 = vld [vmem:[%s2292 + $0x40] sm:$0xf]
        %v2310 = vld [vmem:[%s2292 + $0x44] sm:$0xf]
        %v2311 = vld [vmem:[%s2292 + $0x48] sm:$0xf]
        %v2312 = vld [vmem:[%s2292 + $0x4c] sm:$0xf]
        %v2313 = vld [vmem:[%s2292 + $0x50] sm:$0xf]
        %v2314 = vld [vmem:[%s2292 + $0x54] sm:$0xf]
        %v2315 = vld [vmem:[%s2292 + $0x58] sm:$0xf]
        %v2316 = vld [vmem:[%s2292 + $0x5c] sm:$0xf]
        %s2317 = scalar_lea.vmem [#allocation5], 20
        %v2318 = vld [vmem:[%s2317] sm:$0x3]
        %v2321 = vrot.slane %v2290, 7
        %v2322 = vrot.slane %v2291, 7
        %v2323 = vsel %vm427, %v2321, %v2322
        %v2327 = vsel %vm427, 0.0, %v2321
        %v2328 = vsel %vm427, %v2322, 0.0
        %v2329 = vpack.c.bf16 %v2323, %v2327
        %v2330 = vpack.c.bf16 %v2328, %v2328
        %v2332 = vshrl.u32 %v2329, 16
        %v2334 = vshll.u32 %v2329, 16
        %v2336 = vrot.slane %v2334, 1
        %v2337 = vor.u32 %v2332, %v2336
        %v2339 = vshll.u32 %v2330, 16
        %v2341 = vrot.slane %v2339, 1
        %v2342 = vsel %vm438, %v2337, %v2341
        %v2351 = vunpack.c.l.b16 %v2301
        %v2352 = vunpack.c.l.b16 %v2302
        %v2353 = vunpack.c.l.b16 %v2303
        %v2354 = vunpack.c.l.b16 %v2304
        %v2355 = vunpack.c.l.b16 %v2305
        %v2356 = vunpack.c.l.b16 %v2306
        %v2357 = vunpack.c.l.b16 %v2307
        %v2358 = vunpack.c.l.b16 %v2308
        %v2359 = vpack.c.b16 %v2352, %v2351
        %v2360 = vpack.c.b16 %v2354, %v2353
        %v2361 = vpack.c.b16 %v2356, %v2355
        %v2362 = vpack.c.b16 %v2358, %v2357
        %v2368 = vsel %vm475, %v2342, 0
        %2370 = vmatpush.bf16.msra.mxu0 0
        %2371 = vmatpush.bf16.msra.mxu0 0
        %2372 = vmatpush.bf16.msra.mxu0 0
        %2373 = vmatpush.bf16.msra.mxu0 0
        %2374 = vmatpush.bf16.msra.mxu0 %v2362
        %2375 = vmatpush.bf16.msra.mxu0 %v2361
        %2376 = vmatpush.bf16.msra.mxu0 %v2360
        %2377 = vmatpush.bf16.msra.mxu0 %v2359
        %2378 = vmatmul.bf16.gmra.mxu0 %v2368
        %v2379 = vpop.f32.mrf.mxu0
        %v2380 = vadd.f32 0.0, %v2379
        %v2381 = vpop.f32.mrf.mxu0
        %v2382 = vadd.f32 0.0, %v2381
        %2383 = vdwg.mxu0
        %v2392 = vunpack.c.l.b16 %v2293
        %v2393 = vunpack.c.l.b16 %v2294
        %v2394 = vunpack.c.l.b16 %v2295
        %v2395 = vunpack.c.l.b16 %v2296
        %v2396 = vunpack.c.l.b16 %v2297
        %v2397 = vunpack.c.l.b16 %v2298
        %v2398 = vunpack.c.l.b16 %v2299
        %v2399 = vunpack.c.l.b16 %v2300
        %v2400 = vpack.c.b16 %v2393, %v2392
        %v2401 = vpack.c.b16 %v2395, %v2394
        %v2402 = vpack.c.b16 %v2397, %v2396
        %v2403 = vpack.c.b16 %v2399, %v2398
        %v2408 = vsel %vm475, %v2329, 0
        %2410 = vmatpush.bf16.msra.mxu0 0
        %2411 = vmatpush.bf16.msra.mxu0 0
        %2412 = vmatpush.bf16.msra.mxu0 0
        %2413 = vmatpush.bf16.msra.mxu0 0
        %2414 = vmatpush.bf16.msra.mxu0 %v2403
        %2415 = vmatpush.bf16.msra.mxu0 %v2402
        %2416 = vmatpush.bf16.msra.mxu0 %v2401
        %2417 = vmatpush.bf16.msra.mxu0 %v2400
        %2418 = vmatmul.bf16.gmra.mxu0 %v2408
        %v2419 = vpop.f32.mrf.mxu0
        %v2420 = vadd.f32 %v2380, %v2419
        %v2421 = vpop.f32.mrf.mxu0
        %v2422 = vadd.f32 %v2382, %v2421
        %2423 = vdwg.mxu0
        %v2426 = vrot.slane %v2329, 1
        %v2427 = vrot.slane %v2330, 1
        %v2428 = vsel %vm535, %v2426, %v2427
        %v2437 = vunpack.c.l.b16 %v2309
        %v2438 = vunpack.c.l.b16 %v2310
        %v2439 = vunpack.c.l.b16 %v2311
        %v2440 = vunpack.c.l.b16 %v2312
        %v2441 = vunpack.c.l.b16 %v2313
        %v2442 = vunpack.c.l.b16 %v2314
        %v2443 = vunpack.c.l.b16 %v2315
        %v2444 = vunpack.c.l.b16 %v2316
        %v2445 = vpack.c.b16 %v2438, %v2437
        %v2446 = vpack.c.b16 %v2440, %v2439
        %v2447 = vpack.c.b16 %v2442, %v2441
        %v2448 = vpack.c.b16 %v2444, %v2443
        %v2454 = vsel %vm475, %v2428, 0
        %2456 = vmatpush.bf16.msra.mxu0 0
        %2457 = vmatpush.bf16.msra.mxu0 0
        %2458 = vmatpush.bf16.msra.mxu0 0
        %2459 = vmatpush.bf16.msra.mxu0 0
        %2460 = vmatpush.bf16.msra.mxu0 %v2448
        %2461 = vmatpush.bf16.msra.mxu0 %v2447
        %2462 = vmatpush.bf16.msra.mxu0 %v2446
        %2463 = vmatpush.bf16.msra.mxu0 %v2445
        %2464 = vmatmul.bf16.gmra.mxu0 %v2454
        %v2465 = vpop.f32.mrf.mxu0
        %v2466 = vadd.f32 0.0, %v2465
        %v2467 = vpop.f32.mrf.mxu0
        %v2468 = vadd.f32 0.0, %v2467
        %2469 = vdwg.mxu0
        %v2470 = vadd.f32 %v2420, %v2466
        %v2471 = vadd.f32 %v2422, %v2468
        %v2472 = vperm.slane %v2318, 0
        %v2473 = vmul.f32 %v2470, %v2472
        %v2474 = vmul.f32 %v2471, %v2472
        %v2475 = vperm.slane %v2318, 1
        %v2476 = vadd.f32 %v2473, %v2475
        %v2477 = vadd.f32 %v2474, %v2475
        %v2478 = vmax.f32 %v2476, 0.0
        %v2479 = vmax.f32 %v2477, 0.0
        %s2480 = scalar_lea.vmem [#allocation2], 1056
        %v2481 = vld [vmem:[%s2480] sm:$0xf]
        %v2482 = vld [vmem:[%s2480 + $0x4] sm:$0xf]
        %v2483 = vld [vmem:[%s2480 + $0x8] sm:$0xf]
        %v2484 = vld [vmem:[%s2480 + $0xc] sm:$0xf]
        %v2485 = vld [vmem:[%s2480 + $0x10] sm:$0xf]
        %v2486 = vld [vmem:[%s2480 + $0x14] sm:$0xf]
        %v2487 = vld [vmem:[%s2480 + $0x18] sm:$0xf]
        %v2488 = vld [vmem:[%s2480 + $0x1c] sm:$0xf]
        %v2489 = vld [vmem:[%s2480 + $0x20] sm:$0xf]
        %v2490 = vld [vmem:[%s2480 + $0x24] sm:$0xf]
        %v2491 = vld [vmem:[%s2480 + $0x28] sm:$0xf]
        %v2492 = vld [vmem:[%s2480 + $0x2c] sm:$0xf]
        %v2493 = vld [vmem:[%s2480 + $0x30] sm:$0xf]
        %v2494 = vld [vmem:[%s2480 + $0x34] sm:$0xf]
        %v2495 = vld [vmem:[%s2480 + $0x38] sm:$0xf]
        %v2496 = vld [vmem:[%s2480 + $0x3c] sm:$0xf]
        %v2497 = vld [vmem:[%s2480 + $0x40] sm:$0xf]
        %v2498 = vld [vmem:[%s2480 + $0x44] sm:$0xf]
        %v2499 = vld [vmem:[%s2480 + $0x48] sm:$0xf]
        %v2500 = vld [vmem:[%s2480 + $0x4c] sm:$0xf]
        %v2501 = vld [vmem:[%s2480 + $0x50] sm:$0xf]
        %v2502 = vld [vmem:[%s2480 + $0x54] sm:$0xf]
        %v2503 = vld [vmem:[%s2480 + $0x58] sm:$0xf]
        %v2504 = vld [vmem:[%s2480 + $0x5c] sm:$0xf]
        %s2505 = scalar_lea.vmem [#allocation5], 22
        %v2506 = vld [vmem:[%s2505] sm:$0x3]
        %v2509 = vrot.slane %v2478, 7
        %v2510 = vrot.slane %v2479, 7
        %v2511 = vsel %vm427, %v2509, %v2510
        %v2515 = vsel %vm427, 0.0, %v2509
        %v2516 = vsel %vm427, %v2510, 0.0
        %v2517 = vpack.c.bf16 %v2511, %v2515
        %v2518 = vpack.c.bf16 %v2516, %v2516
        %v2520 = vshrl.u32 %v2517, 16
        %v2522 = vshll.u32 %v2517, 16
        %v2524 = vrot.slane %v2522, 1
        %v2525 = vor.u32 %v2520, %v2524
        %v2527 = vshll.u32 %v2518, 16
        %v2529 = vrot.slane %v2527, 1
        %v2530 = vsel %vm438, %v2525, %v2529
        %v2539 = vunpack.c.l.b16 %v2489
        %v2540 = vunpack.c.l.b16 %v2490
        %v2541 = vunpack.c.l.b16 %v2491
        %v2542 = vunpack.c.l.b16 %v2492
        %v2543 = vunpack.c.l.b16 %v2493
        %v2544 = vunpack.c.l.b16 %v2494
        %v2545 = vunpack.c.l.b16 %v2495
        %v2546 = vunpack.c.l.b16 %v2496
        %v2547 = vpack.c.b16 %v2540, %v2539
        %v2548 = vpack.c.b16 %v2542, %v2541
        %v2549 = vpack.c.b16 %v2544, %v2543
        %v2550 = vpack.c.b16 %v2546, %v2545
        %v2556 = vsel %vm475, %v2530, 0
        %2558 = vmatpush.bf16.msra.mxu0 0
        %2559 = vmatpush.bf16.msra.mxu0 0
        %2560 = vmatpush.bf16.msra.mxu0 0
        %2561 = vmatpush.bf16.msra.mxu0 0
        %2562 = vmatpush.bf16.msra.mxu0 %v2550
        %2563 = vmatpush.bf16.msra.mxu0 %v2549
        %2564 = vmatpush.bf16.msra.mxu0 %v2548
        %2565 = vmatpush.bf16.msra.mxu0 %v2547
        %2566 = vmatmul.bf16.gmra.mxu0 %v2556
        %v2567 = vpop.f32.mrf.mxu0
        %v2568 = vadd.f32 0.0, %v2567
        %v2569 = vpop.f32.mrf.mxu0
        %v2570 = vadd.f32 0.0, %v2569
        %2571 = vdwg.mxu0
        %v2580 = vunpack.c.l.b16 %v2481
        %v2581 = vunpack.c.l.b16 %v2482
        %v2582 = vunpack.c.l.b16 %v2483
        %v2583 = vunpack.c.l.b16 %v2484
        %v2584 = vunpack.c.l.b16 %v2485
        %v2585 = vunpack.c.l.b16 %v2486
        %v2586 = vunpack.c.l.b16 %v2487
        %v2587 = vunpack.c.l.b16 %v2488
        %v2588 = vpack.c.b16 %v2581, %v2580
        %v2589 = vpack.c.b16 %v2583, %v2582
        %v2590 = vpack.c.b16 %v2585, %v2584
        %v2591 = vpack.c.b16 %v2587, %v2586
        %v2596 = vsel %vm475, %v2517, 0
        %2598 = vmatpush.bf16.msra.mxu0 0
        %2599 = vmatpush.bf16.msra.mxu0 0
        %2600 = vmatpush.bf16.msra.mxu0 0
        %2601 = vmatpush.bf16.msra.mxu0 0
        %2602 = vmatpush.bf16.msra.mxu0 %v2591
        %2603 = vmatpush.bf16.msra.mxu0 %v2590
        %2604 = vmatpush.bf16.msra.mxu0 %v2589
        %2605 = vmatpush.bf16.msra.mxu0 %v2588
        %2606 = vmatmul.bf16.gmra.mxu0 %v2596
        %v2607 = vpop.f32.mrf.mxu0
        %v2608 = vadd.f32 %v2568, %v2607
        %v2609 = vpop.f32.mrf.mxu0
        %v2610 = vadd.f32 %v2570, %v2609
        %2611 = vdwg.mxu0
        %v2614 = vrot.slane %v2517, 1
        %v2615 = vrot.slane %v2518, 1
        %v2616 = vsel %vm535, %v2614, %v2615
        %v2625 = vunpack.c.l.b16 %v2497
        %v2626 = vunpack.c.l.b16 %v2498
        %v2627 = vunpack.c.l.b16 %v2499
        %v2628 = vunpack.c.l.b16 %v2500
        %v2629 = vunpack.c.l.b16 %v2501
        %v2630 = vunpack.c.l.b16 %v2502
        %v2631 = vunpack.c.l.b16 %v2503
        %v2632 = vunpack.c.l.b16 %v2504
        %v2633 = vpack.c.b16 %v2626, %v2625
        %v2634 = vpack.c.b16 %v2628, %v2627
        %v2635 = vpack.c.b16 %v2630, %v2629
        %v2636 = vpack.c.b16 %v2632, %v2631
        %v2642 = vsel %vm475, %v2616, 0
        %2644 = vmatpush.bf16.msra.mxu0 0
        %2645 = vmatpush.bf16.msra.mxu0 0
        %2646 = vmatpush.bf16.msra.mxu0 0
        %2647 = vmatpush.bf16.msra.mxu0 0
        %2648 = vmatpush.bf16.msra.mxu0 %v2636
        %2649 = vmatpush.bf16.msra.mxu0 %v2635
        %2650 = vmatpush.bf16.msra.mxu0 %v2634
        %2651 = vmatpush.bf16.msra.mxu0 %v2633
        %2652 = vmatmul.bf16.gmra.mxu0 %v2642
        %v2653 = vpop.f32.mrf.mxu0
        %v2654 = vadd.f32 0.0, %v2653
        %v2655 = vpop.f32.mrf.mxu0
        %v2656 = vadd.f32 0.0, %v2655
        %2657 = vdwg.mxu0
        %v2658 = vadd.f32 %v2608, %v2654
        %v2659 = vadd.f32 %v2610, %v2656
        %v2660 = vperm.slane %v2506, 0
        %v2661 = vmul.f32 %v2658, %v2660
        %v2662 = vmul.f32 %v2659, %v2660
        %v2663 = vperm.slane %v2506, 1
        %v2664 = vadd.f32 %v2661, %v2663
        %v2665 = vadd.f32 %v2662, %v2663
        %v2666 = vadd.f32 %v2664, %v2290
        %v2667 = vadd.f32 %v2665, %v2291
        %v2668 = vmax.f32 %v2666, 0.0
        %v2669 = vmax.f32 %v2667, 0.0
        %s2670 = scalar_lea.vmem [#allocation2], 1152
        %v2671 = vld [vmem:[%s2670] sm:$0xf]
        %v2672 = vld [vmem:[%s2670 + $0x4] sm:$0xf]
        %v2673 = vld [vmem:[%s2670 + $0x8] sm:$0xf]
        %v2674 = vld [vmem:[%s2670 + $0xc] sm:$0xf]
        %v2675 = vld [vmem:[%s2670 + $0x10] sm:$0xf]
        %v2676 = vld [vmem:[%s2670 + $0x14] sm:$0xf]
        %v2677 = vld [vmem:[%s2670 + $0x18] sm:$0xf]
        %v2678 = vld [vmem:[%s2670 + $0x1c] sm:$0xf]
        %v2679 = vld [vmem:[%s2670 + $0x20] sm:$0xf]
        %v2680 = vld [vmem:[%s2670 + $0x24] sm:$0xf]
        %v2681 = vld [vmem:[%s2670 + $0x28] sm:$0xf]
        %v2682 = vld [vmem:[%s2670 + $0x2c] sm:$0xf]
        %v2683 = vld [vmem:[%s2670 + $0x30] sm:$0xf]
        %v2684 = vld [vmem:[%s2670 + $0x34] sm:$0xf]
        %v2685 = vld [vmem:[%s2670 + $0x38] sm:$0xf]
        %v2686 = vld [vmem:[%s2670 + $0x3c] sm:$0xf]
        %v2687 = vld [vmem:[%s2670 + $0x40] sm:$0xf]
        %v2688 = vld [vmem:[%s2670 + $0x44] sm:$0xf]
        %v2689 = vld [vmem:[%s2670 + $0x48] sm:$0xf]
        %v2690 = vld [vmem:[%s2670 + $0x4c] sm:$0xf]
        %v2691 = vld [vmem:[%s2670 + $0x50] sm:$0xf]
        %v2692 = vld [vmem:[%s2670 + $0x54] sm:$0xf]
        %v2693 = vld [vmem:[%s2670 + $0x58] sm:$0xf]
        %v2694 = vld [vmem:[%s2670 + $0x5c] sm:$0xf]
        %s2695 = scalar_lea.vmem [#allocation5], 24
        %v2696 = vld [vmem:[%s2695] sm:$0x3]
        %v2699 = vrot.slane %v2668, 7
        %v2700 = vrot.slane %v2669, 7
        %v2701 = vsel %vm427, %v2699, %v2700
        %v2705 = vsel %vm427, 0.0, %v2699
        %v2706 = vsel %vm427, %v2700, 0.0
        %v2707 = vpack.c.bf16 %v2701, %v2705
        %v2708 = vpack.c.bf16 %v2706, %v2706
        %v2710 = vshrl.u32 %v2707, 16
        %v2712 = vshll.u32 %v2707, 16
        %v2714 = vrot.slane %v2712, 1
        %v2715 = vor.u32 %v2710, %v2714
        %v2717 = vshll.u32 %v2708, 16
        %v2719 = vrot.slane %v2717, 1
        %v2720 = vsel %vm438, %v2715, %v2719
        %v2729 = vunpack.c.l.b16 %v2679
        %v2730 = vunpack.c.l.b16 %v2680
        %v2731 = vunpack.c.l.b16 %v2681
        %v2732 = vunpack.c.l.b16 %v2682
        %v2733 = vunpack.c.l.b16 %v2683
        %v2734 = vunpack.c.l.b16 %v2684
        %v2735 = vunpack.c.l.b16 %v2685
        %v2736 = vunpack.c.l.b16 %v2686
        %v2737 = vpack.c.b16 %v2730, %v2729
        %v2738 = vpack.c.b16 %v2732, %v2731
        %v2739 = vpack.c.b16 %v2734, %v2733
        %v2740 = vpack.c.b16 %v2736, %v2735
        %v2746 = vsel %vm475, %v2720, 0
        %2748 = vmatpush.bf16.msra.mxu0 0
        %2749 = vmatpush.bf16.msra.mxu0 0
        %2750 = vmatpush.bf16.msra.mxu0 0
        %2751 = vmatpush.bf16.msra.mxu0 0
        %2752 = vmatpush.bf16.msra.mxu0 %v2740
        %2753 = vmatpush.bf16.msra.mxu0 %v2739
        %2754 = vmatpush.bf16.msra.mxu0 %v2738
        %2755 = vmatpush.bf16.msra.mxu0 %v2737
        %2756 = vmatmul.bf16.gmra.mxu0 %v2746
        %v2757 = vpop.f32.mrf.mxu0
        %v2758 = vadd.f32 0.0, %v2757
        %v2759 = vpop.f32.mrf.mxu0
        %v2760 = vadd.f32 0.0, %v2759
        %2761 = vdwg.mxu0
        %v2770 = vunpack.c.l.b16 %v2671
        %v2771 = vunpack.c.l.b16 %v2672
        %v2772 = vunpack.c.l.b16 %v2673
        %v2773 = vunpack.c.l.b16 %v2674
        %v2774 = vunpack.c.l.b16 %v2675
        %v2775 = vunpack.c.l.b16 %v2676
        %v2776 = vunpack.c.l.b16 %v2677
        %v2777 = vunpack.c.l.b16 %v2678
        %v2778 = vpack.c.b16 %v2771, %v2770
        %v2779 = vpack.c.b16 %v2773, %v2772
        %v2780 = vpack.c.b16 %v2775, %v2774
        %v2781 = vpack.c.b16 %v2777, %v2776
        %v2786 = vsel %vm475, %v2707, 0
        %2788 = vmatpush.bf16.msra.mxu0 0
        %2789 = vmatpush.bf16.msra.mxu0 0
        %2790 = vmatpush.bf16.msra.mxu0 0
        %2791 = vmatpush.bf16.msra.mxu0 0
        %2792 = vmatpush.bf16.msra.mxu0 %v2781
        %2793 = vmatpush.bf16.msra.mxu0 %v2780
        %2794 = vmatpush.bf16.msra.mxu0 %v2779
        %2795 = vmatpush.bf16.msra.mxu0 %v2778
        %2796 = vmatmul.bf16.gmra.mxu0 %v2786
        %v2797 = vpop.f32.mrf.mxu0
        %v2798 = vadd.f32 %v2758, %v2797
        %v2799 = vpop.f32.mrf.mxu0
        %v2800 = vadd.f32 %v2760, %v2799
        %2801 = vdwg.mxu0
        %v2804 = vrot.slane %v2707, 1
        %v2805 = vrot.slane %v2708, 1
        %v2806 = vsel %vm535, %v2804, %v2805
        %v2815 = vunpack.c.l.b16 %v2687
        %v2816 = vunpack.c.l.b16 %v2688
        %v2817 = vunpack.c.l.b16 %v2689
        %v2818 = vunpack.c.l.b16 %v2690
        %v2819 = vunpack.c.l.b16 %v2691
        %v2820 = vunpack.c.l.b16 %v2692
        %v2821 = vunpack.c.l.b16 %v2693
        %v2822 = vunpack.c.l.b16 %v2694
        %v2823 = vpack.c.b16 %v2816, %v2815
        %v2824 = vpack.c.b16 %v2818, %v2817
        %v2825 = vpack.c.b16 %v2820, %v2819
        %v2826 = vpack.c.b16 %v2822, %v2821
        %v2832 = vsel %vm475, %v2806, 0
        %2834 = vmatpush.bf16.msra.mxu0 0
        %2835 = vmatpush.bf16.msra.mxu0 0
        %2836 = vmatpush.bf16.msra.mxu0 0
        %2837 = vmatpush.bf16.msra.mxu0 0
        %2838 = vmatpush.bf16.msra.mxu0 %v2826
        %2839 = vmatpush.bf16.msra.mxu0 %v2825
        %2840 = vmatpush.bf16.msra.mxu0 %v2824
        %2841 = vmatpush.bf16.msra.mxu0 %v2823
        %2842 = vmatmul.bf16.gmra.mxu0 %v2832
        %v2843 = vpop.f32.mrf.mxu0
        %v2844 = vadd.f32 0.0, %v2843
        %v2845 = vpop.f32.mrf.mxu0
        %v2846 = vadd.f32 0.0, %v2845
        %2847 = vdwg.mxu0
        %v2848 = vadd.f32 %v2798, %v2844
        %v2849 = vadd.f32 %v2800, %v2846
        %v2850 = vperm.slane %v2696, 0
        %v2851 = vmul.f32 %v2848, %v2850
        %v2852 = vmul.f32 %v2849, %v2850
        %v2853 = vperm.slane %v2696, 1
        %v2854 = vadd.f32 %v2851, %v2853
        %v2855 = vadd.f32 %v2852, %v2853
        %v2856 = vmax.f32 %v2854, 0.0
        %v2857 = vmax.f32 %v2855, 0.0
        %s2858 = scalar_lea.vmem [#allocation2], 1248
        %v2859 = vld [vmem:[%s2858] sm:$0xf]
        %v2860 = vld [vmem:[%s2858 + $0x4] sm:$0xf]
        %v2861 = vld [vmem:[%s2858 + $0x8] sm:$0xf]
        %v2862 = vld [vmem:[%s2858 + $0xc] sm:$0xf]
        %v2863 = vld [vmem:[%s2858 + $0x10] sm:$0xf]
        %v2864 = vld [vmem:[%s2858 + $0x14] sm:$0xf]
        %v2865 = vld [vmem:[%s2858 + $0x18] sm:$0xf]
        %v2866 = vld [vmem:[%s2858 + $0x1c] sm:$0xf]
        %v2867 = vld [vmem:[%s2858 + $0x20] sm:$0xf]
        %v2868 = vld [vmem:[%s2858 + $0x24] sm:$0xf]
        %v2869 = vld [vmem:[%s2858 + $0x28] sm:$0xf]
        %v2870 = vld [vmem:[%s2858 + $0x2c] sm:$0xf]
        %v2871 = vld [vmem:[%s2858 + $0x30] sm:$0xf]
        %v2872 = vld [vmem:[%s2858 + $0x34] sm:$0xf]
        %v2873 = vld [vmem:[%s2858 + $0x38] sm:$0xf]
        %v2874 = vld [vmem:[%s2858 + $0x3c] sm:$0xf]
        %v2875 = vld [vmem:[%s2858 + $0x40] sm:$0xf]
        %v2876 = vld [vmem:[%s2858 + $0x44] sm:$0xf]
        %v2877 = vld [vmem:[%s2858 + $0x48] sm:$0xf]
        %v2878 = vld [vmem:[%s2858 + $0x4c] sm:$0xf]
        %v2879 = vld [vmem:[%s2858 + $0x50] sm:$0xf]
        %v2880 = vld [vmem:[%s2858 + $0x54] sm:$0xf]
        %v2881 = vld [vmem:[%s2858 + $0x58] sm:$0xf]
        %v2882 = vld [vmem:[%s2858 + $0x5c] sm:$0xf]
        %s2883 = scalar_lea.vmem [#allocation5], 26
        %v2884 = vld [vmem:[%s2883] sm:$0x3]
        %v2887 = vrot.slane %v2856, 7
        %v2888 = vrot.slane %v2857, 7
        %v2889 = vsel %vm427, %v2887, %v2888
        %v2893 = vsel %vm427, 0.0, %v2887
        %v2894 = vsel %vm427, %v2888, 0.0
        %v2895 = vpack.c.bf16 %v2889, %v2893
        %v2896 = vpack.c.bf16 %v2894, %v2894
        %v2898 = vshrl.u32 %v2895, 16
        %v2900 = vshll.u32 %v2895, 16
        %v2902 = vrot.slane %v2900, 1
        %v2903 = vor.u32 %v2898, %v2902
        %v2905 = vshll.u32 %v2896, 16
        %v2907 = vrot.slane %v2905, 1
        %v2908 = vsel %vm438, %v2903, %v2907
        %v2917 = vunpack.c.l.b16 %v2867
        %v2918 = vunpack.c.l.b16 %v2868
        %v2919 = vunpack.c.l.b16 %v2869
        %v2920 = vunpack.c.l.b16 %v2870
        %v2921 = vunpack.c.l.b16 %v2871
        %v2922 = vunpack.c.l.b16 %v2872
        %v2923 = vunpack.c.l.b16 %v2873
        %v2924 = vunpack.c.l.b16 %v2874
        %v2925 = vpack.c.b16 %v2918, %v2917
        %v2926 = vpack.c.b16 %v2920, %v2919
        %v2927 = vpack.c.b16 %v2922, %v2921
        %v2928 = vpack.c.b16 %v2924, %v2923
        %v2934 = vsel %vm475, %v2908, 0
        %2936 = vmatpush.bf16.msra.mxu0 0
        %2937 = vmatpush.bf16.msra.mxu0 0
        %2938 = vmatpush.bf16.msra.mxu0 0
        %2939 = vmatpush.bf16.msra.mxu0 0
        %2940 = vmatpush.bf16.msra.mxu0 %v2928
        %2941 = vmatpush.bf16.msra.mxu0 %v2927
        %2942 = vmatpush.bf16.msra.mxu0 %v2926
        %2943 = vmatpush.bf16.msra.mxu0 %v2925
        %2944 = vmatmul.bf16.gmra.mxu0 %v2934
        %v2945 = vpop.f32.mrf.mxu0
        %v2946 = vadd.f32 0.0, %v2945
        %v2947 = vpop.f32.mrf.mxu0
        %v2948 = vadd.f32 0.0, %v2947
        %2949 = vdwg.mxu0
        %v2958 = vunpack.c.l.b16 %v2859
        %v2959 = vunpack.c.l.b16 %v2860
        %v2960 = vunpack.c.l.b16 %v2861
        %v2961 = vunpack.c.l.b16 %v2862
        %v2962 = vunpack.c.l.b16 %v2863
        %v2963 = vunpack.c.l.b16 %v2864
        %v2964 = vunpack.c.l.b16 %v2865
        %v2965 = vunpack.c.l.b16 %v2866
        %v2966 = vpack.c.b16 %v2959, %v2958
        %v2967 = vpack.c.b16 %v2961, %v2960
        %v2968 = vpack.c.b16 %v2963, %v2962
        %v2969 = vpack.c.b16 %v2965, %v2964
        %v2974 = vsel %vm475, %v2895, 0
        %2976 = vmatpush.bf16.msra.mxu0 0
        %2977 = vmatpush.bf16.msra.mxu0 0
        %2978 = vmatpush.bf16.msra.mxu0 0
        %2979 = vmatpush.bf16.msra.mxu0 0
        %2980 = vmatpush.bf16.msra.mxu0 %v2969
        %2981 = vmatpush.bf16.msra.mxu0 %v2968
        %2982 = vmatpush.bf16.msra.mxu0 %v2967
        %2983 = vmatpush.bf16.msra.mxu0 %v2966
        %2984 = vmatmul.bf16.gmra.mxu0 %v2974
        %v2985 = vpop.f32.mrf.mxu0
        %v2986 = vadd.f32 %v2946, %v2985
        %v2987 = vpop.f32.mrf.mxu0
        %v2988 = vadd.f32 %v2948, %v2987
        %2989 = vdwg.mxu0
        %v2992 = vrot.slane %v2895, 1
        %v2993 = vrot.slane %v2896, 1
        %v2994 = vsel %vm535, %v2992, %v2993
        %v3003 = vunpack.c.l.b16 %v2875
        %v3004 = vunpack.c.l.b16 %v2876
        %v3005 = vunpack.c.l.b16 %v2877
        %v3006 = vunpack.c.l.b16 %v2878
        %v3007 = vunpack.c.l.b16 %v2879
        %v3008 = vunpack.c.l.b16 %v2880
        %v3009 = vunpack.c.l.b16 %v2881
        %v3010 = vunpack.c.l.b16 %v2882
        %v3011 = vpack.c.b16 %v3004, %v3003
        %v3012 = vpack.c.b16 %v3006, %v3005
        %v3013 = vpack.c.b16 %v3008, %v3007
        %v3014 = vpack.c.b16 %v3010, %v3009
        %v3020 = vsel %vm475, %v2994, 0
        %3022 = vmatpush.bf16.msra.mxu0 0
        %3023 = vmatpush.bf16.msra.mxu0 0
        %3024 = vmatpush.bf16.msra.mxu0 0
        %3025 = vmatpush.bf16.msra.mxu0 0
        %3026 = vmatpush.bf16.msra.mxu0 %v3014
        %3027 = vmatpush.bf16.msra.mxu0 %v3013
        %3028 = vmatpush.bf16.msra.mxu0 %v3012
        %3029 = vmatpush.bf16.msra.mxu0 %v3011
        %3030 = vmatmul.bf16.gmra.mxu0 %v3020
        %v3031 = vpop.f32.mrf.mxu0
        %v3032 = vadd.f32 0.0, %v3031
        %v3033 = vpop.f32.mrf.mxu0
        %v3034 = vadd.f32 0.0, %v3033
        %3035 = vdwg.mxu0
        %v3036 = vadd.f32 %v2986, %v3032
        %v3037 = vadd.f32 %v2988, %v3034
        %v3038 = vperm.slane %v2884, 0
        %v3039 = vmul.f32 %v3036, %v3038
        %v3040 = vmul.f32 %v3037, %v3038
        %v3041 = vperm.slane %v2884, 1
        %v3042 = vadd.f32 %v3039, %v3041
        %v3043 = vadd.f32 %v3040, %v3041
        %v3044 = vadd.f32 %v3042, %v2668
        %v3045 = vadd.f32 %v3043, %v2669
        %v3046 = vmax.f32 %v3044, 0.0
        %v3047 = vmax.f32 %v3045, 0.0
        %s3048 = scalar_lea.vmem [#allocation2], 1344
        %v3049 = vld [vmem:[%s3048] sm:$0xf]
        %v3050 = vld [vmem:[%s3048 + $0x4] sm:$0xf]
        %v3051 = vld [vmem:[%s3048 + $0x8] sm:$0xf]
        %v3052 = vld [vmem:[%s3048 + $0xc] sm:$0xf]
        %v3053 = vld [vmem:[%s3048 + $0x10] sm:$0xf]
        %v3054 = vld [vmem:[%s3048 + $0x14] sm:$0xf]
        %v3055 = vld [vmem:[%s3048 + $0x18] sm:$0xf]
        %v3056 = vld [vmem:[%s3048 + $0x1c] sm:$0xf]
        %v3057 = vld [vmem:[%s3048 + $0x20] sm:$0xf]
        %v3058 = vld [vmem:[%s3048 + $0x24] sm:$0xf]
        %v3059 = vld [vmem:[%s3048 + $0x28] sm:$0xf]
        %v3060 = vld [vmem:[%s3048 + $0x2c] sm:$0xf]
        %v3061 = vld [vmem:[%s3048 + $0x30] sm:$0xf]
        %v3062 = vld [vmem:[%s3048 + $0x34] sm:$0xf]
        %v3063 = vld [vmem:[%s3048 + $0x38] sm:$0xf]
        %v3064 = vld [vmem:[%s3048 + $0x3c] sm:$0xf]
        %v3065 = vld [vmem:[%s3048 + $0x40] sm:$0xf]
        %v3066 = vld [vmem:[%s3048 + $0x44] sm:$0xf]
        %v3067 = vld [vmem:[%s3048 + $0x48] sm:$0xf]
        %v3068 = vld [vmem:[%s3048 + $0x4c] sm:$0xf]
        %v3069 = vld [vmem:[%s3048 + $0x50] sm:$0xf]
        %v3070 = vld [vmem:[%s3048 + $0x54] sm:$0xf]
        %v3071 = vld [vmem:[%s3048 + $0x58] sm:$0xf]
        %v3072 = vld [vmem:[%s3048 + $0x5c] sm:$0xf]
        %s3073 = scalar_lea.vmem [#allocation5], 28
        %v3074 = vld [vmem:[%s3073] sm:$0x3]
        %v3077 = vrot.slane %v3046, 7
        %v3078 = vrot.slane %v3047, 7
        %v3079 = vsel %vm427, %v3077, %v3078
        %v3083 = vsel %vm427, 0.0, %v3077
        %v3084 = vsel %vm427, %v3078, 0.0
        %v3085 = vpack.c.bf16 %v3079, %v3083
        %v3086 = vpack.c.bf16 %v3084, %v3084
        %v3088 = vshrl.u32 %v3085, 16
        %v3090 = vshll.u32 %v3085, 16
        %v3092 = vrot.slane %v3090, 1
        %v3093 = vor.u32 %v3088, %v3092
        %v3095 = vshll.u32 %v3086, 16
        %v3097 = vrot.slane %v3095, 1
        %v3098 = vsel %vm438, %v3093, %v3097
        %v3107 = vunpack.c.l.b16 %v3057
        %v3108 = vunpack.c.l.b16 %v3058
        %v3109 = vunpack.c.l.b16 %v3059
        %v3110 = vunpack.c.l.b16 %v3060
        %v3111 = vunpack.c.l.b16 %v3061
        %v3112 = vunpack.c.l.b16 %v3062
        %v3113 = vunpack.c.l.b16 %v3063
        %v3114 = vunpack.c.l.b16 %v3064
        %v3115 = vpack.c.b16 %v3108, %v3107
        %v3116 = vpack.c.b16 %v3110, %v3109
        %v3117 = vpack.c.b16 %v3112, %v3111
        %v3118 = vpack.c.b16 %v3114, %v3113
        %v3124 = vsel %vm475, %v3098, 0
        %3126 = vmatpush.bf16.msra.mxu0 0
        %3127 = vmatpush.bf16.msra.mxu0 0
        %3128 = vmatpush.bf16.msra.mxu0 0
        %3129 = vmatpush.bf16.msra.mxu0 0
        %3130 = vmatpush.bf16.msra.mxu0 %v3118
        %3131 = vmatpush.bf16.msra.mxu0 %v3117
        %3132 = vmatpush.bf16.msra.mxu0 %v3116
        %3133 = vmatpush.bf16.msra.mxu0 %v3115
        %3134 = vmatmul.bf16.gmra.mxu0 %v3124
        %v3135 = vpop.f32.mrf.mxu0
        %v3136 = vadd.f32 0.0, %v3135
        %v3137 = vpop.f32.mrf.mxu0
        %v3138 = vadd.f32 0.0, %v3137
        %3139 = vdwg.mxu0
        %v3148 = vunpack.c.l.b16 %v3049
        %v3149 = vunpack.c.l.b16 %v3050
        %v3150 = vunpack.c.l.b16 %v3051
        %v3151 = vunpack.c.l.b16 %v3052
        %v3152 = vunpack.c.l.b16 %v3053
        %v3153 = vunpack.c.l.b16 %v3054
        %v3154 = vunpack.c.l.b16 %v3055
        %v3155 = vunpack.c.l.b16 %v3056
        %v3156 = vpack.c.b16 %v3149, %v3148
        %v3157 = vpack.c.b16 %v3151, %v3150
        %v3158 = vpack.c.b16 %v3153, %v3152
        %v3159 = vpack.c.b16 %v3155, %v3154
        %v3164 = vsel %vm475, %v3085, 0
        %3166 = vmatpush.bf16.msra.mxu0 0
        %3167 = vmatpush.bf16.msra.mxu0 0
        %3168 = vmatpush.bf16.msra.mxu0 0
        %3169 = vmatpush.bf16.msra.mxu0 0
        %3170 = vmatpush.bf16.msra.mxu0 %v3159
        %3171 = vmatpush.bf16.msra.mxu0 %v3158
        %3172 = vmatpush.bf16.msra.mxu0 %v3157
        %3173 = vmatpush.bf16.msra.mxu0 %v3156
        %3174 = vmatmul.bf16.gmra.mxu0 %v3164
        %v3175 = vpop.f32.mrf.mxu0
        %v3176 = vadd.f32 %v3136, %v3175
        %v3177 = vpop.f32.mrf.mxu0
        %v3178 = vadd.f32 %v3138, %v3177
        %3179 = vdwg.mxu0
        %v3182 = vrot.slane %v3085, 1
        %v3183 = vrot.slane %v3086, 1
        %v3184 = vsel %vm535, %v3182, %v3183
        %v3193 = vunpack.c.l.b16 %v3065
        %v3194 = vunpack.c.l.b16 %v3066
        %v3195 = vunpack.c.l.b16 %v3067
        %v3196 = vunpack.c.l.b16 %v3068
        %v3197 = vunpack.c.l.b16 %v3069
        %v3198 = vunpack.c.l.b16 %v3070
        %v3199 = vunpack.c.l.b16 %v3071
        %v3200 = vunpack.c.l.b16 %v3072
        %v3201 = vpack.c.b16 %v3194, %v3193
        %v3202 = vpack.c.b16 %v3196, %v3195
        %v3203 = vpack.c.b16 %v3198, %v3197
        %v3204 = vpack.c.b16 %v3200, %v3199
        %v3210 = vsel %vm475, %v3184, 0
        %3212 = vmatpush.bf16.msra.mxu0 0
        %3213 = vmatpush.bf16.msra.mxu0 0
        %3214 = vmatpush.bf16.msra.mxu0 0
        %3215 = vmatpush.bf16.msra.mxu0 0
        %3216 = vmatpush.bf16.msra.mxu0 %v3204
        %3217 = vmatpush.bf16.msra.mxu0 %v3203
        %3218 = vmatpush.bf16.msra.mxu0 %v3202
        %3219 = vmatpush.bf16.msra.mxu0 %v3201
        %3220 = vmatmul.bf16.gmra.mxu0 %v3210
        %v3221 = vpop.f32.mrf.mxu0
        %v3222 = vadd.f32 0.0, %v3221
        %v3223 = vpop.f32.mrf.mxu0
        %v3224 = vadd.f32 0.0, %v3223
        %3225 = vdwg.mxu0
        %v3226 = vadd.f32 %v3176, %v3222
        %v3227 = vadd.f32 %v3178, %v3224
        %v3228 = vperm.slane %v3074, 0
        %v3229 = vmul.f32 %v3226, %v3228
        %v3230 = vmul.f32 %v3227, %v3228
        %v3231 = vperm.slane %v3074, 1
        %v3232 = vadd.f32 %v3229, %v3231
        %v3233 = vadd.f32 %v3230, %v3231
        %v3234 = vmax.f32 %v3232, 0.0
        %v3235 = vmax.f32 %v3233, 0.0
        %s3236 = scalar_lea.vmem [#allocation2], 1440
        %v3237 = vld [vmem:[%s3236] sm:$0xf]
        %v3238 = vld [vmem:[%s3236 + $0x4] sm:$0xf]
        %v3239 = vld [vmem:[%s3236 + $0x8] sm:$0xf]
        %v3240 = vld [vmem:[%s3236 + $0xc] sm:$0xf]
        %v3241 = vld [vmem:[%s3236 + $0x10] sm:$0xf]
        %v3242 = vld [vmem:[%s3236 + $0x14] sm:$0xf]
        %v3243 = vld [vmem:[%s3236 + $0x18] sm:$0xf]
        %v3244 = vld [vmem:[%s3236 + $0x1c] sm:$0xf]
        %v3245 = vld [vmem:[%s3236 + $0x20] sm:$0xf]
        %v3246 = vld [vmem:[%s3236 + $0x24] sm:$0xf]
        %v3247 = vld [vmem:[%s3236 + $0x28] sm:$0xf]
        %v3248 = vld [vmem:[%s3236 + $0x2c] sm:$0xf]
        %v3249 = vld [vmem:[%s3236 + $0x30] sm:$0xf]
        %v3250 = vld [vmem:[%s3236 + $0x34] sm:$0xf]
        %v3251 = vld [vmem:[%s3236 + $0x38] sm:$0xf]
        %v3252 = vld [vmem:[%s3236 + $0x3c] sm:$0xf]
        %v3253 = vld [vmem:[%s3236 + $0x40] sm:$0xf]
        %v3254 = vld [vmem:[%s3236 + $0x44] sm:$0xf]
        %v3255 = vld [vmem:[%s3236 + $0x48] sm:$0xf]
        %v3256 = vld [vmem:[%s3236 + $0x4c] sm:$0xf]
        %v3257 = vld [vmem:[%s3236 + $0x50] sm:$0xf]
        %v3258 = vld [vmem:[%s3236 + $0x54] sm:$0xf]
        %v3259 = vld [vmem:[%s3236 + $0x58] sm:$0xf]
        %v3260 = vld [vmem:[%s3236 + $0x5c] sm:$0xf]
        %s3261 = scalar_lea.vmem [#allocation5], 30
        %v3262 = vld [vmem:[%s3261] sm:$0x3]
        %v3265 = vrot.slane %v3234, 7
        %v3266 = vrot.slane %v3235, 7
        %v3267 = vsel %vm427, %v3265, %v3266
        %v3271 = vsel %vm427, 0.0, %v3265
        %v3272 = vsel %vm427, %v3266, 0.0
        %v3273 = vpack.c.bf16 %v3267, %v3271
        %v3274 = vpack.c.bf16 %v3272, %v3272
        %v3276 = vshrl.u32 %v3273, 16
        %v3278 = vshll.u32 %v3273, 16
        %v3280 = vrot.slane %v3278, 1
        %v3281 = vor.u32 %v3276, %v3280
        %v3283 = vshll.u32 %v3274, 16
        %v3285 = vrot.slane %v3283, 1
        %v3286 = vsel %vm438, %v3281, %v3285
        %v3295 = vunpack.c.l.b16 %v3245
        %v3296 = vunpack.c.l.b16 %v3246
        %v3297 = vunpack.c.l.b16 %v3247
        %v3298 = vunpack.c.l.b16 %v3248
        %v3299 = vunpack.c.l.b16 %v3249
        %v3300 = vunpack.c.l.b16 %v3250
        %v3301 = vunpack.c.l.b16 %v3251
        %v3302 = vunpack.c.l.b16 %v3252
        %v3303 = vpack.c.b16 %v3296, %v3295
        %v3304 = vpack.c.b16 %v3298, %v3297
        %v3305 = vpack.c.b16 %v3300, %v3299
        %v3306 = vpack.c.b16 %v3302, %v3301
        %v3312 = vsel %vm475, %v3286, 0
        %3314 = vmatpush.bf16.msra.mxu0 0
        %3315 = vmatpush.bf16.msra.mxu0 0
        %3316 = vmatpush.bf16.msra.mxu0 0
        %3317 = vmatpush.bf16.msra.mxu0 0
        %3318 = vmatpush.bf16.msra.mxu0 %v3306
        %3319 = vmatpush.bf16.msra.mxu0 %v3305
        %3320 = vmatpush.bf16.msra.mxu0 %v3304
        %3321 = vmatpush.bf16.msra.mxu0 %v3303
        %3322 = vmatmul.bf16.gmra.mxu0 %v3312
        %v3323 = vpop.f32.mrf.mxu0
        %v3324 = vadd.f32 0.0, %v3323
        %v3325 = vpop.f32.mrf.mxu0
        %v3326 = vadd.f32 0.0, %v3325
        %3327 = vdwg.mxu0
        %v3336 = vunpack.c.l.b16 %v3237
        %v3337 = vunpack.c.l.b16 %v3238
        %v3338 = vunpack.c.l.b16 %v3239
        %v3339 = vunpack.c.l.b16 %v3240
        %v3340 = vunpack.c.l.b16 %v3241
        %v3341 = vunpack.c.l.b16 %v3242
        %v3342 = vunpack.c.l.b16 %v3243
        %v3343 = vunpack.c.l.b16 %v3244
        %v3344 = vpack.c.b16 %v3337, %v3336
        %v3345 = vpack.c.b16 %v3339, %v3338
        %v3346 = vpack.c.b16 %v3341, %v3340
        %v3347 = vpack.c.b16 %v3343, %v3342
        %v3352 = vsel %vm475, %v3273, 0
        %3354 = vmatpush.bf16.msra.mxu0 0
        %3355 = vmatpush.bf16.msra.mxu0 0
        %3356 = vmatpush.bf16.msra.mxu0 0
        %3357 = vmatpush.bf16.msra.mxu0 0
        %3358 = vmatpush.bf16.msra.mxu0 %v3347
        %3359 = vmatpush.bf16.msra.mxu0 %v3346
        %3360 = vmatpush.bf16.msra.mxu0 %v3345
        %3361 = vmatpush.bf16.msra.mxu0 %v3344
        %3362 = vmatmul.bf16.gmra.mxu0 %v3352
        %v3363 = vpop.f32.mrf.mxu0
        %v3364 = vadd.f32 %v3324, %v3363
        %v3365 = vpop.f32.mrf.mxu0
        %v3366 = vadd.f32 %v3326, %v3365
        %3367 = vdwg.mxu0
        %v3370 = vrot.slane %v3273, 1
        %v3371 = vrot.slane %v3274, 1
        %v3372 = vsel %vm535, %v3370, %v3371
        %v3381 = vunpack.c.l.b16 %v3253
        %v3382 = vunpack.c.l.b16 %v3254
        %v3383 = vunpack.c.l.b16 %v3255
        %v3384 = vunpack.c.l.b16 %v3256
        %v3385 = vunpack.c.l.b16 %v3257
        %v3386 = vunpack.c.l.b16 %v3258
        %v3387 = vunpack.c.l.b16 %v3259
        %v3388 = vunpack.c.l.b16 %v3260
        %v3389 = vpack.c.b16 %v3382, %v3381
        %v3390 = vpack.c.b16 %v3384, %v3383
        %v3391 = vpack.c.b16 %v3386, %v3385
        %v3392 = vpack.c.b16 %v3388, %v3387
        %v3398 = vsel %vm475, %v3372, 0
        %3400 = vmatpush.bf16.msra.mxu0 0
        %3401 = vmatpush.bf16.msra.mxu0 0
        %3402 = vmatpush.bf16.msra.mxu0 0
        %3403 = vmatpush.bf16.msra.mxu0 0
        %3404 = vmatpush.bf16.msra.mxu0 %v3392
        %3405 = vmatpush.bf16.msra.mxu0 %v3391
        %3406 = vmatpush.bf16.msra.mxu0 %v3390
        %3407 = vmatpush.bf16.msra.mxu0 %v3389
        %3408 = vmatmul.bf16.gmra.mxu0 %v3398
        %v3409 = vpop.f32.mrf.mxu0
        %v3410 = vadd.f32 0.0, %v3409
        %v3411 = vpop.f32.mrf.mxu0
        %v3412 = vadd.f32 0.0, %v3411
        %3413 = vdwg.mxu0
        %v3414 = vadd.f32 %v3364, %v3410
        %v3415 = vadd.f32 %v3366, %v3412
        %v3416 = vperm.slane %v3262, 0
        %v3417 = vmul.f32 %v3414, %v3416
        %v3418 = vmul.f32 %v3415, %v3416
        %v3419 = vperm.slane %v3262, 1
        %v3420 = vadd.f32 %v3417, %v3419
        %v3421 = vadd.f32 %v3418, %v3419
        %v3422 = vadd.f32 %v3420, %v3046
        %v3423 = vadd.f32 %v3421, %v3047
        %v3424 = vmax.f32 %v3422, 0.0
        %v3425 = vmax.f32 %v3423, 0.0
        %s3426 = scalar_lea.vmem %s3, 96
        %v3427 = vld [vmem:[%s3426] sm:$0xf]
        %v3428 = vld [vmem:[%s3426 + $0x4] sm:$0xf]
        %v3429 = vld [vmem:[%s3426 + $0x8] sm:$0xf]
        %v3430 = vld [vmem:[%s3426 + $0xc] sm:$0xf]
        %v3431 = vld [vmem:[%s3426 + $0x10] sm:$0xf]
        %v3432 = vld [vmem:[%s3426 + $0x14] sm:$0xf]
        %v3433 = vld [vmem:[%s3426 + $0x18] sm:$0xf]
        %v3434 = vld [vmem:[%s3426 + $0x1c] sm:$0xf]
        %v3435 = vld [vmem:[%s3426 + $0x20] sm:$0xf]
        %v3436 = vld [vmem:[%s3426 + $0x24] sm:$0xf]
        %v3437 = vld [vmem:[%s3426 + $0x28] sm:$0xf]
        %v3438 = vld [vmem:[%s3426 + $0x2c] sm:$0xf]
        %v3439 = vld [vmem:[%s3426 + $0x30] sm:$0xf]
        %v3440 = vld [vmem:[%s3426 + $0x34] sm:$0xf]
        %v3441 = vld [vmem:[%s3426 + $0x38] sm:$0xf]
        %v3442 = vld [vmem:[%s3426 + $0x3c] sm:$0xf]
        %v3443 = vld [vmem:[%s3426 + $0x40] sm:$0xf]
        %v3444 = vld [vmem:[%s3426 + $0x44] sm:$0xf]
        %v3445 = vld [vmem:[%s3426 + $0x48] sm:$0xf]
        %v3446 = vld [vmem:[%s3426 + $0x4c] sm:$0xf]
        %v3447 = vld [vmem:[%s3426 + $0x50] sm:$0xf]
        %v3448 = vld [vmem:[%s3426 + $0x54] sm:$0xf]
        %v3449 = vld [vmem:[%s3426 + $0x58] sm:$0xf]
        %v3450 = vld [vmem:[%s3426 + $0x5c] sm:$0xf]
        %s3451 = scalar_lea.vmem %s4, 2
        %v3452 = vld [vmem:[%s3451] sm:$0x3]
        %v3455 = vrot.slane %v3424, 7
        %v3456 = vrot.slane %v3425, 7
        %v3457 = vsel %vm427, %v3455, %v3456
        %v3461 = vsel %vm427, 0.0, %v3455
        %v3462 = vsel %vm427, %v3456, 0.0
        %v3463 = vld [vmem:[#allocation8] sm:$0xff]
        %vm3464 = vcmask 146432
        %v3466 = vsel %vm3464, %v3463, 0
        %vm3468 = vcmask 1041408
        %v3470 = vsel %vm3468, %v3462, 0
        %3472 = vmatpush.msra.mxu0 0.0
        %3473 = vmatpush.msra.mxu0 0.0
        %3474 = vmatpush.msra.mxu0 0.0
        %3475 = vmatpush.msra.mxu0 0.0
        %3476 = vmatpush.msra.mxu0 0.0
        %3477 = vmatpush.msra.mxu0 0.0
        %3478 = vmatpush.msra.mxu0 0.0
        %3479 = vmatpush.msra.mxu0 0.0
        %3480 = vmatpush.msra.mxu0 0.0
        %3481 = vmatpush.msra.mxu0 0.0
        %3482 = vmatpush.msra.mxu0 0.0
        %3483 = vmatpush.msra.mxu0 0.0
        %3484 = vmatpush.msra.mxu0 0.0
        %3485 = vmatpush.msra.mxu0 %v3470
        %3486 = vmatpush.msra.mxu0 %v3457
        %3487 = vmatpush.msra.mxu0 %v3461
        %3488 = vmatmul.f32.gmra.mxu0 %v3466
        %v3489 = vpop.f32.mrf.mxu0
        %v3490 = vadd.f32 0.0, %v3489
        %3491 = vdwg.mxu0
        %v3492 = vpack.c.bf16 %v3490, %v3490
        %s3493 = scalar_lea.vmem [#allocation8], 8
        %v3494 = vld [vmem:[%s3493] sm:$0xff]
        %v3496 = vsel %vm3464, %v3494, 0
        %3498 = vmatpush.msra.mxu0 0.0
        %3499 = vmatpush.msra.mxu0 0.0
        %3500 = vmatpush.msra.mxu0 0.0
        %3501 = vmatpush.msra.mxu0 0.0
        %3502 = vmatpush.msra.mxu0 0.0
        %3503 = vmatpush.msra.mxu0 0.0
        %3504 = vmatpush.msra.mxu0 0.0
        %3505 = vmatpush.msra.mxu0 0.0
        %3506 = vmatpush.msra.mxu0 0.0
        %3507 = vmatpush.msra.mxu0 0.0
        %3508 = vmatpush.msra.mxu0 0.0
        %3509 = vmatpush.msra.mxu0 0.0
        %3510 = vmatpush.msra.mxu0 0.0
        %3511 = vmatpush.msra.mxu0 %v3470
        %3512 = vmatpush.msra.mxu0 %v3457
        %3513 = vmatpush.msra.mxu0 %v3461
        %3514 = vmatmul.f32.gmra.mxu0 %v3496
        %v3515 = vpop.f32.mrf.mxu0
        %v3516 = vadd.f32 0.0, %v3515
        %3517 = vdwg.mxu0
        %v3518 = vpack.c.bf16 %v3516, %v3516
        %v3527 = vunpack.c.l.b16 %v3435
        %v3528 = vunpack.c.l.b16 %v3436
        %v3529 = vunpack.c.l.b16 %v3437
        %v3530 = vunpack.c.l.b16 %v3438
        %v3531 = vunpack.c.l.b16 %v3439
        %v3532 = vunpack.c.l.b16 %v3440
        %v3533 = vunpack.c.l.b16 %v3441
        %v3534 = vunpack.c.l.b16 %v3442
        %v3535 = vpack.c.b16 %v3528, %v3527
        %v3536 = vpack.c.b16 %v3530, %v3529
        %v3537 = vpack.c.b16 %v3532, %v3531
        %v3538 = vpack.c.b16 %v3534, %v3533
        %v3544 = vsel %vm475, %v3518, 0
        %3546 = vmatpush.bf16.msra.mxu0 0
        %3547 = vmatpush.bf16.msra.mxu0 0
        %3548 = vmatpush.bf16.msra.mxu0 0
        %3549 = vmatpush.bf16.msra.mxu0 0
        %3550 = vmatpush.bf16.msra.mxu0 %v3538
        %3551 = vmatpush.bf16.msra.mxu0 %v3537
        %3552 = vmatpush.bf16.msra.mxu0 %v3536
        %3553 = vmatpush.bf16.msra.mxu0 %v3535
        %3554 = vmatmul.bf16.gmra.mxu0 %v3544
        %v3555 = vpop.f32.mrf.mxu0
        %v3556 = vadd.f32 0.0, %v3555
        %v3557 = vpop.f32.mrf.mxu0
        %3558 = vdwg.mxu0
        %v3567 = vunpack.c.l.b16 %v3427
        %v3568 = vunpack.c.l.b16 %v3428
        %v3569 = vunpack.c.l.b16 %v3429
        %v3570 = vunpack.c.l.b16 %v3430
        %v3571 = vunpack.c.l.b16 %v3431
        %v3572 = vunpack.c.l.b16 %v3432
        %v3573 = vunpack.c.l.b16 %v3433
        %v3574 = vunpack.c.l.b16 %v3434
        %v3575 = vpack.c.b16 %v3568, %v3567
        %v3576 = vpack.c.b16 %v3570, %v3569
        %v3577 = vpack.c.b16 %v3572, %v3571
        %v3578 = vpack.c.b16 %v3574, %v3573
        %v3584 = vsel %vm475, %v3492, 0
        %3586 = vmatpush.bf16.msra.mxu0 0
        %3587 = vmatpush.bf16.msra.mxu0 0
        %3588 = vmatpush.bf16.msra.mxu0 0
        %3589 = vmatpush.bf16.msra.mxu0 0
        %3590 = vmatpush.bf16.msra.mxu0 %v3578
        %3591 = vmatpush.bf16.msra.mxu0 %v3577
        %3592 = vmatpush.bf16.msra.mxu0 %v3576
        %3593 = vmatpush.bf16.msra.mxu0 %v3575
        %3594 = vmatmul.bf16.gmra.mxu0 %v3584
        %v3595 = vpop.f32.mrf.mxu0
        %v3596 = vadd.f32 %v3556, %v3595
        %v3597 = vpop.f32.mrf.mxu0
        %3598 = vdwg.mxu0
        %s3599 = scalar_lea.vmem [#allocation8], 16
        %v3600 = vld [vmem:[%s3599] sm:$0xff]
        %v3602 = vsel %vm3464, %v3600, 0
        %3604 = vmatpush.msra.mxu0 0.0
        %3605 = vmatpush.msra.mxu0 0.0
        %3606 = vmatpush.msra.mxu0 0.0
        %3607 = vmatpush.msra.mxu0 0.0
        %3608 = vmatpush.msra.mxu0 0.0
        %3609 = vmatpush.msra.mxu0 0.0
        %3610 = vmatpush.msra.mxu0 0.0
        %3611 = vmatpush.msra.mxu0 0.0
        %3612 = vmatpush.msra.mxu0 0.0
        %3613 = vmatpush.msra.mxu0 0.0
        %3614 = vmatpush.msra.mxu0 0.0
        %3615 = vmatpush.msra.mxu0 0.0
        %3616 = vmatpush.msra.mxu0 0.0
        %3617 = vmatpush.msra.mxu0 %v3470
        %3618 = vmatpush.msra.mxu0 %v3457
        %3619 = vmatpush.msra.mxu0 %v3461
        %3620 = vmatmul.f32.gmra.mxu0 %v3602
        %v3621 = vpop.f32.mrf.mxu0
        %v3622 = vadd.f32 0.0, %v3621
        %3623 = vdwg.mxu0
        %v3624 = vpack.c.bf16 %v3622, %v3622
        %v3633 = vunpack.c.l.b16 %v3443
        %v3634 = vunpack.c.l.b16 %v3444
        %v3635 = vunpack.c.l.b16 %v3445
        %v3636 = vunpack.c.l.b16 %v3446
        %v3637 = vunpack.c.l.b16 %v3447
        %v3638 = vunpack.c.l.b16 %v3448
        %v3639 = vunpack.c.l.b16 %v3449
        %v3640 = vunpack.c.l.b16 %v3450
        %v3641 = vpack.c.b16 %v3634, %v3633
        %v3642 = vpack.c.b16 %v3636, %v3635
        %v3643 = vpack.c.b16 %v3638, %v3637
        %v3644 = vpack.c.b16 %v3640, %v3639
        %v3650 = vsel %vm475, %v3624, 0
        %3652 = vmatpush.bf16.msra.mxu0 0
        %3653 = vmatpush.bf16.msra.mxu0 0
        %3654 = vmatpush.bf16.msra.mxu0 0
        %3655 = vmatpush.bf16.msra.mxu0 0
        %3656 = vmatpush.bf16.msra.mxu0 %v3644
        %3657 = vmatpush.bf16.msra.mxu0 %v3643
        %3658 = vmatpush.bf16.msra.mxu0 %v3642
        %3659 = vmatpush.bf16.msra.mxu0 %v3641
        %3660 = vmatmul.bf16.gmra.mxu0 %v3650
        %v3661 = vpop.f32.mrf.mxu0
        %v3662 = vadd.f32 0.0, %v3661
        %v3663 = vpop.f32.mrf.mxu0
        %3664 = vdwg.mxu0
        %v3665 = vadd.f32 %v3596, %v3662
        %v3666 = vperm.slane %v3452, 0
        %v3667 = vmul.f32 %v3665, %v3666
        %v3668 = vperm.slane %v3452, 1
        %v3669 = vadd.f32 %v3667, %v3668
        %v3670 = vld [vmem:[%s3] sm:$0xf]
        %v3671 = vld [vmem:[%s3 + $0x4] sm:$0xf]
        %v3672 = vld [vmem:[%s3 + $0x8] sm:$0xf]
        %v3673 = vld [vmem:[%s3 + $0xc] sm:$0xf]
        %v3674 = vld [vmem:[%s3 + $0x10] sm:$0xf]
        %v3675 = vld [vmem:[%s3 + $0x14] sm:$0xf]
        %v3676 = vld [vmem:[%s3 + $0x18] sm:$0xf]
        %v3677 = vld [vmem:[%s3 + $0x1c] sm:$0xf]
        %v3678 = vld [vmem:[%s3 + $0x20] sm:$0xf]
        %v3679 = vld [vmem:[%s3 + $0x24] sm:$0xf]
        %v3680 = vld [vmem:[%s3 + $0x28] sm:$0xf]
        %v3681 = vld [vmem:[%s3 + $0x2c] sm:$0xf]
        %v3682 = vld [vmem:[%s3 + $0x30] sm:$0xf]
        %v3683 = vld [vmem:[%s3 + $0x34] sm:$0xf]
        %v3684 = vld [vmem:[%s3 + $0x38] sm:$0xf]
        %v3685 = vld [vmem:[%s3 + $0x3c] sm:$0xf]
        %v3686 = vld [vmem:[%s3 + $0x40] sm:$0xf]
        %v3687 = vld [vmem:[%s3 + $0x44] sm:$0xf]
        %v3688 = vld [vmem:[%s3 + $0x48] sm:$0xf]
        %v3689 = vld [vmem:[%s3 + $0x4c] sm:$0xf]
        %v3690 = vld [vmem:[%s3 + $0x50] sm:$0xf]
        %v3691 = vld [vmem:[%s3 + $0x54] sm:$0xf]
        %v3692 = vld [vmem:[%s3 + $0x58] sm:$0xf]
        %v3693 = vld [vmem:[%s3 + $0x5c] sm:$0xf]
        %v3694 = vld [vmem:[%s4] sm:$0x3]
        %v3703 = vunpack.c.l.b16 %v3678
        %v3704 = vunpack.c.l.b16 %v3679
        %v3705 = vunpack.c.l.b16 %v3680
        %v3706 = vunpack.c.l.b16 %v3681
        %v3707 = vunpack.c.l.b16 %v3682
        %v3708 = vunpack.c.l.b16 %v3683
        %v3709 = vunpack.c.l.b16 %v3684
        %v3710 = vunpack.c.l.b16 %v3685
        %v3711 = vpack.c.b16 %v3704, %v3703
        %v3712 = vpack.c.b16 %v3706, %v3705
        %v3713 = vpack.c.b16 %v3708, %v3707
        %v3714 = vpack.c.b16 %v3710, %v3709
        %3719 = vmatpush.bf16.msra.mxu0 0
        %3720 = vmatpush.bf16.msra.mxu0 0
        %3721 = vmatpush.bf16.msra.mxu0 0
        %3722 = vmatpush.bf16.msra.mxu0 0
        %3723 = vmatpush.bf16.msra.mxu0 %v3714
        %3724 = vmatpush.bf16.msra.mxu0 %v3713
        %3725 = vmatpush.bf16.msra.mxu0 %v3712
        %3726 = vmatpush.bf16.msra.mxu0 %v3711
        %3727 = vmatmul.bf16.gmra.mxu0 %v3544
        %v3728 = vpop.f32.mrf.mxu0
        %v3729 = vadd.f32 0.0, %v3728
        %v3730 = vpop.f32.mrf.mxu0
        %3731 = vdwg.mxu0
        %v3740 = vunpack.c.l.b16 %v3670
        %v3741 = vunpack.c.l.b16 %v3671
        %v3742 = vunpack.c.l.b16 %v3672
        %v3743 = vunpack.c.l.b16 %v3673
        %v3744 = vunpack.c.l.b16 %v3674
        %v3745 = vunpack.c.l.b16 %v3675
        %v3746 = vunpack.c.l.b16 %v3676
        %v3747 = vunpack.c.l.b16 %v3677
        %v3748 = vpack.c.b16 %v3741, %v3740
        %v3749 = vpack.c.b16 %v3743, %v3742
        %v3750 = vpack.c.b16 %v3745, %v3744
        %v3751 = vpack.c.b16 %v3747, %v3746
        %3756 = vmatpush.bf16.msra.mxu0 0
        %3757 = vmatpush.bf16.msra.mxu0 0
        %3758 = vmatpush.bf16.msra.mxu0 0
        %3759 = vmatpush.bf16.msra.mxu0 0
        %3760 = vmatpush.bf16.msra.mxu0 %v3751
        %3761 = vmatpush.bf16.msra.mxu0 %v3750
        %3762 = vmatpush.bf16.msra.mxu0 %v3749
        %3763 = vmatpush.bf16.msra.mxu0 %v3748
        %3764 = vmatmul.bf16.gmra.mxu0 %v3584
        %v3765 = vpop.f32.mrf.mxu0
        %v3766 = vadd.f32 %v3729, %v3765
        %v3767 = vpop.f32.mrf.mxu0
        %3768 = vdwg.mxu0
        %v3777 = vunpack.c.l.b16 %v3686
        %v3778 = vunpack.c.l.b16 %v3687
        %v3779 = vunpack.c.l.b16 %v3688
        %v3780 = vunpack.c.l.b16 %v3689
        %v3781 = vunpack.c.l.b16 %v3690
        %v3782 = vunpack.c.l.b16 %v3691
        %v3783 = vunpack.c.l.b16 %v3692
        %v3784 = vunpack.c.l.b16 %v3693
        %v3785 = vpack.c.b16 %v3778, %v3777
        %v3786 = vpack.c.b16 %v3780, %v3779
        %v3787 = vpack.c.b16 %v3782, %v3781
        %v3788 = vpack.c.b16 %v3784, %v3783
        %3793 = vmatpush.bf16.msra.mxu0 0
        %3794 = vmatpush.bf16.msra.mxu0 0
        %3795 = vmatpush.bf16.msra.mxu0 0
        %3796 = vmatpush.bf16.msra.mxu0 0
        %3797 = vmatpush.bf16.msra.mxu0 %v3788
        %3798 = vmatpush.bf16.msra.mxu0 %v3787
        %3799 = vmatpush.bf16.msra.mxu0 %v3786
        %3800 = vmatpush.bf16.msra.mxu0 %v3785
        %3801 = vmatmul.bf16.gmra.mxu0 %v3650
        %v3802 = vpop.f32.mrf.mxu0
        %v3803 = vadd.f32 0.0, %v3802
        %v3804 = vpop.f32.mrf.mxu0
        %3805 = vdwg.mxu0
        %v3806 = vadd.f32 %v3766, %v3803
        %v3807 = vperm.slane %v3694, 0
        %v3808 = vmul.f32 %v3806, %v3807
        %v3809 = vperm.slane %v3694, 1
        %v3810 = vadd.f32 %v3808, %v3809
        %v3811 = vmax.f32 %v3810, 0.0
        %v3812 = vld [vmem:[%s5] sm:$0xf]
        %v3813 = vld [vmem:[%s5 + $0x4] sm:$0xf]
        %v3814 = vld [vmem:[%s5 + $0x8] sm:$0xf]
        %v3815 = vld [vmem:[%s5 + $0xc] sm:$0xf]
        %v3816 = vld [vmem:[%s5 + $0x10] sm:$0xf]
        %v3817 = vld [vmem:[%s5 + $0x14] sm:$0xf]
        %v3818 = vld [vmem:[%s5 + $0x18] sm:$0xf]
        %v3819 = vld [vmem:[%s5 + $0x1c] sm:$0xf]
        %v3820 = vld [vmem:[%s5 + $0x20] sm:$0xf]
        %v3821 = vld [vmem:[%s5 + $0x24] sm:$0xf]
        %v3822 = vld [vmem:[%s5 + $0x28] sm:$0xf]
        %v3823 = vld [vmem:[%s5 + $0x2c] sm:$0xf]
        %v3824 = vld [vmem:[%s5 + $0x30] sm:$0xf]
        %v3825 = vld [vmem:[%s5 + $0x34] sm:$0xf]
        %v3826 = vld [vmem:[%s5 + $0x38] sm:$0xf]
        %v3827 = vld [vmem:[%s5 + $0x3c] sm:$0xf]
        %v3828 = vld [vmem:[%s5 + $0x40] sm:$0xf]
        %v3829 = vld [vmem:[%s5 + $0x44] sm:$0xf]
        %v3830 = vld [vmem:[%s5 + $0x48] sm:$0xf]
        %v3831 = vld [vmem:[%s5 + $0x4c] sm:$0xf]
        %v3832 = vld [vmem:[%s5 + $0x50] sm:$0xf]
        %v3833 = vld [vmem:[%s5 + $0x54] sm:$0xf]
        %v3834 = vld [vmem:[%s5 + $0x58] sm:$0xf]
        %v3835 = vld [vmem:[%s5 + $0x5c] sm:$0xf]
        %v3836 = vld [vmem:[#allocation7] sm:$0x3]
        %v3838 = vrot.slane %v3811, 7
        %v3840 = vsel %vm427, 0.0, %v3838
        %v3841 = vsel %vm427, %v3838, 0.0
        %v3842 = vpack.c.bf16 %v3840, %v3840
        %v3843 = vpack.c.bf16 %v3841, %v3840
        %v3845 = vshrl.u32 %v3843, 16
        %v3847 = vshll.u32 %v3843, 16
        %v3849 = vrot.slane %v3847, 1
        %v3850 = vor.u32 %v3845, %v3849
        %v3859 = vunpack.c.l.b16 %v3820
        %v3860 = vunpack.c.l.b16 %v3821
        %v3861 = vunpack.c.l.b16 %v3822
        %v3862 = vunpack.c.l.b16 %v3823
        %v3863 = vunpack.c.l.b16 %v3824
        %v3864 = vunpack.c.l.b16 %v3825
        %v3865 = vunpack.c.l.b16 %v3826
        %v3866 = vunpack.c.l.b16 %v3827
        %v3867 = vpack.c.b16 %v3860, %v3859
        %v3868 = vpack.c.b16 %v3862, %v3861
        %v3869 = vpack.c.b16 %v3864, %v3863
        %v3870 = vpack.c.b16 %v3866, %v3865
        %v3876 = vsel %vm475, %v3850, 0
        %3878 = vmatpush.bf16.msra.mxu0 0
        %3879 = vmatpush.bf16.msra.mxu0 0
        %3880 = vmatpush.bf16.msra.mxu0 0
        %3881 = vmatpush.bf16.msra.mxu0 0
        %3882 = vmatpush.bf16.msra.mxu0 %v3870
        %3883 = vmatpush.bf16.msra.mxu0 %v3869
        %3884 = vmatpush.bf16.msra.mxu0 %v3868
        %3885 = vmatpush.bf16.msra.mxu0 %v3867
        %3886 = vmatmul.bf16.gmra.mxu0 %v3876
        %v3887 = vpop.f32.mrf.mxu0
        %v3888 = vadd.f32 0.0, %v3887
        %v3889 = vpop.f32.mrf.mxu0
        %3890 = vdwg.mxu0
        %v3899 = vunpack.c.l.b16 %v3812
        %v3900 = vunpack.c.l.b16 %v3813
        %v3901 = vunpack.c.l.b16 %v3814
        %v3902 = vunpack.c.l.b16 %v3815
        %v3903 = vunpack.c.l.b16 %v3816
        %v3904 = vunpack.c.l.b16 %v3817
        %v3905 = vunpack.c.l.b16 %v3818
        %v3906 = vunpack.c.l.b16 %v3819
        %v3907 = vpack.c.b16 %v3900, %v3899
        %v3908 = vpack.c.b16 %v3902, %v3901
        %v3909 = vpack.c.b16 %v3904, %v3903
        %v3910 = vpack.c.b16 %v3906, %v3905
        %v3916 = vsel %vm475, %v3842, 0
        %3918 = vmatpush.bf16.msra.mxu0 0
        %3919 = vmatpush.bf16.msra.mxu0 0
        %3920 = vmatpush.bf16.msra.mxu0 0
        %3921 = vmatpush.bf16.msra.mxu0 0
        %3922 = vmatpush.bf16.msra.mxu0 %v3910
        %3923 = vmatpush.bf16.msra.mxu0 %v3909
        %3924 = vmatpush.bf16.msra.mxu0 %v3908
        %3925 = vmatpush.bf16.msra.mxu0 %v3907
        %3926 = vmatmul.bf16.gmra.mxu0 %v3916
        %v3927 = vpop.f32.mrf.mxu0
        %v3928 = vadd.f32 %v3888, %v3927
        %v3929 = vpop.f32.mrf.mxu0
        %3930 = vdwg.mxu0
        %v3932 = vrot.slane %v3843, 1
        %v3941 = vunpack.c.l.b16 %v3828
        %v3942 = vunpack.c.l.b16 %v3829
        %v3943 = vunpack.c.l.b16 %v3830
        %v3944 = vunpack.c.l.b16 %v3831
        %v3945 = vunpack.c.l.b16 %v3832
        %v3946 = vunpack.c.l.b16 %v3833
        %v3947 = vunpack.c.l.b16 %v3834
        %v3948 = vunpack.c.l.b16 %v3835
        %v3949 = vpack.c.b16 %v3942, %v3941
        %v3950 = vpack.c.b16 %v3944, %v3943
        %v3951 = vpack.c.b16 %v3946, %v3945
        %v3952 = vpack.c.b16 %v3948, %v3947
        %v3958 = vsel %vm475, %v3932, 0
        %3960 = vmatpush.bf16.msra.mxu0 0
        %3961 = vmatpush.bf16.msra.mxu0 0
        %3962 = vmatpush.bf16.msra.mxu0 0
        %3963 = vmatpush.bf16.msra.mxu0 0
        %3964 = vmatpush.bf16.msra.mxu0 %v3952
        %3965 = vmatpush.bf16.msra.mxu0 %v3951
        %3966 = vmatpush.bf16.msra.mxu0 %v3950
        %3967 = vmatpush.bf16.msra.mxu0 %v3949
        %3968 = vmatmul.bf16.gmra.mxu0 %v3958
        %v3969 = vpop.f32.mrf.mxu0
        %v3970 = vadd.f32 0.0, %v3969
        %v3971 = vpop.f32.mrf.mxu0
        %3972 = vdwg.mxu0
        %v3973 = vadd.f32 %v3928, %v3970
        %v3974 = vperm.slane %v3836, 0
        %v3975 = vmul.f32 %v3973, %v3974
        %v3976 = vperm.slane %v3836, 1
        %v3977 = vadd.f32 %v3975, %v3976
        %v3978 = vadd.f32 %v3977, %v3669
        %v3979 = vmax.f32 %v3978, 0.0
        %s3980 = scalar_lea.vmem %s5, 96
        %v3981 = vld [vmem:[%s3980] sm:$0xf]
        %v3982 = vld [vmem:[%s3980 + $0x4] sm:$0xf]
        %v3983 = vld [vmem:[%s3980 + $0x8] sm:$0xf]
        %v3984 = vld [vmem:[%s3980 + $0xc] sm:$0xf]
        %v3985 = vld [vmem:[%s3980 + $0x10] sm:$0xf]
        %v3986 = vld [vmem:[%s3980 + $0x14] sm:$0xf]
        %v3987 = vld [vmem:[%s3980 + $0x18] sm:$0xf]
        %v3988 = vld [vmem:[%s3980 + $0x1c] sm:$0xf]
        %v3989 = vld [vmem:[%s3980 + $0x20] sm:$0xf]
        %v3990 = vld [vmem:[%s3980 + $0x24] sm:$0xf]
        %v3991 = vld [vmem:[%s3980 + $0x28] sm:$0xf]
        %v3992 = vld [vmem:[%s3980 + $0x2c] sm:$0xf]
        %v3993 = vld [vmem:[%s3980 + $0x30] sm:$0xf]
        %v3994 = vld [vmem:[%s3980 + $0x34] sm:$0xf]
        %v3995 = vld [vmem:[%s3980 + $0x38] sm:$0xf]
        %v3996 = vld [vmem:[%s3980 + $0x3c] sm:$0xf]
        %v3997 = vld [vmem:[%s3980 + $0x40] sm:$0xf]
        %v3998 = vld [vmem:[%s3980 + $0x44] sm:$0xf]
        %v3999 = vld [vmem:[%s3980 + $0x48] sm:$0xf]
        %v4000 = vld [vmem:[%s3980 + $0x4c] sm:$0xf]
        %v4001 = vld [vmem:[%s3980 + $0x50] sm:$0xf]
        %v4002 = vld [vmem:[%s3980 + $0x54] sm:$0xf]
        %v4003 = vld [vmem:[%s3980 + $0x58] sm:$0xf]
        %v4004 = vld [vmem:[%s3980 + $0x5c] sm:$0xf]
        %s4005 = scalar_lea.vmem [#allocation7], 2
        %v4006 = vld [vmem:[%s4005] sm:$0x3]
        %v4008 = vrot.slane %v3979, 7
        %v4010 = vsel %vm427, 0.0, %v4008
        %v4011 = vsel %vm427, %v4008, 0.0
        %v4012 = vpack.c.bf16 %v4010, %v4010
        %v4013 = vpack.c.bf16 %v4011, %v4010
        %v4015 = vshrl.u32 %v4013, 16
        %v4017 = vshll.u32 %v4013, 16
        %v4019 = vrot.slane %v4017, 1
        %v4020 = vor.u32 %v4015, %v4019
        %v4029 = vunpack.c.l.b16 %v3989
        %v4030 = vunpack.c.l.b16 %v3990
        %v4031 = vunpack.c.l.b16 %v3991
        %v4032 = vunpack.c.l.b16 %v3992
        %v4033 = vunpack.c.l.b16 %v3993
        %v4034 = vunpack.c.l.b16 %v3994
        %v4035 = vunpack.c.l.b16 %v3995
        %v4036 = vunpack.c.l.b16 %v3996
        %v4037 = vpack.c.b16 %v4030, %v4029
        %v4038 = vpack.c.b16 %v4032, %v4031
        %v4039 = vpack.c.b16 %v4034, %v4033
        %v4040 = vpack.c.b16 %v4036, %v4035
        %v4046 = vsel %vm475, %v4020, 0
        %4048 = vmatpush.bf16.msra.mxu0 0
        %4049 = vmatpush.bf16.msra.mxu0 0
        %4050 = vmatpush.bf16.msra.mxu0 0
        %4051 = vmatpush.bf16.msra.mxu0 0
        %4052 = vmatpush.bf16.msra.mxu0 %v4040
        %4053 = vmatpush.bf16.msra.mxu0 %v4039
        %4054 = vmatpush.bf16.msra.mxu0 %v4038
        %4055 = vmatpush.bf16.msra.mxu0 %v4037
        %4056 = vmatmul.bf16.gmra.mxu0 %v4046
        %v4057 = vpop.f32.mrf.mxu0
        %v4058 = vadd.f32 0.0, %v4057
        %v4059 = vpop.f32.mrf.mxu0
        %4060 = vdwg.mxu0
        %v4069 = vunpack.c.l.b16 %v3981
        %v4070 = vunpack.c.l.b16 %v3982
        %v4071 = vunpack.c.l.b16 %v3983
        %v4072 = vunpack.c.l.b16 %v3984
        %v4073 = vunpack.c.l.b16 %v3985
        %v4074 = vunpack.c.l.b16 %v3986
        %v4075 = vunpack.c.l.b16 %v3987
        %v4076 = vunpack.c.l.b16 %v3988
        %v4077 = vpack.c.b16 %v4070, %v4069
        %v4078 = vpack.c.b16 %v4072, %v4071
        %v4079 = vpack.c.b16 %v4074, %v4073
        %v4080 = vpack.c.b16 %v4076, %v4075
        %v4086 = vsel %vm475, %v4012, 0
        %4088 = vmatpush.bf16.msra.mxu0 0
        %4089 = vmatpush.bf16.msra.mxu0 0
        %4090 = vmatpush.bf16.msra.mxu0 0
        %4091 = vmatpush.bf16.msra.mxu0 0
        %4092 = vmatpush.bf16.msra.mxu0 %v4080
        %4093 = vmatpush.bf16.msra.mxu0 %v4079
        %4094 = vmatpush.bf16.msra.mxu0 %v4078
        %4095 = vmatpush.bf16.msra.mxu0 %v4077
        %4096 = vmatmul.bf16.gmra.mxu0 %v4086
        %v4097 = vpop.f32.mrf.mxu0
        %v4098 = vadd.f32 %v4058, %v4097
        %v4099 = vpop.f32.mrf.mxu0
        %4100 = vdwg.mxu0
        %v4102 = vrot.slane %v4013, 1
        %v4111 = vunpack.c.l.b16 %v3997
        %v4112 = vunpack.c.l.b16 %v3998
        %v4113 = vunpack.c.l.b16 %v3999
        %v4114 = vunpack.c.l.b16 %v4000
        %v4115 = vunpack.c.l.b16 %v4001
        %v4116 = vunpack.c.l.b16 %v4002
        %v4117 = vunpack.c.l.b16 %v4003
        %v4118 = vunpack.c.l.b16 %v4004
        %v4119 = vpack.c.b16 %v4112, %v4111
        %v4120 = vpack.c.b16 %v4114, %v4113
        %v4121 = vpack.c.b16 %v4116, %v4115
        %v4122 = vpack.c.b16 %v4118, %v4117
        %v4128 = vsel %vm475, %v4102, 0
        %4130 = vmatpush.bf16.msra.mxu0 0
        %4131 = vmatpush.bf16.msra.mxu0 0
        %4132 = vmatpush.bf16.msra.mxu0 0
        %4133 = vmatpush.bf16.msra.mxu0 0
        %4134 = vmatpush.bf16.msra.mxu0 %v4122
        %4135 = vmatpush.bf16.msra.mxu0 %v4121
        %4136 = vmatpush.bf16.msra.mxu0 %v4120
        %4137 = vmatpush.bf16.msra.mxu0 %v4119
        %4138 = vmatmul.bf16.gmra.mxu0 %v4128
        %v4139 = vpop.f32.mrf.mxu0
        %v4140 = vadd.f32 0.0, %v4139
        %v4141 = vpop.f32.mrf.mxu0
        %4142 = vdwg.mxu0
        %v4143 = vadd.f32 %v4098, %v4140
        %v4144 = vperm.slane %v4006, 0
        %v4145 = vmul.f32 %v4143, %v4144
        %v4146 = vperm.slane %v4006, 1
        %v4147 = vadd.f32 %v4145, %v4146
        %v4148 = vmax.f32 %v4147, 0.0
        %s4149 = scalar_lea.vmem %s5, 192
        %v4150 = vld [vmem:[%s4149] sm:$0xf]
        %v4151 = vld [vmem:[%s4149 + $0x4] sm:$0xf]
        %v4152 = vld [vmem:[%s4149 + $0x8] sm:$0xf]
        %v4153 = vld [vmem:[%s4149 + $0xc] sm:$0xf]
        %v4154 = vld [vmem:[%s4149 + $0x10] sm:$0xf]
        %v4155 = vld [vmem:[%s4149 + $0x14] sm:$0xf]
        %v4156 = vld [vmem:[%s4149 + $0x18] sm:$0xf]
        %v4157 = vld [vmem:[%s4149 + $0x1c] sm:$0xf]
        %v4158 = vld [vmem:[%s4149 + $0x20] sm:$0xf]
        %v4159 = vld [vmem:[%s4149 + $0x24] sm:$0xf]
        %v4160 = vld [vmem:[%s4149 + $0x28] sm:$0xf]
        %v4161 = vld [vmem:[%s4149 + $0x2c] sm:$0xf]
        %v4162 = vld [vmem:[%s4149 + $0x30] sm:$0xf]
        %v4163 = vld [vmem:[%s4149 + $0x34] sm:$0xf]
        %v4164 = vld [vmem:[%s4149 + $0x38] sm:$0xf]
        %v4165 = vld [vmem:[%s4149 + $0x3c] sm:$0xf]
        %v4166 = vld [vmem:[%s4149 + $0x40] sm:$0xf]
        %v4167 = vld [vmem:[%s4149 + $0x44] sm:$0xf]
        %v4168 = vld [vmem:[%s4149 + $0x48] sm:$0xf]
        %v4169 = vld [vmem:[%s4149 + $0x4c] sm:$0xf]
        %v4170 = vld [vmem:[%s4149 + $0x50] sm:$0xf]
        %v4171 = vld [vmem:[%s4149 + $0x54] sm:$0xf]
        %v4172 = vld [vmem:[%s4149 + $0x58] sm:$0xf]
        %v4173 = vld [vmem:[%s4149 + $0x5c] sm:$0xf]
        %s4174 = scalar_lea.vmem [#allocation7], 4
        %v4175 = vld [vmem:[%s4174] sm:$0x3]
        %v4177 = vrot.slane %v4148, 7
        %v4179 = vsel %vm427, 0.0, %v4177
        %v4180 = vsel %vm427, %v4177, 0.0
        %v4181 = vpack.c.bf16 %v4179, %v4179
        %v4182 = vpack.c.bf16 %v4180, %v4179
        %v4184 = vshrl.u32 %v4182, 16
        %v4186 = vshll.u32 %v4182, 16
        %v4188 = vrot.slane %v4186, 1
        %v4189 = vor.u32 %v4184, %v4188
        %v4198 = vunpack.c.l.b16 %v4158
        %v4199 = vunpack.c.l.b16 %v4159
        %v4200 = vunpack.c.l.b16 %v4160
        %v4201 = vunpack.c.l.b16 %v4161
        %v4202 = vunpack.c.l.b16 %v4162
        %v4203 = vunpack.c.l.b16 %v4163
        %v4204 = vunpack.c.l.b16 %v4164
        %v4205 = vunpack.c.l.b16 %v4165
        %v4206 = vpack.c.b16 %v4199, %v4198
        %v4207 = vpack.c.b16 %v4201, %v4200
        %v4208 = vpack.c.b16 %v4203, %v4202
        %v4209 = vpack.c.b16 %v4205, %v4204
        %v4215 = vsel %vm475, %v4189, 0
        %4217 = vmatpush.bf16.msra.mxu0 0
        %4218 = vmatpush.bf16.msra.mxu0 0
        %4219 = vmatpush.bf16.msra.mxu0 0
        %4220 = vmatpush.bf16.msra.mxu0 0
        %4221 = vmatpush.bf16.msra.mxu0 %v4209
        %4222 = vmatpush.bf16.msra.mxu0 %v4208
        %4223 = vmatpush.bf16.msra.mxu0 %v4207
        %4224 = vmatpush.bf16.msra.mxu0 %v4206
        %4225 = vmatmul.bf16.gmra.mxu0 %v4215
        %v4226 = vpop.f32.mrf.mxu0
        %v4227 = vadd.f32 0.0, %v4226
        %v4228 = vpop.f32.mrf.mxu0
        %4229 = vdwg.mxu0
        %v4238 = vunpack.c.l.b16 %v4150
        %v4239 = vunpack.c.l.b16 %v4151
        %v4240 = vunpack.c.l.b16 %v4152
        %v4241 = vunpack.c.l.b16 %v4153
        %v4242 = vunpack.c.l.b16 %v4154
        %v4243 = vunpack.c.l.b16 %v4155
        %v4244 = vunpack.c.l.b16 %v4156
        %v4245 = vunpack.c.l.b16 %v4157
        %v4246 = vpack.c.b16 %v4239, %v4238
        %v4247 = vpack.c.b16 %v4241, %v4240
        %v4248 = vpack.c.b16 %v4243, %v4242
        %v4249 = vpack.c.b16 %v4245, %v4244
        %v4255 = vsel %vm475, %v4181, 0
        %4257 = vmatpush.bf16.msra.mxu0 0
        %4258 = vmatpush.bf16.msra.mxu0 0
        %4259 = vmatpush.bf16.msra.mxu0 0
        %4260 = vmatpush.bf16.msra.mxu0 0
        %4261 = vmatpush.bf16.msra.mxu0 %v4249
        %4262 = vmatpush.bf16.msra.mxu0 %v4248
        %4263 = vmatpush.bf16.msra.mxu0 %v4247
        %4264 = vmatpush.bf16.msra.mxu0 %v4246
        %4265 = vmatmul.bf16.gmra.mxu0 %v4255
        %v4266 = vpop.f32.mrf.mxu0
        %v4267 = vadd.f32 %v4227, %v4266
        %v4268 = vpop.f32.mrf.mxu0
        %4269 = vdwg.mxu0
        %v4271 = vrot.slane %v4182, 1
        %v4280 = vunpack.c.l.b16 %v4166
        %v4281 = vunpack.c.l.b16 %v4167
        %v4282 = vunpack.c.l.b16 %v4168
        %v4283 = vunpack.c.l.b16 %v4169
        %v4284 = vunpack.c.l.b16 %v4170
        %v4285 = vunpack.c.l.b16 %v4171
        %v4286 = vunpack.c.l.b16 %v4172
        %v4287 = vunpack.c.l.b16 %v4173
        %v4288 = vpack.c.b16 %v4281, %v4280
        %v4289 = vpack.c.b16 %v4283, %v4282
        %v4290 = vpack.c.b16 %v4285, %v4284
        %v4291 = vpack.c.b16 %v4287, %v4286
        %v4297 = vsel %vm475, %v4271, 0
        %4299 = vmatpush.bf16.msra.mxu0 0
        %4300 = vmatpush.bf16.msra.mxu0 0
        %4301 = vmatpush.bf16.msra.mxu0 0
        %4302 = vmatpush.bf16.msra.mxu0 0
        %4303 = vmatpush.bf16.msra.mxu0 %v4291
        %4304 = vmatpush.bf16.msra.mxu0 %v4290
        %4305 = vmatpush.bf16.msra.mxu0 %v4289
        %4306 = vmatpush.bf16.msra.mxu0 %v4288
        %4307 = vmatmul.bf16.gmra.mxu0 %v4297
        %v4308 = vpop.f32.mrf.mxu0
        %v4309 = vadd.f32 0.0, %v4308
        %v4310 = vpop.f32.mrf.mxu0
        %4311 = vdwg.mxu0
        %v4312 = vadd.f32 %v4267, %v4309
        %v4313 = vperm.slane %v4175, 0
        %v4314 = vmul.f32 %v4312, %v4313
        %v4315 = vperm.slane %v4175, 1
        %v4316 = vadd.f32 %v4314, %v4315
        %v4317 = vadd.f32 %v4316, %v3979
        %v4318 = vmax.f32 %v4317, 0.0
        %v4319 = vld [vmem:[%s8] sm:$0xff]
        %v4320 = vld [vmem:[%s8 + $0x8] sm:$0xff]
        %v4321 = vld [vmem:[%s8 + $0x10] sm:$0xff]
        %v4322 = vld [vmem:[%s8 + $0x18] sm:$0xff]
        %v4323 = vld [vmem:[%s8 + $0x20] sm:$0xff]
        %v4324 = vld [vmem:[%s8 + $0x28] sm:$0xff]
        %v4325 = vld [vmem:[%s8 + $0x30] sm:$0xff]
        %v4326 = vld [vmem:[%s8 + $0x38] sm:$0xff]
        %v4328 = vsel %vm475, %v4318, 0
        %4330 = vmatpush.msra.mxu0 0.0
        %4331 = vmatpush.msra.mxu0 0.0
        %4332 = vmatpush.msra.mxu0 0.0
        %4333 = vmatpush.msra.mxu0 0.0
        %4334 = vmatpush.msra.mxu0 0.0
        %4335 = vmatpush.msra.mxu0 0.0
        %4336 = vmatpush.msra.mxu0 0.0
        %4337 = vmatpush.msra.mxu0 0.0
        %4338 = vmatpush.msra.mxu0 %v4326
        %4339 = vmatpush.msra.mxu0 %v4325
        %4340 = vmatpush.msra.mxu0 %v4324
        %4341 = vmatpush.msra.mxu0 %v4323
        %4342 = vmatpush.msra.mxu0 %v4322
        %4343 = vmatpush.msra.mxu0 %v4321
        %4344 = vmatpush.msra.mxu0 %v4320
        %4345 = vmatpush.msra.mxu0 %v4319
        %4346 = vmatmul.f32.gmra.mxu0 %v4328
        %v4347 = vpop.f32.mrf.mxu0
        %v4348 = vadd.f32 0.0, %v4347
        %4349 = vdwg.mxu0
        %vm4350 = vcmask 64512
        %v4351 = vsel %vm4350, %v4348, 0.0
        %v4352 = vrot.slane %v4351, 4
        %v4353 = vadd.f32 %v4351, %v4352
        %v4354 = vrot.slane %v4353, 2
        %v4355 = vadd.f32 %v4353, %v4354
        %v4356 = vrot.slane %v4355, 1
        %v4357 = vadd.f32 %v4355, %v4356
        %vm4358 = vcmask 57344
        %4359 = vst.msk [vmem:[%s391] sm:$0x1] %vm4358, %v4357
        %s4360 = sand.u32 %s228, 1
        %s4361 = scalar_lea.sflag [#allocation4], %s4360
        %s4362 = sand.u32 %s228, 1
        %s4363 = scalar_lea.vmem [#allocation10], %s4362
        // Predicated region
        $region73: #{resnet10_block_forward.1} parent=55 // pred_check
          %p4364 = pneg %p238
        $region74: #{resnet10_block_forward.1} parent=55 // pred_check_branch
          %4366 = sbr.rel (%p4364) target = $region76
        $region75: #{resnet10_block_forward.1} parent=55 // pred_region
          %4368 = vsyncadd %s4361, 0
          %s4369 = scalar_lea.hbm %s9, %s26
          %s4371 = sshll.u32 %s4363, 4
          %s4372 = int_to_ptr.vmem [resolvable:$true] %s4371
          %s4373 = sshll.u32 %s4369, 4
          %s4374 = int_to_ptr.hbm [resolvable:$true] %s4373
          %4376 = dma.vmem_to_hbm [thread:$0]  %s4372, 16, %s4374, %s4361
        $region76: #{resnet10_block_forward.1} parent=55 // pred_fallthru
          _
      $region56: #{resnet10_block_forward.1} parent=5 // pred_fallthru
        _
      %p4377 = scmp.le.s32.totalorder 2, %s21
      // Predicated region
      $region77: #{resnet10_block_forward.1} parent=5 // pred_check
        %p4378 = pneg %p4377
      $region78: #{resnet10_block_forward.1} parent=5 // pred_check_branch
        %4380 = sbr.rel (%p4378) target = $region80
      $region79: #{resnet10_block_forward.1} parent=5 // pred_region
        %s4381 = ssub.s32 %s21, 2
        // Predicated region
        $region81: #{resnet10_block_forward.1} parent=79 // pred_check
          %p4382 = pneg %p244
        $region82: #{resnet10_block_forward.1} parent=79 // pred_check_branch
          %4384 = sbr.rel (%p4382) target = $region84
        $region83: #{resnet10_block_forward.1} parent=79 // pred_region
          %s4385 = sand.u32 %s229, 1
          %s4386 = scalar_lea.sflag [#allocation4], %s4385
          %s4387 = sand.u32 %s229, 1
          %s4388 = scalar_lea.vmem [#allocation10], %s4387
          %4390 = dma.done %s4386, 16
        $region84: #{resnet10_block_forward.1} parent=79 // pred_fallthru
          _
      $region80: #{resnet10_block_forward.1} parent=5 // pred_fallthru
        _
    $region6: #{resnet10_block_forward.1} parent=1 // loop_footer
      %s25 = sadd.s32 1, %s21
    $region7: #{resnet10_block_forward.1} parent=1 // loop_footer_branch
      %20 = sbr.rel target = $region3
    $region8: #{resnet10_block_forward.1} parent=1 // loop_exit
      _
    %4391 = vsyncpa [#allocation3], 1
    %s4392 = scalar_lea.sflag [#allocation3], 1
    %4393 = vsyncpa %s4392, 1
    %4394 = vsyncpa [#allocation6], 1
    %4395 = vsyncpa [#allocation9], 1
    %4396 = vsyncpa [#allocation4], 1
    %s4397 = scalar_lea.sflag [#allocation4], 1
    %4398 = vsyncpa %s4397, 1

</llo_original>
